<compile_context>
chip_gen: v5e
topology: v5e:2x2
jax: 0.10.0
libtpu: 0.0.40
codegen_flags: <defaults>
</compile_context>

<pallas_src>
import jax
import jax.numpy as jnp
from jax.experimental import pallas as pl
from jax.experimental.pallas import tpu as pltpu


# ---------------------------------------------------------------------------
# Fixed layer geometry (Linear(64, 10) forces a 28x28 single-channel input):
#   layer1: 28x28x 1 --conv6,p2--> 27x27x16 --pool3--> 9x9x16
#   layer2:  9x 9x16 --conv5,p2-->  9x 9x32 --pool3--> 3x3x32
#   layer3:  3x 3x32 --conv5,p2-->  3x 3x64 --pool3--> 1x1x64
# Internal activation layout inside the kernel: 2-D (H, W*C), channel-minor.
# ---------------------------------------------------------------------------


def _cnn_fused_kernel(x_ref, a1_ref, b1_ref, a2_ref, b2_ref, a3_ref, b3_ref,
                      wfc_ref, bfc_ref, out_ref,
                      xp1_ref, xp2_ref, xp3_ref, feat_ref):
    """Entire forward pass for one image; everything resident in VMEM."""

    def conv_relu_pool(xp_ref, a_ref, b_ref, kh_taps, ho, wpool_c,
                       dst_ref, dst_row, dst_col):
        # conv: sum over KH row taps of (ho, Wp*Cin) @ (Wp*Cin, Wo*Cout).
        ncol = 3 * wpool_c
        acc = jnp.zeros((ho, ncol), jnp.float32)
        for kh in range(kh_taps):
            lhs = xp_ref[kh:kh + ho, :].astype(jnp.bfloat16)   # bf16 MXU operand
            acc = acc + jnp.dot(lhs, a_ref[kh],
                                preferred_element_type=jnp.float32)
        acc = jnp.maximum(acc + b_ref[...], 0.0)               # bias + ReLU (f32)
        # 3x max-pool along W: columns are (w % 3)-major, so it is just an
        # elementwise max of three contiguous column blocks.
        wp = jnp.maximum(jnp.maximum(acc[:, :wpool_c],
                                     acc[:, wpool_c:2 * wpool_c]),
                         acc[:, 2 * wpool_c:3 * wpool_c])
        # 3x max-pool along H: max over 3 consecutive rows; write the pooled
        # row directly into the padded input scratch of the next layer.
        for i in range(ho // 3):
            dst_ref[dst_row + i:dst_row + i + 1,
                    dst_col:dst_col + wpool_c] = jnp.max(
                        wp[3 * i:3 * i + 3, :], axis=0, keepdims=True)

    # stage 0: zero the padded activation scratches, place the 28x28 input.
    xp1_ref[...] = jnp.zeros_like(xp1_ref)
    xp2_ref[...] = jnp.zeros_like(xp2_ref)
    xp3_ref[...] = jnp.zeros_like(xp3_ref)
    xp1_ref[2:30, 2:30] = x_ref[0, 0, :, :]

    # layer 1: (32, 32)  -> conv 27x(27*16) -> pool -> xp2[2:11, 32:176]
    conv_relu_pool(xp1_ref, a1_ref, b1_ref, 6, 27, 9 * 16, xp2_ref, 2, 2 * 16)
    # layer 2: (13, 208) -> conv  9x(9*32)  -> pool -> xp3[2:5, 64:160]
    conv_relu_pool(xp2_ref, a2_ref, b2_ref, 5, 9, 3 * 32, xp3_ref, 2, 2 * 32)
    # layer 3: (7, 224)  -> conv  3x(3*64)  -> pool -> feat[0:1, 0:64]
    conv_relu_pool(xp3_ref, a3_ref, b3_ref, 5, 3, 1 * 64, feat_ref, 0, 0)

    # final Linear(64 -> 10), kept in f32.
    logits = jnp.dot(feat_ref[...], wfc_ref[...],
                     preferred_element_type=jnp.float32) + bfc_ref[...]
    out_ref[...] = logits[None]


# ---------------------------------------------------------------------------
# Weight preparation (tiny, hoistable glue): conv weights -> Toeplitz matrices
# that turn each conv into KH plain 2-D matmuls in the (H, W*C) layout, with
# output columns permuted to (w % 3)-major order so the W-pool is contiguous.
# ---------------------------------------------------------------------------
def _toeplitz_weight(w_oihw, hin, pad):
    cout, cin, khs, kws = w_oihw.shape
    wpad = hin + 2 * pad                 # padded input width
    wo = wpad - kws + 1                  # conv output width
    wop = wo // 3                        # pooled output width
    wt = jnp.transpose(w_oihw, (2, 3, 1, 0)).astype(jnp.float32)   # (KH,KW,Cin,Cout)
    # A[kh, wj, ci, w, o] = W[o, ci, kh, wj - w] if 0 <= wj - w < KW else 0
    a = jnp.zeros((khs, wpad, cin, wo, cout), jnp.float32)
    for kw in range(kws):
        shift = jnp.eye(wpad, wo, k=-kw, dtype=jnp.float32)        # [wj,w]=1 iff wj=w+kw
        a = a + shift[None, :, None, :, None] * wt[:, kw][:, None, :, None, :]
    # reorder the w axis to (w % 3)-major blocks: new pos dj*wop + j <- w = 3j + dj
    perm = jnp.arange(wo).reshape(wop, 3).T.reshape(-1)
    a = a[:, :, :, perm, :]
    return a.reshape(khs, wpad * cin, wo * cout).astype(jnp.bfloat16)


def _bias_row(b, wo):
    # bias broadcast over the Wo positions of a conv output row (order-independent)
    return jnp.tile(b.astype(jnp.float32), wo)[None, :]            # (1, Wo*Cout)


@jax.jit
def cnn_forward(x_nchw, params):
    n = x_nchw.shape[0]
    x = x_nchw.astype(jnp.float32)                                 # (N, 1, 28, 28)

    a1 = _toeplitz_weight(params["w1"], 28, 2)                     # (6, 32, 432) bf16
    a2 = _toeplitz_weight(params["w2"], 9, 2)                      # (5, 208, 288) bf16
    a3 = _toeplitz_weight(params["w3"], 3, 2)                      # (5, 224, 192) bf16
    b1 = _bias_row(params["b1"], 27)                               # (1, 432)
    b2 = _bias_row(params["b2"], 9)                                # (1, 288)
    b3 = _bias_row(params["b3"], 3)                                # (1, 192)
    wfc = params["wf"].T.astype(jnp.float32)                       # (64, 10)
    bfc = params["bf"].astype(jnp.float32)[None, :]                # (1, 10)

    out = pl.pallas_call(
        _cnn_fused_kernel,
        out_shape=jax.ShapeDtypeStruct((n, 1, 10), jnp.float32),
        grid=(n,),
        in_specs=[
            pl.BlockSpec((1, 1, 28, 28), lambda b: (b, 0, 0, 0)),  # per-image input
            pl.BlockSpec((6, 32, 432), lambda b: (0, 0, 0)),       # weights: constant
            pl.BlockSpec((1, 432), lambda b: (0, 0)),              # index -> stay
            pl.BlockSpec((5, 208, 288), lambda b: (0, 0, 0)),      # resident in VMEM
            pl.BlockSpec((1, 288), lambda b: (0, 0)),
            pl.BlockSpec((5, 224, 192), lambda b: (0, 0, 0)),
            pl.BlockSpec((1, 192), lambda b: (0, 0)),
            pl.BlockSpec((64, 10), lambda b: (0, 0)),
            pl.BlockSpec((1, 10), lambda b: (0, 0)),
        ],
        out_specs=pl.BlockSpec((1, 1, 10), lambda b: (b, 0, 0)),
        scratch_shapes=[
            pltpu.VMEM((32, 32), jnp.float32),        # padded layer-1 input
            pltpu.VMEM((13, 13 * 16), jnp.float32),   # padded layer-2 input
            pltpu.VMEM((7, 7 * 32), jnp.float32),     # padded layer-3 input
            pltpu.VMEM((1, 64), jnp.float32),         # flattened features
        ],
        compiler_params=pltpu.CompilerParams(
            dimension_semantics=("parallel",)),
    )(x, a1, b1, a2, b2, a3, b3, wfc, bfc)
    return out.reshape(n, 10)


# ---------------------------------------------------------------------------
# Parameters (PyTorch-style init) and a pure-JAX reference for correctness.
# ---------------------------------------------------------------------------
def init_params(key):
    def conv_init(k, cout, cin, kh, kw):
        k1, k2 = jax.random.split(k)
        bound = 1.0 / jnp.sqrt(cin * kh * kw)
        w = jax.random.uniform(k1, (cout, cin, kh, kw), jnp.float32, -bound, bound)
        b = jax.random.uniform(k2, (cout,), jnp.float32, -bound, bound)
        return w, b

    def linear_init(k, cout, cin):
        k1, k2 = jax.random.split(k)
        bound = 1.0 / jnp.sqrt(cin)
        w = jax.random.uniform(k1, (cout, cin), jnp.float32, -bound, bound)
        b = jax.random.uniform(k2, (cout,), jnp.float32, -bound, bound)
        return w, b

    ks = jax.random.split(key, 4)
    w1, b1 = conv_init(ks[0], 16, 1, 6, 6)
    w2, b2 = conv_init(ks[1], 32, 16, 5, 5)
    w3, b3 = conv_init(ks[2], 64, 32, 5, 5)
    wf, bf = linear_init(ks[3], 10, 64)
    return dict(w1=w1, b1=b1, w2=w2, b2=b2, w3=w3, b3=b3, wf=wf, bf=bf)


def reference_forward(x_nchw, params):
    x = jnp.transpose(x_nchw, (0, 2, 3, 1)).astype(jnp.float32)

    def conv(x, w, b, pad):
        y = jax.lax.conv_general_dilated(
            x, jnp.transpose(w, (2, 3, 1, 0)),
            window_strides=(1, 1), padding=((pad, pad), (pad, pad)),
            dimension_numbers=("NHWC", "HWIO", "NHWC"))
        return jnp.maximum(y + b, 0.0)

    def pool(x):
        return jax.lax.reduce_window(
            x, -jnp.inf, jax.lax.max, (1, 3, 3, 1), (1, 3, 3, 1), "VALID")

    x = pool(conv(x, params["w1"], params["b1"], 2))
    x = pool(conv(x, params["w2"], params["b2"], 2))
    x = pool(conv(x, params["w3"], params["b3"], 2))
    x = x.reshape(x.shape[0], -1)
    return x @ params["wf"].T + params["bf"]


if __name__ == "__main__":
    key = jax.random.PRNGKey(0)
    k_param, k_x = jax.random.split(key)
    params = init_params(k_param)
    # 28x28 single-channel input: the only spatial size for which the flatten
    # yields exactly 64 features, as nn.Linear(64, 10) requires.
    x = jax.random.normal(k_x, (2, 1, 28, 28), dtype=jnp.float32)

    out = jax.block_until_ready(cnn_forward(x, params))
    assert out.shape == (2, 10), out.shape

    ref = jax.block_until_ready(reference_forward(x, params))
    max_err = float(jnp.max(jnp.abs(out - ref)))
    # bf16 MXU operands (f32 accumulation) -> loosened tolerance vs. f32 ref.
    assert jnp.allclose(out, ref, atol=5e-2, rtol=5e-2), max_err

    print("KERNEL_OK")
</pallas_src>

<mosaic_0001>
module attributes {stable_mosaic.version = 11 : i64} {
  func.func @_cnn_fused_kernel(%arg0: i32, %arg1: memref<1x1x28x28xf32, #tpu.memory_space<vmem>>, %arg2: memref<6x32x432xbf16, #tpu.memory_space<vmem>>, %arg3: memref<1x432xf32, #tpu.memory_space<vmem>>, %arg4: memref<5x208x288xbf16, #tpu.memory_space<vmem>>, %arg5: memref<1x288xf32, #tpu.memory_space<vmem>>, %arg6: memref<5x224x192xbf16, #tpu.memory_space<vmem>>, %arg7: memref<1x192xf32, #tpu.memory_space<vmem>>, %arg8: memref<64x10xf32, #tpu.memory_space<vmem>>, %arg9: memref<1x10xf32, #tpu.memory_space<vmem>>, %arg10: memref<1x1x10xf32, #tpu.memory_space<vmem>>, %arg11: memref<32x32xf32, #tpu.memory_space<vmem>>, %arg12: memref<13x208xf32, #tpu.memory_space<vmem>>, %arg13: memref<7x224xf32, #tpu.memory_space<vmem>>, %arg14: memref<1x64xf32, #tpu.memory_space<vmem>>) attributes {dimension_semantics = [#tpu.dimension_semantics<parallel>], iteration_bounds = array<i64: 2>, scalar_prefetch = 0 : i64, scratch_operands = 4 : i64, tpu.core_type = #tpu.core_type<tc>, window_params = [{transform_indices = @transform_0, window_bounds = array<i64: 1, 1, 28, 28>}, {pipeline_mode = #tpu.pipeline_mode<synchronous>, transform_indices = @transform_1, window_bounds = array<i64: 6, 32, 432>}, {pipeline_mode = #tpu.pipeline_mode<synchronous>, transform_indices = @transform_2, window_bounds = array<i64: 1, 432>}, {pipeline_mode = #tpu.pipeline_mode<synchronous>, transform_indices = @transform_3, window_bounds = array<i64: 5, 208, 288>}, {pipeline_mode = #tpu.pipeline_mode<synchronous>, transform_indices = @transform_4, window_bounds = array<i64: 1, 288>}, {pipeline_mode = #tpu.pipeline_mode<synchronous>, transform_indices = @transform_5, window_bounds = array<i64: 5, 224, 192>}, {pipeline_mode = #tpu.pipeline_mode<synchronous>, transform_indices = @transform_6, window_bounds = array<i64: 1, 192>}, {pipeline_mode = #tpu.pipeline_mode<synchronous>, transform_indices = @transform_7, window_bounds = array<i64: 64, 10>}, {pipeline_mode = #tpu.pipeline_mode<synchronous>, transform_indices = @transform_8, window_bounds = array<i64: 1, 10>}, {transform_indices = @transform_9, window_bounds = array<i64: 1, 1, 10>}]} {
    %cst = arith.constant 0.000000e+00 : f32
    %0 = vector.broadcast %cst : f32 to vector<32x32xf32>
    %c0 = arith.constant 0 : index
    %c0_0 = arith.constant 0 : index
    %1 = vector.load %arg11[%c0, %c0_0] : memref<32x32xf32, #tpu.memory_space<vmem>>, vector<32x32xf32>
    tpu.vector_store %arg11[%c0, %c0_0], %0 {strides = array<i32>} : memref<32x32xf32, #tpu.memory_space<vmem>>, vector<32x32xf32>,
    %cst_1 = arith.constant 0.000000e+00 : f32
    %2 = vector.broadcast %cst_1 : f32 to vector<13x208xf32>
    %c0_2 = arith.constant 0 : index
    %c0_3 = arith.constant 0 : index
    %3 = vector.load %arg12[%c0_2, %c0_3] : memref<13x208xf32, #tpu.memory_space<vmem>>, vector<13x208xf32>
    tpu.vector_store %arg12[%c0_2, %c0_3], %2 {strides = array<i32>} : memref<13x208xf32, #tpu.memory_space<vmem>>, vector<13x208xf32>,
    %cst_4 = arith.constant 0.000000e+00 : f32
    %4 = vector.broadcast %cst_4 : f32 to vector<7x224xf32>
    %c0_5 = arith.constant 0 : index
    %c0_6 = arith.constant 0 : index
    %5 = vector.load %arg13[%c0_5, %c0_6] : memref<7x224xf32, #tpu.memory_space<vmem>>, vector<7x224xf32>
    tpu.vector_store %arg13[%c0_5, %c0_6], %4 {strides = array<i32>} : memref<7x224xf32, #tpu.memory_space<vmem>>, vector<7x224xf32>,
    %c0_7 = arith.constant 0 : index
    %c0_8 = arith.constant 0 : index
    %c0_9 = arith.constant 0 : index
    %c0_10 = arith.constant 0 : index
    %6 = vector.load %arg1[%c0_7, %c0_8, %c0_9, %c0_10] : memref<1x1x28x28xf32, #tpu.memory_space<vmem>>, vector<1x1x28x28xf32>
    %7 = vector.shape_cast %6 : vector<1x1x28x28xf32> to vector<28x28xf32>
    %c2 = arith.constant 2 : index
    %c2_11 = arith.constant 2 : index
    %8 = vector.load %arg11[%c2, %c2_11] : memref<32x32xf32, #tpu.memory_space<vmem>>, vector<28x28xf32>
    tpu.vector_store %arg11[%c2, %c2_11], %7 {strides = array<i32>} : memref<32x32xf32, #tpu.memory_space<vmem>>, vector<28x28xf32>,
    %cst_12 = arith.constant 0.000000e+00 : f32
    %9 = vector.broadcast %cst_12 : f32 to vector<27x432xf32>
    %c0_13 = arith.constant 0 : index
    %c0_14 = arith.constant 0 : index
    %10 = vector.load %arg11[%c0_13, %c0_14] : memref<32x32xf32, #tpu.memory_space<vmem>>, vector<27x32xf32>
    %11 = arith.truncf %10 : vector<27x32xf32> to vector<27x32xbf16>
    %c0_15 = arith.constant 0 : index
    %c0_16 = arith.constant 0 : index
    %c0_17 = arith.constant 0 : index
    %12 = vector.load %arg2[%c0_15, %c0_16, %c0_17] : memref<6x32x432xbf16, #tpu.memory_space<vmem>>, vector<1x32x432xbf16>
    %13 = vector.shape_cast %12 : vector<1x32x432xbf16> to vector<32x432xbf16>
    %cst_18 = arith.constant dense<0.000000e+00> : vector<27x432xf32>
    %14 = tpu.matmul %11, %13, %cst_18 {dimension_numbers = #tpu.dot_dimension_numbers<[1], [0], [0], [1], [0, 0, 1, 1], [], []>} : vector<27x32xbf16>, vector<32x432xbf16>, vector<27x432xf32> -> vector<27x432xf32>
    %15 = arith.addf %9, %14 : vector<27x432xf32>
    %c1 = arith.constant 1 : index
    %c0_19 = arith.constant 0 : index
    %16 = vector.load %arg11[%c1, %c0_19] : memref<32x32xf32, #tpu.memory_space<vmem>>, vector<27x32xf32>
    %17 = arith.truncf %16 : vector<27x32xf32> to vector<27x32xbf16>
    %c1_20 = arith.constant 1 : index
    %c0_21 = arith.constant 0 : index
    %c0_22 = arith.constant 0 : index
    %18 = vector.load %arg2[%c1_20, %c0_21, %c0_22] : memref<6x32x432xbf16, #tpu.memory_space<vmem>>, vector<1x32x432xbf16>
    %19 = vector.shape_cast %18 : vector<1x32x432xbf16> to vector<32x432xbf16>
    %cst_23 = arith.constant dense<0.000000e+00> : vector<27x432xf32>
    %20 = tpu.matmul %17, %19, %cst_23 {dimension_numbers = #tpu.dot_dimension_numbers<[1], [0], [0], [1], [0, 0, 1, 1], [], []>} : vector<27x32xbf16>, vector<32x432xbf16>, vector<27x432xf32> -> vector<27x432xf32>
    %21 = arith.addf %15, %20 : vector<27x432xf32>
    %c2_24 = arith.constant 2 : index
    %c0_25 = arith.constant 0 : index
    %22 = vector.load %arg11[%c2_24, %c0_25] : memref<32x32xf32, #tpu.memory_space<vmem>>, vector<27x32xf32>
    %23 = arith.truncf %22 : vector<27x32xf32> to vector<27x32xbf16>
    %c2_26 = arith.constant 2 : index
    %c0_27 = arith.constant 0 : index
    %c0_28 = arith.constant 0 : index
    %24 = vector.load %arg2[%c2_26, %c0_27, %c0_28] : memref<6x32x432xbf16, #tpu.memory_space<vmem>>, vector<1x32x432xbf16>
    %25 = vector.shape_cast %24 : vector<1x32x432xbf16> to vector<32x432xbf16>
    %cst_29 = arith.constant dense<0.000000e+00> : vector<27x432xf32>
    %26 = tpu.matmul %23, %25, %cst_29 {dimension_numbers = #tpu.dot_dimension_numbers<[1], [0], [0], [1], [0, 0, 1, 1], [], []>} : vector<27x32xbf16>, vector<32x432xbf16>, vector<27x432xf32> -> vector<27x432xf32>
    %27 = arith.addf %21, %26 : vector<27x432xf32>
    %c3 = arith.constant 3 : index
    %c0_30 = arith.constant 0 : index
    %28 = vector.load %arg11[%c3, %c0_30] : memref<32x32xf32, #tpu.memory_space<vmem>>, vector<27x32xf32>
    %29 = arith.truncf %28 : vector<27x32xf32> to vector<27x32xbf16>
    %c3_31 = arith.constant 3 : index
    %c0_32 = arith.constant 0 : index
    %c0_33 = arith.constant 0 : index
    %30 = vector.load %arg2[%c3_31, %c0_32, %c0_33] : memref<6x32x432xbf16, #tpu.memory_space<vmem>>, vector<1x32x432xbf16>
    %31 = vector.shape_cast %30 : vector<1x32x432xbf16> to vector<32x432xbf16>
    %cst_34 = arith.constant dense<0.000000e+00> : vector<27x432xf32>
    %32 = tpu.matmul %29, %31, %cst_34 {dimension_numbers = #tpu.dot_dimension_numbers<[1], [0], [0], [1], [0, 0, 1, 1], [], []>} : vector<27x32xbf16>, vector<32x432xbf16>, vector<27x432xf32> -> vector<27x432xf32>
    %33 = arith.addf %27, %32 : vector<27x432xf32>
    %c4 = arith.constant 4 : index
    %c0_35 = arith.constant 0 : index
    %34 = vector.load %arg11[%c4, %c0_35] : memref<32x32xf32, #tpu.memory_space<vmem>>, vector<27x32xf32>
    %35 = arith.truncf %34 : vector<27x32xf32> to vector<27x32xbf16>
    %c4_36 = arith.constant 4 : index
    %c0_37 = arith.constant 0 : index
    %c0_38 = arith.constant 0 : index
    %36 = vector.load %arg2[%c4_36, %c0_37, %c0_38] : memref<6x32x432xbf16, #tpu.memory_space<vmem>>, vector<1x32x432xbf16>
    %37 = vector.shape_cast %36 : vector<1x32x432xbf16> to vector<32x432xbf16>
    %cst_39 = arith.constant dense<0.000000e+00> : vector<27x432xf32>
    %38 = tpu.matmul %35, %37, %cst_39 {dimension_numbers = #tpu.dot_dimension_numbers<[1], [0], [0], [1], [0, 0, 1, 1], [], []>} : vector<27x32xbf16>, vector<32x432xbf16>, vector<27x432xf32> -> vector<27x432xf32>
    %39 = arith.addf %33, %38 : vector<27x432xf32>
    %c5 = arith.constant 5 : index
    %c0_40 = arith.constant 0 : index
    %40 = vector.load %arg11[%c5, %c0_40] : memref<32x32xf32, #tpu.memory_space<vmem>>, vector<27x32xf32>
    %41 = arith.truncf %40 : vector<27x32xf32> to vector<27x32xbf16>
    %c5_41 = arith.constant 5 : index
    %c0_42 = arith.constant 0 : index
    %c0_43 = arith.constant 0 : index
    %42 = vector.load %arg2[%c5_41, %c0_42, %c0_43] : memref<6x32x432xbf16, #tpu.memory_space<vmem>>, vector<1x32x432xbf16>
    %43 = vector.shape_cast %42 : vector<1x32x432xbf16> to vector<32x432xbf16>
    %cst_44 = arith.constant dense<0.000000e+00> : vector<27x432xf32>
    %44 = tpu.matmul %41, %43, %cst_44 {dimension_numbers = #tpu.dot_dimension_numbers<[1], [0], [0], [1], [0, 0, 1, 1], [], []>} : vector<27x32xbf16>, vector<32x432xbf16>, vector<27x432xf32> -> vector<27x432xf32>
    %45 = arith.addf %39, %44 : vector<27x432xf32>
    %c0_45 = arith.constant 0 : index
    %c0_46 = arith.constant 0 : index
    %46 = vector.load %arg3[%c0_45, %c0_46] : memref<1x432xf32, #tpu.memory_space<vmem>>, vector<1x432xf32>
    %47 = vector.broadcast %46 : vector<1x432xf32> to vector<27x432xf32>
    %48 = arith.addf %45, %47 : vector<27x432xf32>
    %cst_47 = arith.constant 0.000000e+00 : f32
    %49 = vector.broadcast %cst_47 : f32 to vector<27x432xf32>
    %50 = arith.maximumf %48, %49 : vector<27x432xf32>
    %51 = vector.extract_strided_slice %50 {offsets = [0, 0], sizes = [27, 144], strides = [1, 1]} : vector<27x432xf32> to vector<27x144xf32>
    %52 = vector.extract_strided_slice %50 {offsets = [0, 144], sizes = [27, 144], strides = [1, 1]} : vector<27x432xf32> to vector<27x144xf32>
    %53 = arith.maximumf %51, %52 : vector<27x144xf32>
    %54 = vector.extract_strided_slice %50 {offsets = [0, 288], sizes = [27, 144], strides = [1, 1]} : vector<27x432xf32> to vector<27x144xf32>
    %55 = arith.maximumf %53, %54 : vector<27x144xf32>
    %56 = vector.extract_strided_slice %55 {offsets = [0, 0], sizes = [3, 144], strides = [1, 1]} : vector<27x144xf32> to vector<3x144xf32>
    %cst_48 = arith.constant dense<0xFF800000> : vector<144xf32>
    %57 = vector.multi_reduction <maximumf>, %56, %cst_48 [0] : vector<3x144xf32> to vector<144xf32>
    %58 = vector.shape_cast %57 : vector<144xf32> to vector<1x144xf32>
    %c2_49 = arith.constant 2 : index
    %c32 = arith.constant 32 : index
    %59 = vector.load %arg12[%c2_49, %c32] : memref<13x208xf32, #tpu.memory_space<vmem>>, vector<1x144xf32>
    tpu.vector_store %arg12[%c2_49, %c32], %58 {strides = array<i32>} : memref<13x208xf32, #tpu.memory_space<vmem>>, vector<1x144xf32>,
    %60 = vector.extract_strided_slice %55 {offsets = [3, 0], sizes = [3, 144], strides = [1, 1]} : vector<27x144xf32> to vector<3x144xf32>
    %cst_50 = arith.constant dense<0xFF800000> : vector<144xf32>
    %61 = vector.multi_reduction <maximumf>, %60, %cst_50 [0] : vector<3x144xf32> to vector<144xf32>
    %62 = vector.shape_cast %61 : vector<144xf32> to vector<1x144xf32>
    %c3_51 = arith.constant 3 : index
    %c32_52 = arith.constant 32 : index
    %63 = vector.load %arg12[%c3_51, %c32_52] : memref<13x208xf32, #tpu.memory_space<vmem>>, vector<1x144xf32>
    tpu.vector_store %arg12[%c3_51, %c32_52], %62 {strides = array<i32>} : memref<13x208xf32, #tpu.memory_space<vmem>>, vector<1x144xf32>,
    %64 = vector.extract_strided_slice %55 {offsets = [6, 0], sizes = [3, 144], strides = [1, 1]} : vector<27x144xf32> to vector<3x144xf32>
    %cst_53 = arith.constant dense<0xFF800000> : vector<144xf32>
    %65 = vector.multi_reduction <maximumf>, %64, %cst_53 [0] : vector<3x144xf32> to vector<144xf32>
    %66 = vector.shape_cast %65 : vector<144xf32> to vector<1x144xf32>
    %c4_54 = arith.constant 4 : index
    %c32_55 = arith.constant 32 : index
    %67 = vector.load %arg12[%c4_54, %c32_55] : memref<13x208xf32, #tpu.memory_space<vmem>>, vector<1x144xf32>
    tpu.vector_store %arg12[%c4_54, %c32_55], %66 {strides = array<i32>} : memref<13x208xf32, #tpu.memory_space<vmem>>, vector<1x144xf32>,
    %68 = vector.extract_strided_slice %55 {offsets = [9, 0], sizes = [3, 144], strides = [1, 1]} : vector<27x144xf32> to vector<3x144xf32>
    %cst_56 = arith.constant dense<0xFF800000> : vector<144xf32>
    %69 = vector.multi_reduction <maximumf>, %68, %cst_56 [0] : vector<3x144xf32> to vector<144xf32>
    %70 = vector.shape_cast %69 : vector<144xf32> to vector<1x144xf32>
    %c5_57 = arith.constant 5 : index
    %c32_58 = arith.constant 32 : index
    %71 = vector.load %arg12[%c5_57, %c32_58] : memref<13x208xf32, #tpu.memory_space<vmem>>, vector<1x144xf32>
    tpu.vector_store %arg12[%c5_57, %c32_58], %70 {strides = array<i32>} : memref<13x208xf32, #tpu.memory_space<vmem>>, vector<1x144xf32>,
    %72 = vector.extract_strided_slice %55 {offsets = [12, 0], sizes = [3, 144], strides = [1, 1]} : vector<27x144xf32> to vector<3x144xf32>
    %cst_59 = arith.constant dense<0xFF800000> : vector<144xf32>
    %73 = vector.multi_reduction <maximumf>, %72, %cst_59 [0] : vector<3x144xf32> to vector<144xf32>
    %74 = vector.shape_cast %73 : vector<144xf32> to vector<1x144xf32>
    %c6 = arith.constant 6 : index
    %c32_60 = arith.constant 32 : index
    %75 = vector.load %arg12[%c6, %c32_60] : memref<13x208xf32, #tpu.memory_space<vmem>>, vector<1x144xf32>
    tpu.vector_store %arg12[%c6, %c32_60], %74 {strides = array<i32>} : memref<13x208xf32, #tpu.memory_space<vmem>>, vector<1x144xf32>,
    %76 = vector.extract_strided_slice %55 {offsets = [15, 0], sizes = [3, 144], strides = [1, 1]} : vector<27x144xf32> to vector<3x144xf32>
    %cst_61 = arith.constant dense<0xFF800000> : vector<144xf32>
    %77 = vector.multi_reduction <maximumf>, %76, %cst_61 [0] : vector<3x144xf32> to vector<144xf32>
    %78 = vector.shape_cast %77 : vector<144xf32> to vector<1x144xf32>
    %c7 = arith.constant 7 : index
    %c32_62 = arith.constant 32 : index
    %79 = vector.load %arg12[%c7, %c32_62] : memref<13x208xf32, #tpu.memory_space<vmem>>, vector<1x144xf32>
    tpu.vector_store %arg12[%c7, %c32_62], %78 {strides = array<i32>} : memref<13x208xf32, #tpu.memory_space<vmem>>, vector<1x144xf32>,
    %80 = vector.extract_strided_slice %55 {offsets = [18, 0], sizes = [3, 144], strides = [1, 1]} : vector<27x144xf32> to vector<3x144xf32>
    %cst_63 = arith.constant dense<0xFF800000> : vector<144xf32>
    %81 = vector.multi_reduction <maximumf>, %80, %cst_63 [0] : vector<3x144xf32> to vector<144xf32>
    %82 = vector.shape_cast %81 : vector<144xf32> to vector<1x144xf32>
    %c8 = arith.constant 8 : index
    %c32_64 = arith.constant 32 : index
    %83 = vector.load %arg12[%c8, %c32_64] : memref<13x208xf32, #tpu.memory_space<vmem>>, vector<1x144xf32>
    tpu.vector_store %arg12[%c8, %c32_64], %82 {strides = array<i32>} : memref<13x208xf32, #tpu.memory_space<vmem>>, vector<1x144xf32>,
    %84 = vector.extract_strided_slice %55 {offsets = [21, 0], sizes = [3, 144], strides = [1, 1]} : vector<27x144xf32> to vector<3x144xf32>
    %cst_65 = arith.constant dense<0xFF800000> : vector<144xf32>
    %85 = vector.multi_reduction <maximumf>, %84, %cst_65 [0] : vector<3x144xf32> to vector<144xf32>
    %86 = vector.shape_cast %85 : vector<144xf32> to vector<1x144xf32>
    %c9 = arith.constant 9 : index
    %c32_66 = arith.constant 32 : index
    %87 = vector.load %arg12[%c9, %c32_66] : memref<13x208xf32, #tpu.memory_space<vmem>>, vector<1x144xf32>
    tpu.vector_store %arg12[%c9, %c32_66], %86 {strides = array<i32>} : memref<13x208xf32, #tpu.memory_space<vmem>>, vector<1x144xf32>,
    %88 = vector.extract_strided_slice %55 {offsets = [24, 0], sizes = [3, 144], strides = [1, 1]} : vector<27x144xf32> to vector<3x144xf32>
    %cst_67 = arith.constant dense<0xFF800000> : vector<144xf32>
    %89 = vector.multi_reduction <maximumf>, %88, %cst_67 [0] : vector<3x144xf32> to vector<144xf32>
    %90 = vector.shape_cast %89 : vector<144xf32> to vector<1x144xf32>
    %c10 = arith.constant 10 : index
    %c32_68 = arith.constant 32 : index
    %91 = vector.load %arg12[%c10, %c32_68] : memref<13x208xf32, #tpu.memory_space<vmem>>, vector<1x144xf32>
    tpu.vector_store %arg12[%c10, %c32_68], %90 {strides = array<i32>} : memref<13x208xf32, #tpu.memory_space<vmem>>, vector<1x144xf32>,
    %cst_69 = arith.constant 0.000000e+00 : f32
    %92 = vector.broadcast %cst_69 : f32 to vector<9x288xf32>
    %c0_70 = arith.constant 0 : index
    %c0_71 = arith.constant 0 : index
    %93 = vector.load %arg12[%c0_70, %c0_71] : memref<13x208xf32, #tpu.memory_space<vmem>>, vector<9x208xf32>
    %94 = arith.truncf %93 : vector<9x208xf32> to vector<9x208xbf16>
    %c0_72 = arith.constant 0 : index
    %c0_73 = arith.constant 0 : index
    %c0_74 = arith.constant 0 : index
    %95 = vector.load %arg4[%c0_72, %c0_73, %c0_74] : memref<5x208x288xbf16, #tpu.memory_space<vmem>>, vector<1x208x288xbf16>
    %96 = vector.shape_cast %95 : vector<1x208x288xbf16> to vector<208x288xbf16>
    %cst_75 = arith.constant dense<0.000000e+00> : vector<9x288xf32>
    %97 = tpu.matmul %94, %96, %cst_75 {dimension_numbers = #tpu.dot_dimension_numbers<[1], [0], [0], [1], [0, 0, 1, 1], [], []>} : vector<9x208xbf16>, vector<208x288xbf16>, vector<9x288xf32> -> vector<9x288xf32>
    %98 = arith.addf %92, %97 : vector<9x288xf32>
    %c1_76 = arith.constant 1 : index
    %c0_77 = arith.constant 0 : index
    %99 = vector.load %arg12[%c1_76, %c0_77] : memref<13x208xf32, #tpu.memory_space<vmem>>, vector<9x208xf32>
    %100 = arith.truncf %99 : vector<9x208xf32> to vector<9x208xbf16>
    %c1_78 = arith.constant 1 : index
    %c0_79 = arith.constant 0 : index
    %c0_80 = arith.constant 0 : index
    %101 = vector.load %arg4[%c1_78, %c0_79, %c0_80] : memref<5x208x288xbf16, #tpu.memory_space<vmem>>, vector<1x208x288xbf16>
    %102 = vector.shape_cast %101 : vector<1x208x288xbf16> to vector<208x288xbf16>
    %cst_81 = arith.constant dense<0.000000e+00> : vector<9x288xf32>
    %103 = tpu.matmul %100, %102, %cst_81 {dimension_numbers = #tpu.dot_dimension_numbers<[1], [0], [0], [1], [0, 0, 1, 1], [], []>} : vector<9x208xbf16>, vector<208x288xbf16>, vector<9x288xf32> -> vector<9x288xf32>
    %104 = arith.addf %98, %103 : vector<9x288xf32>
    %c2_82 = arith.constant 2 : index
    %c0_83 = arith.constant 0 : index
    %105 = vector.load %arg12[%c2_82, %c0_83] : memref<13x208xf32, #tpu.memory_space<vmem>>, vector<9x208xf32>
    %106 = arith.truncf %105 : vector<9x208xf32> to vector<9x208xbf16>
    %c2_84 = arith.constant 2 : index
    %c0_85 = arith.constant 0 : index
    %c0_86 = arith.constant 0 : index
    %107 = vector.load %arg4[%c2_84, %c0_85, %c0_86] : memref<5x208x288xbf16, #tpu.memory_space<vmem>>, vector<1x208x288xbf16>
    %108 = vector.shape_cast %107 : vector<1x208x288xbf16> to vector<208x288xbf16>
    %cst_87 = arith.constant dense<0.000000e+00> : vector<9x288xf32>
    %109 = tpu.matmul %106, %108, %cst_87 {dimension_numbers = #tpu.dot_dimension_numbers<[1], [0], [0], [1], [0, 0, 1, 1], [], []>} : vector<9x208xbf16>, vector<208x288xbf16>, vector<9x288xf32> -> vector<9x288xf32>
    %110 = arith.addf %104, %109 : vector<9x288xf32>
    %c3_88 = arith.constant 3 : index
    %c0_89 = arith.constant 0 : index
    %111 = vector.load %arg12[%c3_88, %c0_89] : memref<13x208xf32, #tpu.memory_space<vmem>>, vector<9x208xf32>
    %112 = arith.truncf %111 : vector<9x208xf32> to vector<9x208xbf16>
    %c3_90 = arith.constant 3 : index
    %c0_91 = arith.constant 0 : index
    %c0_92 = arith.constant 0 : index
    %113 = vector.load %arg4[%c3_90, %c0_91, %c0_92] : memref<5x208x288xbf16, #tpu.memory_space<vmem>>, vector<1x208x288xbf16>
    %114 = vector.shape_cast %113 : vector<1x208x288xbf16> to vector<208x288xbf16>
    %cst_93 = arith.constant dense<0.000000e+00> : vector<9x288xf32>
    %115 = tpu.matmul %112, %114, %cst_93 {dimension_numbers = #tpu.dot_dimension_numbers<[1], [0], [0], [1], [0, 0, 1, 1], [], []>} : vector<9x208xbf16>, vector<208x288xbf16>, vector<9x288xf32> -> vector<9x288xf32>
    %116 = arith.addf %110, %115 : vector<9x288xf32>
    %c4_94 = arith.constant 4 : index
    %c0_95 = arith.constant 0 : index
    %117 = vector.load %arg12[%c4_94, %c0_95] : memref<13x208xf32, #tpu.memory_space<vmem>>, vector<9x208xf32>
    %118 = arith.truncf %117 : vector<9x208xf32> to vector<9x208xbf16>
    %c4_96 = arith.constant 4 : index
    %c0_97 = arith.constant 0 : index
    %c0_98 = arith.constant 0 : index
    %119 = vector.load %arg4[%c4_96, %c0_97, %c0_98] : memref<5x208x288xbf16, #tpu.memory_space<vmem>>, vector<1x208x288xbf16>
    %120 = vector.shape_cast %119 : vector<1x208x288xbf16> to vector<208x288xbf16>
    %cst_99 = arith.constant dense<0.000000e+00> : vector<9x288xf32>
    %121 = tpu.matmul %118, %120, %cst_99 {dimension_numbers = #tpu.dot_dimension_numbers<[1], [0], [0], [1], [0, 0, 1, 1], [], []>} : vector<9x208xbf16>, vector<208x288xbf16>, vector<9x288xf32> -> vector<9x288xf32>
    %122 = arith.addf %116, %121 : vector<9x288xf32>
    %c0_100 = arith.constant 0 : index
    %c0_101 = arith.constant 0 : index
    %123 = vector.load %arg5[%c0_100, %c0_101] : memref<1x288xf32, #tpu.memory_space<vmem>>, vector<1x288xf32>
    %124 = vector.broadcast %123 : vector<1x288xf32> to vector<9x288xf32>
    %125 = arith.addf %122, %124 : vector<9x288xf32>
    %cst_102 = arith.constant 0.000000e+00 : f32
    %126 = vector.broadcast %cst_102 : f32 to vector<9x288xf32>
    %127 = arith.maximumf %125, %126 : vector<9x288xf32>
    %128 = vector.extract_strided_slice %127 {offsets = [0, 0], sizes = [9, 96], strides = [1, 1]} : vector<9x288xf32> to vector<9x96xf32>
    %129 = vector.extract_strided_slice %127 {offsets = [0, 96], sizes = [9, 96], strides = [1, 1]} : vector<9x288xf32> to vector<9x96xf32>
    %130 = arith.maximumf %128, %129 : vector<9x96xf32>
    %131 = vector.extract_strided_slice %127 {offsets = [0, 192], sizes = [9, 96], strides = [1, 1]} : vector<9x288xf32> to vector<9x96xf32>
    %132 = arith.maximumf %130, %131 : vector<9x96xf32>
    %133 = vector.extract_strided_slice %132 {offsets = [0, 0], sizes = [3, 96], strides = [1, 1]} : vector<9x96xf32> to vector<3x96xf32>
    %cst_103 = arith.constant dense<0xFF800000> : vector<96xf32>
    %134 = vector.multi_reduction <maximumf>, %133, %cst_103 [0] : vector<3x96xf32> to vector<96xf32>
    %135 = vector.shape_cast %134 : vector<96xf32> to vector<1x96xf32>
    %c2_104 = arith.constant 2 : index
    %c64 = arith.constant 64 : index
    %136 = vector.load %arg13[%c2_104, %c64] : memref<7x224xf32, #tpu.memory_space<vmem>>, vector<1x96xf32>
    tpu.vector_store %arg13[%c2_104, %c64], %135 {strides = array<i32>} : memref<7x224xf32, #tpu.memory_space<vmem>>, vector<1x96xf32>,
    %137 = vector.extract_strided_slice %132 {offsets = [3, 0], sizes = [3, 96], strides = [1, 1]} : vector<9x96xf32> to vector<3x96xf32>
    %cst_105 = arith.constant dense<0xFF800000> : vector<96xf32>
    %138 = vector.multi_reduction <maximumf>, %137, %cst_105 [0] : vector<3x96xf32> to vector<96xf32>
    %139 = vector.shape_cast %138 : vector<96xf32> to vector<1x96xf32>
    %c3_106 = arith.constant 3 : index
    %c64_107 = arith.constant 64 : index
    %140 = vector.load %arg13[%c3_106, %c64_107] : memref<7x224xf32, #tpu.memory_space<vmem>>, vector<1x96xf32>
    tpu.vector_store %arg13[%c3_106, %c64_107], %139 {strides = array<i32>} : memref<7x224xf32, #tpu.memory_space<vmem>>, vector<1x96xf32>,
    %141 = vector.extract_strided_slice %132 {offsets = [6, 0], sizes = [3, 96], strides = [1, 1]} : vector<9x96xf32> to vector<3x96xf32>
    %cst_108 = arith.constant dense<0xFF800000> : vector<96xf32>
    %142 = vector.multi_reduction <maximumf>, %141, %cst_108 [0] : vector<3x96xf32> to vector<96xf32>
    %143 = vector.shape_cast %142 : vector<96xf32> to vector<1x96xf32>
    %c4_109 = arith.constant 4 : index
    %c64_110 = arith.constant 64 : index
    %144 = vector.load %arg13[%c4_109, %c64_110] : memref<7x224xf32, #tpu.memory_space<vmem>>, vector<1x96xf32>
    tpu.vector_store %arg13[%c4_109, %c64_110], %143 {strides = array<i32>} : memref<7x224xf32, #tpu.memory_space<vmem>>, vector<1x96xf32>,
    %cst_111 = arith.constant 0.000000e+00 : f32
    %145 = vector.broadcast %cst_111 : f32 to vector<3x192xf32>
    %c0_112 = arith.constant 0 : index
    %c0_113 = arith.constant 0 : index
    %146 = vector.load %arg13[%c0_112, %c0_113] : memref<7x224xf32, #tpu.memory_space<vmem>>, vector<3x224xf32>
    %147 = arith.truncf %146 : vector<3x224xf32> to vector<3x224xbf16>
    %c0_114 = arith.constant 0 : index
    %c0_115 = arith.constant 0 : index
    %c0_116 = arith.constant 0 : index
    %148 = vector.load %arg6[%c0_114, %c0_115, %c0_116] : memref<5x224x192xbf16, #tpu.memory_space<vmem>>, vector<1x224x192xbf16>
    %149 = vector.shape_cast %148 : vector<1x224x192xbf16> to vector<224x192xbf16>
    %cst_117 = arith.constant dense<0.000000e+00> : vector<3x192xf32>
    %150 = tpu.matmul %147, %149, %cst_117 {dimension_numbers = #tpu.dot_dimension_numbers<[1], [0], [0], [1], [0, 0, 1, 1], [], []>} : vector<3x224xbf16>, vector<224x192xbf16>, vector<3x192xf32> -> vector<3x192xf32>
    %151 = arith.addf %145, %150 : vector<3x192xf32>
    %c1_118 = arith.constant 1 : index
    %c0_119 = arith.constant 0 : index
    %152 = vector.load %arg13[%c1_118, %c0_119] : memref<7x224xf32, #tpu.memory_space<vmem>>, vector<3x224xf32>
    %153 = arith.truncf %152 : vector<3x224xf32> to vector<3x224xbf16>
    %c1_120 = arith.constant 1 : index
    %c0_121 = arith.constant 0 : index
    %c0_122 = arith.constant 0 : index
    %154 = vector.load %arg6[%c1_120, %c0_121, %c0_122] : memref<5x224x192xbf16, #tpu.memory_space<vmem>>, vector<1x224x192xbf16>
    %155 = vector.shape_cast %154 : vector<1x224x192xbf16> to vector<224x192xbf16>
    %cst_123 = arith.constant dense<0.000000e+00> : vector<3x192xf32>
    %156 = tpu.matmul %153, %155, %cst_123 {dimension_numbers = #tpu.dot_dimension_numbers<[1], [0], [0], [1], [0, 0, 1, 1], [], []>} : vector<3x224xbf16>, vector<224x192xbf16>, vector<3x192xf32> -> vector<3x192xf32>
    %157 = arith.addf %151, %156 : vector<3x192xf32>
    %c2_124 = arith.constant 2 : index
    %c0_125 = arith.constant 0 : index
    %158 = vector.load %arg13[%c2_124, %c0_125] : memref<7x224xf32, #tpu.memory_space<vmem>>, vector<3x224xf32>
    %159 = arith.truncf %158 : vector<3x224xf32> to vector<3x224xbf16>
    %c2_126 = arith.constant 2 : index
    %c0_127 = arith.constant 0 : index
    %c0_128 = arith.constant 0 : index
    %160 = vector.load %arg6[%c2_126, %c0_127, %c0_128] : memref<5x224x192xbf16, #tpu.memory_space<vmem>>, vector<1x224x192xbf16>
    %161 = vector.shape_cast %160 : vector<1x224x192xbf16> to vector<224x192xbf16>
    %cst_129 = arith.constant dense<0.000000e+00> : vector<3x192xf32>
    %162 = tpu.matmul %159, %161, %cst_129 {dimension_numbers = #tpu.dot_dimension_numbers<[1], [0], [0], [1], [0, 0, 1, 1], [], []>} : vector<3x224xbf16>, vector<224x192xbf16>, vector<3x192xf32> -> vector<3x192xf32>
    %163 = arith.addf %157, %162 : vector<3x192xf32>
    %c3_130 = arith.constant 3 : index
    %c0_131 = arith.constant 0 : index
    %164 = vector.load %arg13[%c3_130, %c0_131] : memref<7x224xf32, #tpu.memory_space<vmem>>, vector<3x224xf32>
    %165 = arith.truncf %164 : vector<3x224xf32> to vector<3x224xbf16>
    %c3_132 = arith.constant 3 : index
    %c0_133 = arith.constant 0 : index
    %c0_134 = arith.constant 0 : index
    %166 = vector.load %arg6[%c3_132, %c0_133, %c0_134] : memref<5x224x192xbf16, #tpu.memory_space<vmem>>, vector<1x224x192xbf16>
    %167 = vector.shape_cast %166 : vector<1x224x192xbf16> to vector<224x192xbf16>
    %cst_135 = arith.constant dense<0.000000e+00> : vector<3x192xf32>
    %168 = tpu.matmul %165, %167, %cst_135 {dimension_numbers = #tpu.dot_dimension_numbers<[1], [0], [0], [1], [0, 0, 1, 1], [], []>} : vector<3x224xbf16>, vector<224x192xbf16>, vector<3x192xf32> -> vector<3x192xf32>
    %169 = arith.addf %163, %168 : vector<3x192xf32>
    %c4_136 = arith.constant 4 : index
    %c0_137 = arith.constant 0 : index
    %170 = vector.load %arg13[%c4_136, %c0_137] : memref<7x224xf32, #tpu.memory_space<vmem>>, vector<3x224xf32>
    %171 = arith.truncf %170 : vector<3x224xf32> to vector<3x224xbf16>
    %c4_138 = arith.constant 4 : index
    %c0_139 = arith.constant 0 : index
    %c0_140 = arith.constant 0 : index
    %172 = vector.load %arg6[%c4_138, %c0_139, %c0_140] : memref<5x224x192xbf16, #tpu.memory_space<vmem>>, vector<1x224x192xbf16>
    %173 = vector.shape_cast %172 : vector<1x224x192xbf16> to vector<224x192xbf16>
    %cst_141 = arith.constant dense<0.000000e+00> : vector<3x192xf32>
    %174 = tpu.matmul %171, %173, %cst_141 {dimension_numbers = #tpu.dot_dimension_numbers<[1], [0], [0], [1], [0, 0, 1, 1], [], []>} : vector<3x224xbf16>, vector<224x192xbf16>, vector<3x192xf32> -> vector<3x192xf32>
    %175 = arith.addf %169, %174 : vector<3x192xf32>
    %c0_142 = arith.constant 0 : index
    %c0_143 = arith.constant 0 : index
    %176 = vector.load %arg7[%c0_142, %c0_143] : memref<1x192xf32, #tpu.memory_space<vmem>>, vector<1x192xf32>
    %177 = vector.broadcast %176 : vector<1x192xf32> to vector<3x192xf32>
    %178 = arith.addf %175, %177 : vector<3x192xf32>
    %cst_144 = arith.constant 0.000000e+00 : f32
    %179 = vector.broadcast %cst_144 : f32 to vector<3x192xf32>
    %180 = arith.maximumf %178, %179 : vector<3x192xf32>
    %181 = vector.extract_strided_slice %180 {offsets = [0, 0], sizes = [3, 64], strides = [1, 1]} : vector<3x192xf32> to vector<3x64xf32>
    %182 = vector.extract_strided_slice %180 {offsets = [0, 64], sizes = [3, 64], strides = [1, 1]} : vector<3x192xf32> to vector<3x64xf32>
    %183 = arith.maximumf %181, %182 : vector<3x64xf32>
    %184 = vector.extract_strided_slice %180 {offsets = [0, 128], sizes = [3, 64], strides = [1, 1]} : vector<3x192xf32> to vector<3x64xf32>
    %185 = arith.maximumf %183, %184 : vector<3x64xf32>
    %cst_145 = arith.constant dense<0xFF800000> : vector<64xf32>
    %186 = vector.multi_reduction <maximumf>, %185, %cst_145 [0] : vector<3x64xf32> to vector<64xf32>
    %187 = vector.shape_cast %186 : vector<64xf32> to vector<1x64xf32>
    %c0_146 = arith.constant 0 : index
    %c0_147 = arith.constant 0 : index
    %188 = vector.load %arg14[%c0_146, %c0_147] : memref<1x64xf32, #tpu.memory_space<vmem>>, vector<1x64xf32>
    tpu.vector_store %arg14[%c0_146, %c0_147], %187 {strides = array<i32>} : memref<1x64xf32, #tpu.memory_space<vmem>>, vector<1x64xf32>,
    %c0_148 = arith.constant 0 : index
    %c0_149 = arith.constant 0 : index
    %189 = vector.load %arg14[%c0_148, %c0_149] : memref<1x64xf32, #tpu.memory_space<vmem>>, vector<1x64xf32>
    %c0_150 = arith.constant 0 : index
    %c0_151 = arith.constant 0 : index
    %190 = vector.load %arg8[%c0_150, %c0_151] : memref<64x10xf32, #tpu.memory_space<vmem>>, vector<64x10xf32>
    %cst_152 = arith.constant dense<0.000000e+00> : vector<1x10xf32>
    %191 = tpu.matmul %189, %190, %cst_152 {dimension_numbers = #tpu.dot_dimension_numbers<[1], [0], [0], [1], [0, 0, 1, 1], [], []>} : vector<1x64xf32>, vector<64x10xf32>, vector<1x10xf32> -> vector<1x10xf32>
    %c0_153 = arith.constant 0 : index
    %c0_154 = arith.constant 0 : index
    %192 = vector.load %arg9[%c0_153, %c0_154] : memref<1x10xf32, #tpu.memory_space<vmem>>, vector<1x10xf32>
    %193 = arith.addf %191, %192 : vector<1x10xf32>
    %194 = vector.shape_cast %193 : vector<1x10xf32> to vector<1x1x10xf32>
    %c0_155 = arith.constant 0 : index
    %c0_156 = arith.constant 0 : index
    %c0_157 = arith.constant 0 : index
    %195 = vector.load %arg10[%c0_155, %c0_156, %c0_157] : memref<1x1x10xf32, #tpu.memory_space<vmem>>, vector<1x1x10xf32>
    tpu.vector_store %arg10[%c0_155, %c0_156, %c0_157], %194 {strides = array<i32>} : memref<1x1x10xf32, #tpu.memory_space<vmem>>, vector<1x1x10xf32>,
    return
  }
  func.func @transform_0(%arg0: i32) -> (i32, i32, i32, i32) {
    %c0_i32 = arith.constant 0 : i32
    %c0_i32_0 = arith.constant 0 : i32
    %c0_i32_1 = arith.constant 0 : i32
    %c0_i32_2 = arith.constant 0 : i32
    return %arg0, %c0_i32, %c0_i32_0, %c0_i32_1 : i32, i32, i32, i32
  }
  func.func @transform_1(%arg0: i32) -> (i32, i32, i32) {
    %c0_i32 = arith.constant 0 : i32
    %c0_i32_0 = arith.constant 0 : i32
    %c0_i32_1 = arith.constant 0 : i32
    %c0_i32_2 = arith.constant 0 : i32
    return %c0_i32, %c0_i32_0, %c0_i32_1 : i32, i32, i32
  }
  func.func @transform_2(%arg0: i32) -> (i32, i32) {
    %c0_i32 = arith.constant 0 : i32
    %c0_i32_0 = arith.constant 0 : i32
    %c0_i32_1 = arith.constant 0 : i32
    return %c0_i32, %c0_i32_0 : i32, i32
  }
  func.func @transform_3(%arg0: i32) -> (i32, i32, i32) {
    %c0_i32 = arith.constant 0 : i32
    %c0_i32_0 = arith.constant 0 : i32
    %c0_i32_1 = arith.constant 0 : i32
    %c0_i32_2 = arith.constant 0 : i32
    return %c0_i32, %c0_i32_0, %c0_i32_1 : i32, i32, i32
  }
  func.func @transform_4(%arg0: i32) -> (i32, i32) {
    %c0_i32 = arith.constant 0 : i32
    %c0_i32_0 = arith.constant 0 : i32
    %c0_i32_1 = arith.constant 0 : i32
    return %c0_i32, %c0_i32_0 : i32, i32
  }
  func.func @transform_5(%arg0: i32) -> (i32, i32, i32) {
    %c0_i32 = arith.constant 0 : i32
    %c0_i32_0 = arith.constant 0 : i32
    %c0_i32_1 = arith.constant 0 : i32
    %c0_i32_2 = arith.constant 0 : i32
    return %c0_i32, %c0_i32_0, %c0_i32_1 : i32, i32, i32
  }
  func.func @transform_6(%arg0: i32) -> (i32, i32) {
    %c0_i32 = arith.constant 0 : i32
    %c0_i32_0 = arith.constant 0 : i32
    %c0_i32_1 = arith.constant 0 : i32
    return %c0_i32, %c0_i32_0 : i32, i32
  }
  func.func @transform_7(%arg0: i32) -> (i32, i32) {
    %c0_i32 = arith.constant 0 : i32
    %c0_i32_0 = arith.constant 0 : i32
    %c0_i32_1 = arith.constant 0 : i32
    return %c0_i32, %c0_i32_0 : i32, i32
  }
  func.func @transform_8(%arg0: i32) -> (i32, i32) {
    %c0_i32 = arith.constant 0 : i32
    %c0_i32_0 = arith.constant 0 : i32
    %c0_i32_1 = arith.constant 0 : i32
    return %c0_i32, %c0_i32_0 : i32, i32
  }
  func.func @transform_9(%arg0: i32) -> (i32, i32, i32) {
    %c0_i32 = arith.constant 0 : i32
    %c0_i32_0 = arith.constant 0 : i32
    %c0_i32_1 = arith.constant 0 : i32
    return %arg0, %c0_i32, %c0_i32_0 : i32, i32, i32
  }
}

</mosaic_0001>

<llo_original>
// kernel: tile.18
$region0: #{tile.18}
  #allocation0 [shape = 's32[1]{0}', space=sflag, size = 0x4, scoped, tag = 'scoped memory for tile.18']
  %s0 = inlined_call_operand.vmem [shape: f32[16], index: 0, kind: input, shape index: {}]
  %s1 = inlined_call_operand.vmem [shape: f32[27,16], index: 1, kind: output, shape index: {}]
  // Predicated region
  $region2: #{tile.18} parent=0 // pred_check
    _
  $region3: #{tile.18} parent=0 // pred_check_branch
    %3 = sbr.rel (0) target = $region5
  $region4: #{tile.18} parent=0 // pred_region
    _
  $region5: #{tile.18} parent=0 // pred_fallthru
    _
  %v4 = vld [vmem:[%s0] ss:$0 sm:$0xff]
  %5 = vst [vmem:[%s1] sm:$0xff] %v4
  %s6 = scalar_lea.vmem %s1, 8
  %7 = vst [vmem:[%s6] sm:$0xff] %v4
  %s8 = scalar_lea.vmem %s1, 16
  %9 = vst [vmem:[%s8] sm:$0xff] %v4
  %s10 = scalar_lea.vmem %s1, 24
  %11 = vst [vmem:[%s10] sm:$0xff] %v4

// kernel: tile.19
$region0: #{tile.19}
  %s0 = inlined_call_operand.vmem [shape: f32[27,16], index: 0, kind: input, shape index: {}]
  %s1 = inlined_call_operand.vmem [shape: f32[1,432], index: 1, kind: output, shape index: {}]
  $region1: #{tile.19} parent=0
    #allocation0 [shape = 'u8[16384]{0}', space=vmem, size = 0x4000, scoped, tag = 'scoped mem for output reshape']
    %v2 = vld [vmem:[%s0] ss:$8 sm:$0xf]
    %vm3 = vcmask 130048
    %4 = vst.msk [vmem:[#allocation0] ss:$8 sm:$0xf] %vm3, %v2
    %s5 = scalar_lea.vmem %s0, 7
    %v6 = vld [vmem:[%s5] ss:$8 sm:$0x7]
    %7 = vrot.lane.b32.xlu0 %v6, 112
    %v8 = vpop.permute.xlu0 %7
    %vm9 = vcmask 1048448
    %10 = vst.msk [vmem:[#allocation0] ss:$8 sm:$0x7] %vm9, %v8
    %s11 = scalar_lea.vmem %s0, 6
    %v12 = vld [vmem:[%s11] ss:$8 sm:$0x7]
    %13 = vrot.lane.b32.xlu0 %v12, 96
    %v14 = vpop.permute.xlu0 %13
    %vm15 = vcmask 917248
    %16 = vst.msk [vmem:[#allocation0] ss:$8 sm:$0x7] %vm15, %v14
    %s17 = scalar_lea.vmem %s0, 5
    %v18 = vld [vmem:[%s17] ss:$8 sm:$0x7]
    %19 = vrot.lane.b32.xlu0 %v18, 80
    %v20 = vpop.permute.xlu0 %19
    %vm21 = vcmask 786048
    %22 = vst.msk [vmem:[#allocation0] ss:$8 sm:$0x7] %vm21, %v20
    %s23 = scalar_lea.vmem %s0, 4
    %v24 = vld [vmem:[%s23] ss:$8 sm:$0x7]
    %25 = vrot.lane.b32.xlu0 %v24, 64
    %v26 = vpop.permute.xlu0 %25
    %vm27 = vcmask 654848
    %28 = vst.msk [vmem:[#allocation0] ss:$8 sm:$0x7] %vm27, %v26
    %s29 = scalar_lea.vmem %s0, 3
    %v30 = vld [vmem:[%s29] ss:$8 sm:$0x7]
    %31 = vrot.lane.b32.xlu0 %v30, 48
    %v32 = vpop.permute.xlu0 %31
    %vm33 = vcmask 523648
    %34 = vst.msk [vmem:[#allocation0] ss:$8 sm:$0x7] %vm33, %v32
    %s35 = scalar_lea.vmem %s0, 2
    %v36 = vld [vmem:[%s35] ss:$8 sm:$0xf]
    %37 = vrot.lane.b32.xlu0 %v36, 32
    %v38 = vpop.permute.xlu0 %37
    %vm39 = vcmask 392448
    %40 = vst.msk [vmem:[#allocation0] ss:$8 sm:$0xf] %vm39, %v38
    %s41 = scalar_lea.vmem %s0, 1
    %v42 = vld [vmem:[%s41] ss:$8 sm:$0xf]
    %43 = vrot.lane.b32.xlu0 %v42, 16
    %v44 = vpop.permute.xlu0 %43
    %vm45 = vcmask 261248
    %46 = vst.msk [vmem:[#allocation0] ss:$8 sm:$0xf] %vm45, %v44
    %s48 = ssub.s32 2, 1
    %v49 = vld [vmem:[#allocation0] sm:%s48]
    %s51 = ssub.s32 2, 1
    %52 = vst [vmem:[%s1] sm:%s51] %v49
    %s53 = scalar_lea.vmem [#allocation0], 8
    %v54 = vld [vmem:[%s53] sm:%s48]
    %s56 = ssub.s32 2, 1
    %s57 = scalar_lea.vmem %s1, 1
    %58 = vst [vmem:[%s57] sm:%s56] %v54
    %s59 = scalar_lea.vmem [#allocation0], 16
    %v60 = vld [vmem:[%s59] sm:%s48]
    %s62 = ssub.s32 2, 1
    %s63 = scalar_lea.vmem %s1, 2
    %64 = vst [vmem:[%s63] sm:%s62] %v60
    %s65 = scalar_lea.vmem [#allocation0], 24
    %v66 = vld [vmem:[%s65] sm:%s48]
    %s68 = ssub.s32 2, 1
    %s69 = scalar_lea.vmem %s1, 3
    %70 = vst [vmem:[%s69] sm:%s68] %v66

// kernel: tile.23
$region0: #{tile.23}
  #allocation0 [shape = 's32[1]{0}', space=sflag, size = 0x4, scoped, tag = 'scoped memory for tile.23']
  %s0 = inlined_call_operand.vmem [shape: f32[32], index: 0, kind: input, shape index: {}]
  %s1 = inlined_call_operand.vmem [shape: f32[9,32], index: 1, kind: output, shape index: {}]
  // Predicated region
  $region2: #{tile.23} parent=0 // pred_check
    _
  $region3: #{tile.23} parent=0 // pred_check_branch
    %3 = sbr.rel (0) target = $region5
  $region4: #{tile.23} parent=0 // pred_region
    _
  $region5: #{tile.23} parent=0 // pred_fallthru
    _
  %v4 = vld [vmem:[%s0] ss:$0 sm:$0xff]
  %5 = vst [vmem:[%s1] sm:$0xff] %v4
  %s6 = scalar_lea.vmem %s1, 8
  %7 = vst [vmem:[%s6] sm:$0xff] %v4

// kernel: tile.24
$region0: #{tile.24}
  %s0 = inlined_call_operand.vmem [shape: f32[9,32], index: 0, kind: input, shape index: {}]
  %s1 = inlined_call_operand.vmem [shape: f32[1,288], index: 1, kind: output, shape index: {}]
  $region1: #{tile.24} parent=0
    #allocation0 [shape = 'u8[12288]{0}', space=vmem, size = 0x3000, scoped, tag = 'scoped mem for output reshape']
    %v2 = vld [vmem:[%s0] ss:$4 sm:$0x7]
    %vm3 = vcmask 261120
    %4 = vst.msk [vmem:[#allocation0] ss:$8 sm:$0x7] %vm3, %v2
    %s5 = scalar_lea.vmem %s0, 3
    %s6 = smov 3
    %v7 = vld [vmem:[%s5] ss:$4 sm:%s6]
    %8 = vrot.lane.b32.xlu0 %v7, 96
    %v9 = vpop.permute.xlu0 %8
    %vm10 = vcmask 1048320
    %11 = vst.msk [vmem:[#allocation0] ss:$8 sm:$0x3] %vm10, %v9
    %s12 = scalar_lea.vmem %s0, 2
    %s13 = smov 3
    %v14 = vld [vmem:[%s12] ss:$4 sm:%s13]
    %15 = vrot.lane.b32.xlu0 %v14, 64
    %v16 = vpop.permute.xlu0 %15
    %vm17 = vcmask 785920
    %18 = vst.msk [vmem:[#allocation0] ss:$8 sm:$0x3] %vm17, %v16
    %s19 = scalar_lea.vmem %s0, 1
    %s20 = smov 3
    %v21 = vld [vmem:[%s19] ss:$4 sm:%s20]
    %22 = vrot.lane.b32.xlu0 %v21, 32
    %v23 = vpop.permute.xlu0 %22
    %vm24 = vcmask 523520
    %25 = vst.msk [vmem:[#allocation0] ss:$8 sm:$0x3] %vm24, %v23
    %s27 = ssub.s32 2, 1
    %v28 = vld [vmem:[#allocation0] sm:%s27]
    %s30 = ssub.s32 2, 1
    %31 = vst [vmem:[%s1] sm:%s30] %v28
    %s32 = scalar_lea.vmem [#allocation0], 8
    %v33 = vld [vmem:[%s32] sm:%s27]
    %s35 = ssub.s32 2, 1
    %s36 = scalar_lea.vmem %s1, 1
    %37 = vst [vmem:[%s36] sm:%s35] %v33
    %s38 = scalar_lea.vmem [#allocation0], 16
    %v39 = vld [vmem:[%s38] sm:%s27]
    %s41 = ssub.s32 2, 1
    %s42 = scalar_lea.vmem %s1, 2
    %43 = vst [vmem:[%s42] sm:%s41] %v39

// kernel: tile.28
$region0: #{tile.28}
  #allocation0 [shape = 's32[1]{0}', space=sflag, size = 0x4, scoped, tag = 'scoped memory for tile.28']
  %s0 = inlined_call_operand.vmem [shape: f32[64], index: 0, kind: input, shape index: {}]
  %s1 = inlined_call_operand.vmem [shape: f32[3,64], index: 1, kind: output, shape index: {}]
  // Predicated region
  $region2: #{tile.28} parent=0 // pred_check
    _
  $region3: #{tile.28} parent=0 // pred_check_branch
    %3 = sbr.rel (0) target = $region5
  $region4: #{tile.28} parent=0 // pred_region
    _
  $region5: #{tile.28} parent=0 // pred_fallthru
    _
  %v4 = vld [vmem:[%s0] ss:$0 sm:$0xff]
  %5 = vst [vmem:[%s1] sm:$0xf] %v4

// kernel: tile.29
$region0: #{tile.29}
  %s0 = inlined_call_operand.vmem [shape: f32[3,64], index: 0, kind: input, shape index: {}]
  %s1 = inlined_call_operand.vmem [shape: f32[1,192], index: 1, kind: output, shape index: {}]
  $region1: #{tile.29} parent=0
    #allocation0 [shape = 'u8[8192]{0}', space=vmem, size = 0x2000, scoped, tag = 'scoped mem for output reshape']
    #allocation1 [shape = 'u8[4096]{0}', space=vmem, size = 0x1000, scoped, tag = 'scoped mem for input reshape']
    %s3 = ssub.s32 16, 1
    %v4 = vld [vmem:[%s0] sm:%s3]
    %5 = vst [vmem:[#allocation1] sm:%s3] %v4
    %s6 = smov 3
    %v7 = vld [vmem:[#allocation1] ss:$2 sm:%s6]
    %vm8 = vcmask 523264
    %9 = vst.msk [vmem:[#allocation0] ss:$8 sm:$0x3] %vm8, %v7
    %s10 = scalar_lea.vmem [#allocation1], 1
    %v11 = vld [vmem:[%s10] sm:$0x1]
    %12 = vrot.lane.b32.xlu0 %v11, 64
    %v13 = vpop.permute.xlu0 %12
    %vm14 = vcmask 1048064
    %15 = vst.msk [vmem:[#allocation0] sm:$0x1] %vm14, %v13
    %s17 = ssub.s32 2, 1
    %v18 = vld [vmem:[#allocation0] sm:%s17]
    %s20 = ssub.s32 2, 1
    %21 = vst [vmem:[%s1] sm:%s20] %v18
    %s22 = scalar_lea.vmem [#allocation0], 8
    %v23 = vld [vmem:[%s22] sm:%s17]
    %s25 = ssub.s32 2, 1
    %s26 = scalar_lea.vmem %s1, 1
    %27 = vst [vmem:[%s26] sm:%s25] %v23

// kernel: cnn_forward.1
$region0: #{cnn_forward.1}
  #allocation0 [shape = 'u32[]', space=smem, size = 0x4, offset = 0x4, fixed_abs, tag = 'smem constant byte address 0x4 - core index']
  #allocation1 [shape = 'u32[72,128]{1,0:T(1,128)}', space=vmem, size = 0x9000, scoped, tag = 'internal scratch']
  #allocation2 [shape = 'f32[32,32]{1,0:T(8,128)}', space=vmem, size = 0x4000, scoped, tag = 'scratch operand']
  #allocation3 [shape = 'f32[13,208]{1,0:T(8,128)}', space=vmem, size = 0x4000, scoped, tag = 'scratch operand']
  #allocation4 [shape = 'f32[7,224]{1,0:T(8,128)}', space=vmem, size = 0x2000, scoped, tag = 'scratch operand']
  #allocation5 [shape = 'f32[1,64]{1,0:T(1,128)}', space=vmem, size = 0x200, scoped, tag = 'scratch operand']
  %s0 = inlined_call_operand.vmem [shape: f32[2,1,28,28], index: 0, kind: input, shape index: {}]
  %s1 = inlined_call_operand.vmem [shape: bf16[6,32,432], index: 1, kind: input, shape index: {}]
  %s2 = inlined_call_operand.vmem [shape: f32[1,432], index: 2, kind: input, shape index: {}]
  %s3 = inlined_call_operand.vmem [shape: bf16[5,208,288], index: 3, kind: input, shape index: {}]
  %s4 = inlined_call_operand.vmem [shape: f32[1,288], index: 4, kind: input, shape index: {}]
  %s5 = inlined_call_operand.vmem [shape: bf16[5,224,192], index: 5, kind: input, shape index: {}]
  %s6 = inlined_call_operand.vmem [shape: f32[1,192], index: 6, kind: input, shape index: {}]
  %s7 = inlined_call_operand.vmem [shape: f32[64,10], index: 7, kind: input, shape index: {}]
  %s8 = inlined_call_operand.vmem [shape: f32[1,10], index: 8, kind: input, shape index: {}]
  %s9 = inlined_call_operand.hbm [shape: f32[2,1,10], index: 9, kind: output, shape index: {}]
  %s10 = sld [smem:[#allocation0]]
  $region69: #{cnn_forward.1} parent=0
    _
  %s12 = ssub.s32 1, %s10
  %s13 = scalar_select 0, %s12, %s10
  $region1: #{cnn_forward.1} parent=0
    #allocation6 [shape = 'u8[1024]{0}', space=vmem, size = 0x400, scoped, tag = 'output window, operand 0']
    #allocation7 [shape = 's32[2]{0}', space=sflag, size = 0x8, scoped, tag = 'scoped memory for cnn_forward.1']
    %14 = vsyncpa [#allocation7], 0
    %s15 = scalar_lea.sflag [#allocation7], 1
    %16 = vsyncpa %s15, 0
    loop: start=0, step=1, limit=4
    $region2: #{cnn_forward.1} parent=1 // loop_pre_header
      _
    $region3: #{cnn_forward.1} parent=1 // loop_header
      %s18 = sphi 0, %s22
      %p19 = scmp.ge.s32.totalorder %s18, 4
      %s28 = sphi 0, %s30
      %s31 = sphi 0, %s28
      %s32 = sphi 0, %s31
      %s48 = sphi 0, %s32
      %s52 = sphi 0, %s52
      %s54 = sphi 0, %s52
      %s55 = sphi 0, %s54
      %s69 = sphi 0, %s55
      %s73 = sphi 0, %s73
      %s75 = sphi 0, %s73
      %s76 = sphi 0, %s75
      %s90 = sphi 0, %s76
      %s94 = sphi 0, %s94
      %s96 = sphi 0, %s94
      %s97 = sphi 0, %s96
      %s111 = sphi 0, %s97
      %s115 = sphi 0, %s115
      %s117 = sphi 0, %s115
      %s118 = sphi 0, %s117
      %s132 = sphi 0, %s118
      %s136 = sphi 0, %s136
      %s138 = sphi 0, %s136
      %s139 = sphi 0, %s138
      %s153 = sphi 0, %s139
      %s157 = sphi 0, %s157
      %s159 = sphi 0, %s157
      %s160 = sphi 0, %s159
      %s174 = sphi 0, %s160
      %s178 = sphi 0, %s178
      %s180 = sphi 0, %s178
      %s181 = sphi 0, %s180
      %s195 = sphi 0, %s181
      %s199 = sphi 0, %s199
      %s201 = sphi 0, %s199
      %s202 = sphi 0, %s201
      %s216 = sphi 0, %s202
      %s222 = sphi 0, %s224
      %s225 = sphi 0, %s222
      %s226 = sphi 0, %s225
      %s242 = sphi 0, %s226
    $region4: #{cnn_forward.1} parent=1 // loop_header_branch
      %21 = sbr.rel (%p19) target = $region8
    $region5: #{cnn_forward.1} parent=1 // loop_body
      %s23 = ssub.s32 %s18, 1
      %s24 = ssub.s32 %s18, 2
      %s25 = sadd.s32 %s18, 1
      %s26 = ssub.s32 %s18, %s25
      %p27 = scmp.eq.s32.totalorder %s26, 0
      %s29 = sadd.s32 %s28, 1
      %s30 = scalar_select %p27, %s28, %s29
      %p33 = pneg %p27
      %p34 = scmp.eq.s32.totalorder %s18, 1
      %p35 = por %p33, %p34
      %p36 = scmp.ne.s32.totalorder %s28, %s31
      %p37 = scmp.eq.s32.totalorder %s18, 0
      %p38 = por %p36, %p37
      %p39 = scmp.ne.s32.totalorder %s28, %s31
      %p40 = scmp.eq.s32.totalorder %s23, 1
      %p41 = por %p39, %p40
      %p42 = scmp.ne.s32.totalorder %s31, %s32
      %p43 = scmp.eq.s32.totalorder %s23, 0
      %p44 = por %p42, %p43
      %p45 = scmp.ne.s32.totalorder %s31, %s32
      %p46 = scmp.eq.s32.totalorder %s24, 1
      %p47 = por %p45, %p46
      %p49 = scmp.ne.s32.totalorder %s32, %s48
      %p50 = scmp.eq.s32.totalorder %s24, 0
      %p51 = por %p49, %p50
      %s53 = sadd.s32 %s52, 1
      %p56 = scmp.eq.s32.totalorder %s18, 1
      %p57 = scmp.ne.s32.totalorder %s52, %s54
      %p58 = scmp.eq.s32.totalorder %s18, 0
      %p59 = por %p57, %p58
      %p60 = scmp.ne.s32.totalorder %s52, %s54
      %p61 = scmp.eq.s32.totalorder %s23, 1
      %p62 = por %p60, %p61
      %p63 = scmp.ne.s32.totalorder %s54, %s55
      %p64 = scmp.eq.s32.totalorder %s23, 0
      %p65 = por %p63, %p64
      %p66 = scmp.ne.s32.totalorder %s54, %s55
      %p67 = scmp.eq.s32.totalorder %s24, 1
      %p68 = por %p66, %p67
      %p70 = scmp.ne.s32.totalorder %s55, %s69
      %p71 = scmp.eq.s32.totalorder %s24, 0
      %p72 = por %p70, %p71
      %s74 = sadd.s32 %s73, 1
      %p77 = scmp.eq.s32.totalorder %s18, 1
      %p78 = scmp.ne.s32.totalorder %s73, %s75
      %p79 = scmp.eq.s32.totalorder %s18, 0
      %p80 = por %p78, %p79
      %p81 = scmp.ne.s32.totalorder %s73, %s75
      %p82 = scmp.eq.s32.totalorder %s23, 1
      %p83 = por %p81, %p82
      %p84 = scmp.ne.s32.totalorder %s75, %s76
      %p85 = scmp.eq.s32.totalorder %s23, 0
      %p86 = por %p84, %p85
      %p87 = scmp.ne.s32.totalorder %s75, %s76
      %p88 = scmp.eq.s32.totalorder %s24, 1
      %p89 = por %p87, %p88
      %p91 = scmp.ne.s32.totalorder %s76, %s90
      %p92 = scmp.eq.s32.totalorder %s24, 0
      %p93 = por %p91, %p92
      %s95 = sadd.s32 %s94, 1
      %p98 = scmp.eq.s32.totalorder %s18, 1
      %p99 = scmp.ne.s32.totalorder %s94, %s96
      %p100 = scmp.eq.s32.totalorder %s18, 0
      %p101 = por %p99, %p100
      %p102 = scmp.ne.s32.totalorder %s94, %s96
      %p103 = scmp.eq.s32.totalorder %s23, 1
      %p104 = por %p102, %p103
      %p105 = scmp.ne.s32.totalorder %s96, %s97
      %p106 = scmp.eq.s32.totalorder %s23, 0
      %p107 = por %p105, %p106
      %p108 = scmp.ne.s32.totalorder %s96, %s97
      %p109 = scmp.eq.s32.totalorder %s24, 1
      %p110 = por %p108, %p109
      %p112 = scmp.ne.s32.totalorder %s97, %s111
      %p113 = scmp.eq.s32.totalorder %s24, 0
      %p114 = por %p112, %p113
      %s116 = sadd.s32 %s115, 1
      %p119 = scmp.eq.s32.totalorder %s18, 1
      %p120 = scmp.ne.s32.totalorder %s115, %s117
      %p121 = scmp.eq.s32.totalorder %s18, 0
      %p122 = por %p120, %p121
      %p123 = scmp.ne.s32.totalorder %s115, %s117
      %p124 = scmp.eq.s32.totalorder %s23, 1
      %p125 = por %p123, %p124
      %p126 = scmp.ne.s32.totalorder %s117, %s118
      %p127 = scmp.eq.s32.totalorder %s23, 0
      %p128 = por %p126, %p127
      %p129 = scmp.ne.s32.totalorder %s117, %s118
      %p130 = scmp.eq.s32.totalorder %s24, 1
      %p131 = por %p129, %p130
      %p133 = scmp.ne.s32.totalorder %s118, %s132
      %p134 = scmp.eq.s32.totalorder %s24, 0
      %p135 = por %p133, %p134
      %s137 = sadd.s32 %s136, 1
      %p140 = scmp.eq.s32.totalorder %s18, 1
      %p141 = scmp.ne.s32.totalorder %s136, %s138
      %p142 = scmp.eq.s32.totalorder %s18, 0
      %p143 = por %p141, %p142
      %p144 = scmp.ne.s32.totalorder %s136, %s138
      %p145 = scmp.eq.s32.totalorder %s23, 1
      %p146 = por %p144, %p145
      %p147 = scmp.ne.s32.totalorder %s138, %s139
      %p148 = scmp.eq.s32.totalorder %s23, 0
      %p149 = por %p147, %p148
      %p150 = scmp.ne.s32.totalorder %s138, %s139
      %p151 = scmp.eq.s32.totalorder %s24, 1
      %p152 = por %p150, %p151
      %p154 = scmp.ne.s32.totalorder %s139, %s153
      %p155 = scmp.eq.s32.totalorder %s24, 0
      %p156 = por %p154, %p155
      %s158 = sadd.s32 %s157, 1
      %p161 = scmp.eq.s32.totalorder %s18, 1
      %p162 = scmp.ne.s32.totalorder %s157, %s159
      %p163 = scmp.eq.s32.totalorder %s18, 0
      %p164 = por %p162, %p163
      %p165 = scmp.ne.s32.totalorder %s157, %s159
      %p166 = scmp.eq.s32.totalorder %s23, 1
      %p167 = por %p165, %p166
      %p168 = scmp.ne.s32.totalorder %s159, %s160
      %p169 = scmp.eq.s32.totalorder %s23, 0
      %p170 = por %p168, %p169
      %p171 = scmp.ne.s32.totalorder %s159, %s160
      %p172 = scmp.eq.s32.totalorder %s24, 1
      %p173 = por %p171, %p172
      %p175 = scmp.ne.s32.totalorder %s160, %s174
      %p176 = scmp.eq.s32.totalorder %s24, 0
      %p177 = por %p175, %p176
      %s179 = sadd.s32 %s178, 1
      %p182 = scmp.eq.s32.totalorder %s18, 1
      %p183 = scmp.ne.s32.totalorder %s178, %s180
      %p184 = scmp.eq.s32.totalorder %s18, 0
      %p185 = por %p183, %p184
      %p186 = scmp.ne.s32.totalorder %s178, %s180
      %p187 = scmp.eq.s32.totalorder %s23, 1
      %p188 = por %p186, %p187
      %p189 = scmp.ne.s32.totalorder %s180, %s181
      %p190 = scmp.eq.s32.totalorder %s23, 0
      %p191 = por %p189, %p190
      %p192 = scmp.ne.s32.totalorder %s180, %s181
      %p193 = scmp.eq.s32.totalorder %s24, 1
      %p194 = por %p192, %p193
      %p196 = scmp.ne.s32.totalorder %s181, %s195
      %p197 = scmp.eq.s32.totalorder %s24, 0
      %p198 = por %p196, %p197
      %s200 = sadd.s32 %s199, 1
      %p203 = scmp.eq.s32.totalorder %s18, 1
      %p204 = scmp.ne.s32.totalorder %s199, %s201
      %p205 = scmp.eq.s32.totalorder %s18, 0
      %p206 = por %p204, %p205
      %p207 = scmp.ne.s32.totalorder %s199, %s201
      %p208 = scmp.eq.s32.totalorder %s23, 1
      %p209 = por %p207, %p208
      %p210 = scmp.ne.s32.totalorder %s201, %s202
      %p211 = scmp.eq.s32.totalorder %s23, 0
      %p212 = por %p210, %p211
      %p213 = scmp.ne.s32.totalorder %s201, %s202
      %p214 = scmp.eq.s32.totalorder %s24, 1
      %p215 = por %p213, %p214
      %p217 = scmp.ne.s32.totalorder %s202, %s216
      %p218 = scmp.eq.s32.totalorder %s24, 0
      %p219 = por %p217, %p218
      %s220 = ssub.s32 %s18, %s25
      %p221 = scmp.eq.s32.totalorder %s220, 0
      %s223 = sadd.s32 %s222, 1
      %s224 = scalar_select %p221, %s222, %s223
      %p227 = pneg %p221
      %p228 = scmp.eq.s32.totalorder %s18, 1
      %p229 = por %p227, %p228
      %p230 = scmp.ne.s32.totalorder %s222, %s225
      %p231 = scmp.eq.s32.totalorder %s18, 0
      %p232 = por %p230, %p231
      %p233 = scmp.ne.s32.totalorder %s222, %s225
      %p234 = scmp.eq.s32.totalorder %s23, 1
      %p235 = por %p233, %p234
      %p236 = scmp.ne.s32.totalorder %s225, %s226
      %p237 = scmp.eq.s32.totalorder %s23, 0
      %p238 = por %p236, %p237
      %p239 = scmp.ne.s32.totalorder %s225, %s226
      %p240 = scmp.eq.s32.totalorder %s24, 1
      %p241 = por %p239, %p240
      %p243 = scmp.ne.s32.totalorder %s226, %s242
      %p244 = scmp.eq.s32.totalorder %s24, 0
      %p245 = por %p243, %p244
      %p246 = scmp.le.s32.totalorder 1, %s18
      %p247 = scmp.lt.s32.totalorder %s18, 3
      %p248 = pnand %p246, %p247
      %p249 = pneg %p248
      // Predicated region
      $region9: #{cnn_forward.1} parent=5 // pred_check
        _
      $region10: #{cnn_forward.1} parent=5 // pred_check_branch
        %251 = sbr.rel (%p248) target = $region12
      $region11: #{cnn_forward.1} parent=5 // pred_region
        %s252 = ssub.s32 %s18, 1
        // Predicated region
        $region13: #{cnn_forward.1} parent=11 // pred_check
          %p253 = pneg %p65
        $region14: #{cnn_forward.1} parent=11 // pred_check_branch
          %255 = sbr.rel (%p253) target = $region16
        $region15: #{cnn_forward.1} parent=11 // pred_region
          _
        $region16: #{cnn_forward.1} parent=11 // pred_fallthru
          _
        // Predicated region
        $region17: #{cnn_forward.1} parent=11 // pred_check
          %p256 = pneg %p86
        $region18: #{cnn_forward.1} parent=11 // pred_check_branch
          %258 = sbr.rel (%p256) target = $region20
        $region19: #{cnn_forward.1} parent=11 // pred_region
          _
        $region20: #{cnn_forward.1} parent=11 // pred_fallthru
          _
        // Predicated region
        $region21: #{cnn_forward.1} parent=11 // pred_check
          %p259 = pneg %p107
        $region22: #{cnn_forward.1} parent=11 // pred_check_branch
          %261 = sbr.rel (%p259) target = $region24
        $region23: #{cnn_forward.1} parent=11 // pred_region
          _
        $region24: #{cnn_forward.1} parent=11 // pred_fallthru
          _
        // Predicated region
        $region25: #{cnn_forward.1} parent=11 // pred_check
          %p262 = pneg %p128
        $region26: #{cnn_forward.1} parent=11 // pred_check_branch
          %264 = sbr.rel (%p262) target = $region28
        $region27: #{cnn_forward.1} parent=11 // pred_region
          _
        $region28: #{cnn_forward.1} parent=11 // pred_fallthru
          _
        // Predicated region
        $region29: #{cnn_forward.1} parent=11 // pred_check
          %p265 = pneg %p149
        $region30: #{cnn_forward.1} parent=11 // pred_check_branch
          %267 = sbr.rel (%p265) target = $region32
        $region31: #{cnn_forward.1} parent=11 // pred_region
          _
        $region32: #{cnn_forward.1} parent=11 // pred_fallthru
          _
        // Predicated region
        $region33: #{cnn_forward.1} parent=11 // pred_check
          %p268 = pneg %p170
        $region34: #{cnn_forward.1} parent=11 // pred_check_branch
          %270 = sbr.rel (%p268) target = $region36
        $region35: #{cnn_forward.1} parent=11 // pred_region
          _
        $region36: #{cnn_forward.1} parent=11 // pred_fallthru
          _
        // Predicated region
        $region37: #{cnn_forward.1} parent=11 // pred_check
          %p271 = pneg %p191
        $region38: #{cnn_forward.1} parent=11 // pred_check_branch
          %273 = sbr.rel (%p271) target = $region40
        $region39: #{cnn_forward.1} parent=11 // pred_region
          _
        $region40: #{cnn_forward.1} parent=11 // pred_fallthru
          _
        // Predicated region
        $region41: #{cnn_forward.1} parent=11 // pred_check
          %p274 = pneg %p212
        $region42: #{cnn_forward.1} parent=11 // pred_check_branch
          %276 = sbr.rel (%p274) target = $region44
        $region43: #{cnn_forward.1} parent=11 // pred_region
          _
        $region44: #{cnn_forward.1} parent=11 // pred_fallthru
          _
      $region12: #{cnn_forward.1} parent=5 // pred_fallthru
        _
      %p277 = scmp.lt.s32.totalorder %s18, 2
      // Predicated region
      $region45: #{cnn_forward.1} parent=5 // pred_check
        %p278 = pneg %p277
      $region46: #{cnn_forward.1} parent=5 // pred_check_branch
        %280 = sbr.rel (%p278) target = $region48
      $region47: #{cnn_forward.1} parent=5 // pred_region
        // Predicated region
        $region49: #{cnn_forward.1} parent=47 // pred_check
          %p281 = pneg %p38
        $region50: #{cnn_forward.1} parent=47 // pred_check_branch
          %283 = sbr.rel (%p281) target = $region52
        $region51: #{cnn_forward.1} parent=47 // pred_region
          %p284 = scmp.lt.s32.totalorder %s18, 1
          %s285 = scalar_select %p284, %s18, 1
          %s286 = smul.addr %s285, 4
          %s287 = smul.addr %s286, 8
          %s288 = scalar_lea.vmem %s0, %s287
        $region52: #{cnn_forward.1} parent=47 // pred_fallthru
          _
      $region48: #{cnn_forward.1} parent=5 // pred_fallthru
        _
      %p289 = scmp.le.s32.totalorder 1, %s18
      %p290 = scmp.lt.s32.totalorder %s18, 3
      %p291 = pnand %p289, %p290
      %p292 = pneg %p291
      // Predicated region
      $region53: #{cnn_forward.1} parent=5 // pred_check
        _
      $region54: #{cnn_forward.1} parent=5 // pred_check_branch
        %294 = sbr.rel (%p291) target = $region56
      $region55: #{cnn_forward.1} parent=5 // pred_region
        %s295 = ssub.s32 %s18, 1
        %p296 = scmp.lt.s32.totalorder %s23, 1
        %s297 = scalar_select %p296, %s23, 1
        %s298 = smul.addr %s297, 4
        %s299 = smul.addr %s298, 8
        %s300 = scalar_lea.vmem %s0, %s299
        %p301 = pneg %p44
        %p302 = pneg %p41
        %p303 = pneg %p65
        %p304 = pneg %p62
        %p305 = pneg %p86
        %p306 = pneg %p83
        %p307 = pneg %p107
        %p308 = pneg %p104
        %p309 = pneg %p128
        %p310 = pneg %p125
        %p311 = pneg %p149
        %p312 = pneg %p146
        %p313 = pneg %p170
        %p314 = pneg %p167
        %p315 = pneg %p191
        %p316 = pneg %p188
        %p317 = pneg %p212
        %p318 = pneg %p209
        %p319 = pneg %p238
        %p320 = pneg %p235
        %s321 = sand.u32 %s225, 1
        %s322 = scalar_lea.sflag [#allocation7], %s321
        %s323 = sand.u32 %s225, 1
        %s324 = scalar_lea.vmem [#allocation6], %s323
        %p325 = scmp.lt.s32.totalorder %s23, 1
        %s326 = scalar_select %p325, %s23, 1
        %s327 = smul.addr %s326, 4
        %s328 = smul.addr %s327, 8
        %s329 = scalar_lea.vmem %s0, %s328
        %vm331 = vcmask 261120
        %332 = vst.msk [vmem:[#allocation2] sm:$0xff] %vm331, 0.0
        %333 = vst.msk [vmem:[#allocation2 + $0x8] sm:$0xff] %vm331, 0.0
        %334 = vst.msk [vmem:[#allocation2 + $0x10] sm:$0xff] %vm331, 0.0
        %335 = vst.msk [vmem:[#allocation2 + $0x18] sm:$0xff] %vm331, 0.0
        %336 = vst [vmem:[#allocation3] sm:$0xff] 0.0
        %vm337 = vcmask 654336
        %338 = vst.msk [vmem:[#allocation3 + $0x8] sm:$0xff] %vm337, 0.0
        %339 = vst [vmem:[#allocation3 + $0x10] sm:$0x1f] 0.0
        %vm340 = vcmask 651264
        %341 = vst.msk [vmem:[#allocation3 + $0x18] sm:$0x1f] %vm340, 0.0
        %342 = vst [vmem:[#allocation4] sm:$0x7f] 0.0
        %vm343 = vcmask 784384
        %344 = vst.msk [vmem:[#allocation4 + $0x8] sm:$0x7f] %vm343, 0.0
        %v345 = vld [vmem:[%s329] sm:$0xff]
        %v346 = vld [vmem:[%s329 + $0x8] sm:$0xff]
        %v347 = vld [vmem:[%s329 + $0x10] sm:$0xff]
        %v348 = vld [vmem:[%s329 + $0x18] sm:$0xf]
        %353 = vrot.lane.b32.xlu0 %v345, 2
        %v354 = vpop.permute.xlu0 %353
        %355 = vrot.lane.b32.xlu0 %v346, 2
        %v356 = vpop.permute.xlu0 %355
        %357 = vrot.lane.b32.xlu0 %v347, 2
        %v358 = vpop.permute.xlu0 %357
        %359 = vrot.lane.b32.xlu0 %v348, 2
        %v360 = vpop.permute.xlu0 %359
        %vm365 = vcmask 244752
        %366 = vst.msk [vmem:[#allocation2 + $0x2] sm:$0xff] %vm365, %v354
        %367 = vst.msk [vmem:[#allocation2 + $0xa] sm:$0xff] %vm365, %v356
        %368 = vst.msk [vmem:[#allocation2 + $0x12] sm:$0xff] %vm365, %v358
        %vm369 = vcmask 240656
        %370 = vst.msk [vmem:[#allocation2 + $0x1a] sm:$0xf] %vm369, %v360
        %v371 = vld [vmem:[#allocation2] sm:$0xff]
        %v372 = vld [vmem:[#allocation2 + $0x8] sm:$0xff]
        %v373 = vld [vmem:[#allocation2 + $0x10] sm:$0xff]
        %v374 = vld [vmem:[#allocation2 + $0x18] sm:$0x7]
        %v375 = vpack.c.bf16 %v372, %v371
        %v376 = vpack.c.bf16 %v374, %v373
        %v377 = vld [vmem:[%s1] sm:$0xff]
        %v378 = vld [vmem:[%s1 + $0x8] sm:$0xff]
        %v379 = vld [vmem:[%s1 + $0x10] sm:$0xff]
        %v380 = vld [vmem:[%s1 + $0x18] sm:$0xff]
        %v381 = vld [vmem:[%s1 + $0x20] sm:$0xff]
        %v382 = vld [vmem:[%s1 + $0x28] sm:$0xff]
        %v383 = vld [vmem:[%s1 + $0x30] sm:$0xff]
        %v384 = vld [vmem:[%s1 + $0x38] sm:$0xff]
        %v385 = vld [vmem:[#allocation2 + $0x1] sm:$0xff]
        %v386 = vld [vmem:[#allocation2 + $0x9] sm:$0xff]
        %v387 = vld [vmem:[#allocation2 + $0x11] sm:$0xff]
        %v388 = vld [vmem:[#allocation2 + $0x19] sm:$0x7]
        %v389 = vpack.c.bf16 %v386, %v385
        %v390 = vpack.c.bf16 %v388, %v387
        %s391 = scalar_lea.vmem %s1, 64
        %v392 = vld [vmem:[%s391] sm:$0xff]
        %v393 = vld [vmem:[%s391 + $0x8] sm:$0xff]
        %v394 = vld [vmem:[%s391 + $0x10] sm:$0xff]
        %v395 = vld [vmem:[%s391 + $0x18] sm:$0xff]
        %v396 = vld [vmem:[%s391 + $0x20] sm:$0xff]
        %v397 = vld [vmem:[%s391 + $0x28] sm:$0xff]
        %v398 = vld [vmem:[%s391 + $0x30] sm:$0xff]
        %v399 = vld [vmem:[%s391 + $0x38] sm:$0xff]
        %v408 = vunpack.c.l.b16 %v392
        %v409 = vunpack.c.h.b16 %v392
        %v410 = vunpack.c.l.b16 %v393
        %v411 = vunpack.c.h.b16 %v393
        %v412 = vunpack.c.l.b16 %v394
        %v413 = vunpack.c.h.b16 %v394
        %v414 = vunpack.c.l.b16 %v395
        %v415 = vunpack.c.h.b16 %v395
        %v416 = vunpack.c.l.b16 %v396
        %v417 = vunpack.c.h.b16 %v396
        %v418 = vunpack.c.l.b16 %v397
        %v419 = vunpack.c.h.b16 %v397
        %v420 = vunpack.c.l.b16 %v398
        %v421 = vunpack.c.h.b16 %v398
        %v422 = vunpack.c.l.b16 %v399
        %v423 = vunpack.c.h.b16 %v399
        %v424 = vpack.c.b16 %v412, %v408
        %v425 = vpack.c.b16 %v413, %v409
        %v426 = vpack.c.b16 %v414, %v410
        %v427 = vpack.c.b16 %v415, %v411
        %v428 = vpack.c.b16 %v420, %v416
        %v429 = vpack.c.b16 %v421, %v417
        %v430 = vpack.c.b16 %v422, %v418
        %v431 = vpack.c.b16 %v423, %v419
        %v441 = vsel %vm331, %v389, 0
        %v444 = vsel %vm331, %v390, 0
        %446 = vmatpush.bf16.msra.mxu0 0
        %447 = vmatpush.bf16.msra.mxu0 0
        %448 = vmatpush.bf16.msra.mxu0 0
        %449 = vmatpush.bf16.msra.mxu0 0
        %450 = vmatpush.bf16.msra.mxu0 0
        %451 = vmatpush.bf16.msra.mxu0 0
        %452 = vmatpush.bf16.msra.mxu0 %v428
        %453 = vmatpush.bf16.msra.mxu0 %v424
        %454 = vmatmul.bf16.gmra.mxu0 %v441
        %v455 = vpop.f32.mrf.mxu0
        %v456 = vadd.f32 0.0, %v455
        %v457 = vpop.f32.mrf.mxu0
        %v458 = vadd.f32 0.0, %v457
        %459 = vmatmul.bf16.gmra.mxu0 %v444
        %v460 = vpop.f32.mrf.mxu0
        %v461 = vadd.f32 0.0, %v460
        %v462 = vpop.f32.mrf.mxu0
        %v463 = vadd.f32 0.0, %v462
        %464 = vdwg.mxu0
        %465 = vmatpush.bf16.msra.mxu0 0
        %466 = vmatpush.bf16.msra.mxu0 0
        %467 = vmatpush.bf16.msra.mxu0 0
        %468 = vmatpush.bf16.msra.mxu0 0
        %469 = vmatpush.bf16.msra.mxu0 0
        %470 = vmatpush.bf16.msra.mxu0 0
        %471 = vmatpush.bf16.msra.mxu0 %v429
        %472 = vmatpush.bf16.msra.mxu0 %v425
        %473 = vmatmul.bf16.gmra.mxu0 %v441
        %v474 = vpop.f32.mrf.mxu0
        %v475 = vadd.f32 0.0, %v474
        %v476 = vpop.f32.mrf.mxu0
        %v477 = vadd.f32 0.0, %v476
        %478 = vmatmul.bf16.gmra.mxu0 %v444
        %v479 = vpop.f32.mrf.mxu0
        %v480 = vadd.f32 0.0, %v479
        %v481 = vpop.f32.mrf.mxu0
        %v482 = vadd.f32 0.0, %v481
        %483 = vdwg.mxu0
        %484 = vmatpush.bf16.msra.mxu0 0
        %485 = vmatpush.bf16.msra.mxu0 0
        %486 = vmatpush.bf16.msra.mxu0 0
        %487 = vmatpush.bf16.msra.mxu0 0
        %488 = vmatpush.bf16.msra.mxu0 0
        %489 = vmatpush.bf16.msra.mxu0 0
        %490 = vmatpush.bf16.msra.mxu0 %v430
        %491 = vmatpush.bf16.msra.mxu0 %v426
        %492 = vmatmul.bf16.gmra.mxu0 %v441
        %v493 = vpop.f32.mrf.mxu0
        %v494 = vadd.f32 0.0, %v493
        %v495 = vpop.f32.mrf.mxu0
        %v496 = vadd.f32 0.0, %v495
        %497 = vmatmul.bf16.gmra.mxu0 %v444
        %v498 = vpop.f32.mrf.mxu0
        %v499 = vadd.f32 0.0, %v498
        %v500 = vpop.f32.mrf.mxu0
        %v501 = vadd.f32 0.0, %v500
        %502 = vdwg.mxu0
        %503 = vmatpush.bf16.msra.mxu0 0
        %504 = vmatpush.bf16.msra.mxu0 0
        %505 = vmatpush.bf16.msra.mxu0 0
        %506 = vmatpush.bf16.msra.mxu0 0
        %507 = vmatpush.bf16.msra.mxu0 0
        %508 = vmatpush.bf16.msra.mxu0 0
        %509 = vmatpush.bf16.msra.mxu0 %v431
        %510 = vmatpush.bf16.msra.mxu0 %v427
        %511 = vmatmul.bf16.gmra.mxu0 %v441
        %v512 = vpop.f32.mrf.mxu0
        %v513 = vadd.f32 0.0, %v512
        %v514 = vpop.f32.mrf.mxu0
        %v515 = vadd.f32 0.0, %v514
        %516 = vmatmul.bf16.gmra.mxu0 %v444
        %v517 = vpop.f32.mrf.mxu0
        %v518 = vadd.f32 0.0, %v517
        %v519 = vpop.f32.mrf.mxu0
        %v520 = vadd.f32 0.0, %v519
        %521 = vdwg.mxu0
        %v530 = vunpack.c.l.b16 %v377
        %v531 = vunpack.c.h.b16 %v377
        %v532 = vunpack.c.l.b16 %v378
        %v533 = vunpack.c.h.b16 %v378
        %v534 = vunpack.c.l.b16 %v379
        %v535 = vunpack.c.h.b16 %v379
        %v536 = vunpack.c.l.b16 %v380
        %v537 = vunpack.c.h.b16 %v380
        %v538 = vunpack.c.l.b16 %v381
        %v539 = vunpack.c.h.b16 %v381
        %v540 = vunpack.c.l.b16 %v382
        %v541 = vunpack.c.h.b16 %v382
        %v542 = vunpack.c.l.b16 %v383
        %v543 = vunpack.c.h.b16 %v383
        %v544 = vunpack.c.l.b16 %v384
        %v545 = vunpack.c.h.b16 %v384
        %v546 = vpack.c.b16 %v534, %v530
        %v547 = vpack.c.b16 %v535, %v531
        %v548 = vpack.c.b16 %v536, %v532
        %v549 = vpack.c.b16 %v537, %v533
        %v550 = vpack.c.b16 %v542, %v538
        %v551 = vpack.c.b16 %v543, %v539
        %v552 = vpack.c.b16 %v544, %v540
        %v553 = vpack.c.b16 %v545, %v541
        %v563 = vsel %vm331, %v375, 0
        %v566 = vsel %vm331, %v376, 0
        %568 = vmatpush.bf16.msra.mxu0 0
        %569 = vmatpush.bf16.msra.mxu0 0
        %570 = vmatpush.bf16.msra.mxu0 0
        %571 = vmatpush.bf16.msra.mxu0 0
        %572 = vmatpush.bf16.msra.mxu0 0
        %573 = vmatpush.bf16.msra.mxu0 0
        %574 = vmatpush.bf16.msra.mxu0 %v550
        %575 = vmatpush.bf16.msra.mxu0 %v546
        %576 = vmatmul.bf16.gmra.mxu0 %v563
        %v577 = vpop.f32.mrf.mxu0
        %v578 = vadd.f32 %v456, %v577
        %v579 = vpop.f32.mrf.mxu0
        %v580 = vadd.f32 %v458, %v579
        %581 = vmatmul.bf16.gmra.mxu0 %v566
        %v582 = vpop.f32.mrf.mxu0
        %v583 = vadd.f32 %v461, %v582
        %v584 = vpop.f32.mrf.mxu0
        %v585 = vadd.f32 %v463, %v584
        %586 = vdwg.mxu0
        %587 = vmatpush.bf16.msra.mxu0 0
        %588 = vmatpush.bf16.msra.mxu0 0
        %589 = vmatpush.bf16.msra.mxu0 0
        %590 = vmatpush.bf16.msra.mxu0 0
        %591 = vmatpush.bf16.msra.mxu0 0
        %592 = vmatpush.bf16.msra.mxu0 0
        %593 = vmatpush.bf16.msra.mxu0 %v551
        %594 = vmatpush.bf16.msra.mxu0 %v547
        %595 = vmatmul.bf16.gmra.mxu0 %v563
        %v596 = vpop.f32.mrf.mxu0
        %v597 = vadd.f32 %v475, %v596
        %v598 = vpop.f32.mrf.mxu0
        %v599 = vadd.f32 %v477, %v598
        %600 = vmatmul.bf16.gmra.mxu0 %v566
        %v601 = vpop.f32.mrf.mxu0
        %v602 = vadd.f32 %v480, %v601
        %v603 = vpop.f32.mrf.mxu0
        %v604 = vadd.f32 %v482, %v603
        %605 = vdwg.mxu0
        %606 = vmatpush.bf16.msra.mxu0 0
        %607 = vmatpush.bf16.msra.mxu0 0
        %608 = vmatpush.bf16.msra.mxu0 0
        %609 = vmatpush.bf16.msra.mxu0 0
        %610 = vmatpush.bf16.msra.mxu0 0
        %611 = vmatpush.bf16.msra.mxu0 0
        %612 = vmatpush.bf16.msra.mxu0 %v552
        %613 = vmatpush.bf16.msra.mxu0 %v548
        %614 = vmatmul.bf16.gmra.mxu0 %v563
        %v615 = vpop.f32.mrf.mxu0
        %v616 = vadd.f32 %v494, %v615
        %v617 = vpop.f32.mrf.mxu0
        %v618 = vadd.f32 %v496, %v617
        %619 = vmatmul.bf16.gmra.mxu0 %v566
        %v620 = vpop.f32.mrf.mxu0
        %v621 = vadd.f32 %v499, %v620
        %v622 = vpop.f32.mrf.mxu0
        %v623 = vadd.f32 %v501, %v622
        %624 = vdwg.mxu0
        %625 = vmatpush.bf16.msra.mxu0 0
        %626 = vmatpush.bf16.msra.mxu0 0
        %627 = vmatpush.bf16.msra.mxu0 0
        %628 = vmatpush.bf16.msra.mxu0 0
        %629 = vmatpush.bf16.msra.mxu0 0
        %630 = vmatpush.bf16.msra.mxu0 0
        %631 = vmatpush.bf16.msra.mxu0 %v553
        %632 = vmatpush.bf16.msra.mxu0 %v549
        %633 = vmatmul.bf16.gmra.mxu0 %v563
        %v634 = vpop.f32.mrf.mxu0
        %v635 = vadd.f32 %v513, %v634
        %v636 = vpop.f32.mrf.mxu0
        %v637 = vadd.f32 %v515, %v636
        %638 = vmatmul.bf16.gmra.mxu0 %v566
        %v639 = vpop.f32.mrf.mxu0
        %v640 = vadd.f32 %v518, %v639
        %v641 = vpop.f32.mrf.mxu0
        %v642 = vadd.f32 %v520, %v641
        %643 = vdwg.mxu0
        %v644 = vld [vmem:[#allocation2 + $0x2] sm:$0xff]
        %v645 = vld [vmem:[#allocation2 + $0xa] sm:$0xff]
        %v646 = vld [vmem:[#allocation2 + $0x12] sm:$0xff]
        %v647 = vld [vmem:[#allocation2 + $0x1a] sm:$0x7]
        %v648 = vpack.c.bf16 %v645, %v644
        %v649 = vpack.c.bf16 %v647, %v646
        %s650 = scalar_lea.vmem %s1, 128
        %v651 = vld [vmem:[%s650] sm:$0xff]
        %v652 = vld [vmem:[%s650 + $0x8] sm:$0xff]
        %v653 = vld [vmem:[%s650 + $0x10] sm:$0xff]
        %v654 = vld [vmem:[%s650 + $0x18] sm:$0xff]
        %v655 = vld [vmem:[%s650 + $0x20] sm:$0xff]
        %v656 = vld [vmem:[%s650 + $0x28] sm:$0xff]
        %v657 = vld [vmem:[%s650 + $0x30] sm:$0xff]
        %v658 = vld [vmem:[%s650 + $0x38] sm:$0xff]
        %v667 = vunpack.c.l.b16 %v651
        %v668 = vunpack.c.h.b16 %v651
        %v669 = vunpack.c.l.b16 %v652
        %v670 = vunpack.c.h.b16 %v652
        %v671 = vunpack.c.l.b16 %v653
        %v672 = vunpack.c.h.b16 %v653
        %v673 = vunpack.c.l.b16 %v654
        %v674 = vunpack.c.h.b16 %v654
        %v675 = vunpack.c.l.b16 %v655
        %v676 = vunpack.c.h.b16 %v655
        %v677 = vunpack.c.l.b16 %v656
        %v678 = vunpack.c.h.b16 %v656
        %v679 = vunpack.c.l.b16 %v657
        %v680 = vunpack.c.h.b16 %v657
        %v681 = vunpack.c.l.b16 %v658
        %v682 = vunpack.c.h.b16 %v658
        %v683 = vpack.c.b16 %v671, %v667
        %v684 = vpack.c.b16 %v672, %v668
        %v685 = vpack.c.b16 %v673, %v669
        %v686 = vpack.c.b16 %v674, %v670
        %v687 = vpack.c.b16 %v679, %v675
        %v688 = vpack.c.b16 %v680, %v676
        %v689 = vpack.c.b16 %v681, %v677
        %v690 = vpack.c.b16 %v682, %v678
        %v700 = vsel %vm331, %v648, 0
        %v703 = vsel %vm331, %v649, 0
        %705 = vmatpush.bf16.msra.mxu0 0
        %706 = vmatpush.bf16.msra.mxu0 0
        %707 = vmatpush.bf16.msra.mxu0 0
        %708 = vmatpush.bf16.msra.mxu0 0
        %709 = vmatpush.bf16.msra.mxu0 0
        %710 = vmatpush.bf16.msra.mxu0 0
        %711 = vmatpush.bf16.msra.mxu0 %v687
        %712 = vmatpush.bf16.msra.mxu0 %v683
        %713 = vmatmul.bf16.gmra.mxu0 %v700
        %v714 = vpop.f32.mrf.mxu0
        %v715 = vadd.f32 0.0, %v714
        %v716 = vpop.f32.mrf.mxu0
        %v717 = vadd.f32 0.0, %v716
        %718 = vmatmul.bf16.gmra.mxu0 %v703
        %v719 = vpop.f32.mrf.mxu0
        %v720 = vadd.f32 0.0, %v719
        %v721 = vpop.f32.mrf.mxu0
        %v722 = vadd.f32 0.0, %v721
        %723 = vdwg.mxu0
        %724 = vmatpush.bf16.msra.mxu0 0
        %725 = vmatpush.bf16.msra.mxu0 0
        %726 = vmatpush.bf16.msra.mxu0 0
        %727 = vmatpush.bf16.msra.mxu0 0
        %728 = vmatpush.bf16.msra.mxu0 0
        %729 = vmatpush.bf16.msra.mxu0 0
        %730 = vmatpush.bf16.msra.mxu0 %v688
        %731 = vmatpush.bf16.msra.mxu0 %v684
        %732 = vmatmul.bf16.gmra.mxu0 %v700
        %v733 = vpop.f32.mrf.mxu0
        %v734 = vadd.f32 0.0, %v733
        %v735 = vpop.f32.mrf.mxu0
        %v736 = vadd.f32 0.0, %v735
        %737 = vmatmul.bf16.gmra.mxu0 %v703
        %v738 = vpop.f32.mrf.mxu0
        %v739 = vadd.f32 0.0, %v738
        %v740 = vpop.f32.mrf.mxu0
        %v741 = vadd.f32 0.0, %v740
        %742 = vdwg.mxu0
        %743 = vmatpush.bf16.msra.mxu0 0
        %744 = vmatpush.bf16.msra.mxu0 0
        %745 = vmatpush.bf16.msra.mxu0 0
        %746 = vmatpush.bf16.msra.mxu0 0
        %747 = vmatpush.bf16.msra.mxu0 0
        %748 = vmatpush.bf16.msra.mxu0 0
        %749 = vmatpush.bf16.msra.mxu0 %v689
        %750 = vmatpush.bf16.msra.mxu0 %v685
        %751 = vmatmul.bf16.gmra.mxu0 %v700
        %v752 = vpop.f32.mrf.mxu0
        %v753 = vadd.f32 0.0, %v752
        %v754 = vpop.f32.mrf.mxu0
        %v755 = vadd.f32 0.0, %v754
        %756 = vmatmul.bf16.gmra.mxu0 %v703
        %v757 = vpop.f32.mrf.mxu0
        %v758 = vadd.f32 0.0, %v757
        %v759 = vpop.f32.mrf.mxu0
        %v760 = vadd.f32 0.0, %v759
        %761 = vdwg.mxu0
        %762 = vmatpush.bf16.msra.mxu0 0
        %763 = vmatpush.bf16.msra.mxu0 0
        %764 = vmatpush.bf16.msra.mxu0 0
        %765 = vmatpush.bf16.msra.mxu0 0
        %766 = vmatpush.bf16.msra.mxu0 0
        %767 = vmatpush.bf16.msra.mxu0 0
        %768 = vmatpush.bf16.msra.mxu0 %v690
        %769 = vmatpush.bf16.msra.mxu0 %v686
        %770 = vmatmul.bf16.gmra.mxu0 %v700
        %v771 = vpop.f32.mrf.mxu0
        %v772 = vadd.f32 0.0, %v771
        %v773 = vpop.f32.mrf.mxu0
        %v774 = vadd.f32 0.0, %v773
        %775 = vmatmul.bf16.gmra.mxu0 %v703
        %v776 = vpop.f32.mrf.mxu0
        %v777 = vadd.f32 0.0, %v776
        %v778 = vpop.f32.mrf.mxu0
        %v779 = vadd.f32 0.0, %v778
        %780 = vdwg.mxu0
        %v781 = vadd.f32 %v578, %v715
        %v782 = vadd.f32 %v597, %v734
        %v783 = vadd.f32 %v616, %v753
        %v784 = vadd.f32 %v635, %v772
        %v785 = vadd.f32 %v580, %v717
        %v786 = vadd.f32 %v599, %v736
        %v787 = vadd.f32 %v618, %v755
        %v788 = vadd.f32 %v637, %v774
        %v789 = vadd.f32 %v583, %v720
        %v790 = vadd.f32 %v602, %v739
        %v791 = vadd.f32 %v621, %v758
        %v792 = vadd.f32 %v640, %v777
        %v793 = vadd.f32 %v585, %v722
        %v794 = vadd.f32 %v604, %v741
        %v795 = vadd.f32 %v623, %v760
        %v796 = vadd.f32 %v642, %v779
        %v797 = vld [vmem:[#allocation2 + $0x3] sm:$0xff]
        %v798 = vld [vmem:[#allocation2 + $0xb] sm:$0xff]
        %v799 = vld [vmem:[#allocation2 + $0x13] sm:$0xff]
        %v800 = vld [vmem:[#allocation2 + $0x1b] sm:$0x7]
        %v801 = vpack.c.bf16 %v798, %v797
        %v802 = vpack.c.bf16 %v800, %v799
        %s803 = scalar_lea.vmem %s1, 192
        %v804 = vld [vmem:[%s803] sm:$0xff]
        %v805 = vld [vmem:[%s803 + $0x8] sm:$0xff]
        %v806 = vld [vmem:[%s803 + $0x10] sm:$0xff]
        %v807 = vld [vmem:[%s803 + $0x18] sm:$0xff]
        %v808 = vld [vmem:[%s803 + $0x20] sm:$0xff]
        %v809 = vld [vmem:[%s803 + $0x28] sm:$0xff]
        %v810 = vld [vmem:[%s803 + $0x30] sm:$0xff]
        %v811 = vld [vmem:[%s803 + $0x38] sm:$0xff]
        %v820 = vunpack.c.l.b16 %v804
        %v821 = vunpack.c.h.b16 %v804
        %v822 = vunpack.c.l.b16 %v805
        %v823 = vunpack.c.h.b16 %v805
        %v824 = vunpack.c.l.b16 %v806
        %v825 = vunpack.c.h.b16 %v806
        %v826 = vunpack.c.l.b16 %v807
        %v827 = vunpack.c.h.b16 %v807
        %v828 = vunpack.c.l.b16 %v808
        %v829 = vunpack.c.h.b16 %v808
        %v830 = vunpack.c.l.b16 %v809
        %v831 = vunpack.c.h.b16 %v809
        %v832 = vunpack.c.l.b16 %v810
        %v833 = vunpack.c.h.b16 %v810
        %v834 = vunpack.c.l.b16 %v811
        %v835 = vunpack.c.h.b16 %v811
        %v836 = vpack.c.b16 %v824, %v820
        %v837 = vpack.c.b16 %v825, %v821
        %v838 = vpack.c.b16 %v826, %v822
        %v839 = vpack.c.b16 %v827, %v823
        %v840 = vpack.c.b16 %v832, %v828
        %v841 = vpack.c.b16 %v833, %v829
        %v842 = vpack.c.b16 %v834, %v830
        %v843 = vpack.c.b16 %v835, %v831
        %v853 = vsel %vm331, %v801, 0
        %v856 = vsel %vm331, %v802, 0
        %858 = vmatpush.bf16.msra.mxu0 0
        %859 = vmatpush.bf16.msra.mxu0 0
        %860 = vmatpush.bf16.msra.mxu0 0
        %861 = vmatpush.bf16.msra.mxu0 0
        %862 = vmatpush.bf16.msra.mxu0 0
        %863 = vmatpush.bf16.msra.mxu0 0
        %864 = vmatpush.bf16.msra.mxu0 %v840
        %865 = vmatpush.bf16.msra.mxu0 %v836
        %866 = vmatmul.bf16.gmra.mxu0 %v853
        %v867 = vpop.f32.mrf.mxu0
        %v868 = vadd.f32 0.0, %v867
        %v869 = vpop.f32.mrf.mxu0
        %v870 = vadd.f32 0.0, %v869
        %871 = vmatmul.bf16.gmra.mxu0 %v856
        %v872 = vpop.f32.mrf.mxu0
        %v873 = vadd.f32 0.0, %v872
        %v874 = vpop.f32.mrf.mxu0
        %v875 = vadd.f32 0.0, %v874
        %876 = vdwg.mxu0
        %877 = vmatpush.bf16.msra.mxu0 0
        %878 = vmatpush.bf16.msra.mxu0 0
        %879 = vmatpush.bf16.msra.mxu0 0
        %880 = vmatpush.bf16.msra.mxu0 0
        %881 = vmatpush.bf16.msra.mxu0 0
        %882 = vmatpush.bf16.msra.mxu0 0
        %883 = vmatpush.bf16.msra.mxu0 %v841
        %884 = vmatpush.bf16.msra.mxu0 %v837
        %885 = vmatmul.bf16.gmra.mxu0 %v853
        %v886 = vpop.f32.mrf.mxu0
        %v887 = vadd.f32 0.0, %v886
        %v888 = vpop.f32.mrf.mxu0
        %v889 = vadd.f32 0.0, %v888
        %890 = vmatmul.bf16.gmra.mxu0 %v856
        %v891 = vpop.f32.mrf.mxu0
        %v892 = vadd.f32 0.0, %v891
        %v893 = vpop.f32.mrf.mxu0
        %v894 = vadd.f32 0.0, %v893
        %895 = vdwg.mxu0
        %896 = vmatpush.bf16.msra.mxu0 0
        %897 = vmatpush.bf16.msra.mxu0 0
        %898 = vmatpush.bf16.msra.mxu0 0
        %899 = vmatpush.bf16.msra.mxu0 0
        %900 = vmatpush.bf16.msra.mxu0 0
        %901 = vmatpush.bf16.msra.mxu0 0
        %902 = vmatpush.bf16.msra.mxu0 %v842
        %903 = vmatpush.bf16.msra.mxu0 %v838
        %904 = vmatmul.bf16.gmra.mxu0 %v853
        %v905 = vpop.f32.mrf.mxu0
        %v906 = vadd.f32 0.0, %v905
        %v907 = vpop.f32.mrf.mxu0
        %v908 = vadd.f32 0.0, %v907
        %909 = vmatmul.bf16.gmra.mxu0 %v856
        %v910 = vpop.f32.mrf.mxu0
        %v911 = vadd.f32 0.0, %v910
        %v912 = vpop.f32.mrf.mxu0
        %v913 = vadd.f32 0.0, %v912
        %914 = vdwg.mxu0
        %915 = vmatpush.bf16.msra.mxu0 0
        %916 = vmatpush.bf16.msra.mxu0 0
        %917 = vmatpush.bf16.msra.mxu0 0
        %918 = vmatpush.bf16.msra.mxu0 0
        %919 = vmatpush.bf16.msra.mxu0 0
        %920 = vmatpush.bf16.msra.mxu0 0
        %921 = vmatpush.bf16.msra.mxu0 %v843
        %922 = vmatpush.bf16.msra.mxu0 %v839
        %923 = vmatmul.bf16.gmra.mxu0 %v853
        %v924 = vpop.f32.mrf.mxu0
        %v925 = vadd.f32 0.0, %v924
        %v926 = vpop.f32.mrf.mxu0
        %v927 = vadd.f32 0.0, %v926
        %928 = vmatmul.bf16.gmra.mxu0 %v856
        %v929 = vpop.f32.mrf.mxu0
        %v930 = vadd.f32 0.0, %v929
        %v931 = vpop.f32.mrf.mxu0
        %v932 = vadd.f32 0.0, %v931
        %933 = vdwg.mxu0
        %v934 = vadd.f32 %v781, %v868
        %v935 = vadd.f32 %v782, %v887
        %v936 = vadd.f32 %v783, %v906
        %v937 = vadd.f32 %v784, %v925
        %v938 = vadd.f32 %v785, %v870
        %v939 = vadd.f32 %v786, %v889
        %v940 = vadd.f32 %v787, %v908
        %v941 = vadd.f32 %v788, %v927
        %v942 = vadd.f32 %v789, %v873
        %v943 = vadd.f32 %v790, %v892
        %v944 = vadd.f32 %v791, %v911
        %v945 = vadd.f32 %v792, %v930
        %v946 = vadd.f32 %v793, %v875
        %v947 = vadd.f32 %v794, %v894
        %v948 = vadd.f32 %v795, %v913
        %v949 = vadd.f32 %v796, %v932
        %v950 = vld [vmem:[#allocation2 + $0x4] sm:$0xff]
        %v951 = vld [vmem:[#allocation2 + $0xc] sm:$0xff]
        %v952 = vld [vmem:[#allocation2 + $0x14] sm:$0xff]
        %v953 = vld [vmem:[#allocation2 + $0x1c] sm:$0x7]
        %v954 = vpack.c.bf16 %v951, %v950
        %v955 = vpack.c.bf16 %v953, %v952
        %s956 = scalar_lea.vmem %s1, 256
        %v957 = vld [vmem:[%s956] sm:$0xff]
        %v958 = vld [vmem:[%s956 + $0x8] sm:$0xff]
        %v959 = vld [vmem:[%s956 + $0x10] sm:$0xff]
        %v960 = vld [vmem:[%s956 + $0x18] sm:$0xff]
        %v961 = vld [vmem:[%s956 + $0x20] sm:$0xff]
        %v962 = vld [vmem:[%s956 + $0x28] sm:$0xff]
        %v963 = vld [vmem:[%s956 + $0x30] sm:$0xff]
        %v964 = vld [vmem:[%s956 + $0x38] sm:$0xff]
        %v973 = vunpack.c.l.b16 %v957
        %v974 = vunpack.c.h.b16 %v957
        %v975 = vunpack.c.l.b16 %v958
        %v976 = vunpack.c.h.b16 %v958
        %v977 = vunpack.c.l.b16 %v959
        %v978 = vunpack.c.h.b16 %v959
        %v979 = vunpack.c.l.b16 %v960
        %v980 = vunpack.c.h.b16 %v960
        %v981 = vunpack.c.l.b16 %v961
        %v982 = vunpack.c.h.b16 %v961
        %v983 = vunpack.c.l.b16 %v962
        %v984 = vunpack.c.h.b16 %v962
        %v985 = vunpack.c.l.b16 %v963
        %v986 = vunpack.c.h.b16 %v963
        %v987 = vunpack.c.l.b16 %v964
        %v988 = vunpack.c.h.b16 %v964
        %v989 = vpack.c.b16 %v977, %v973
        %v990 = vpack.c.b16 %v978, %v974
        %v991 = vpack.c.b16 %v979, %v975
        %v992 = vpack.c.b16 %v980, %v976
        %v993 = vpack.c.b16 %v985, %v981
        %v994 = vpack.c.b16 %v986, %v982
        %v995 = vpack.c.b16 %v987, %v983
        %v996 = vpack.c.b16 %v988, %v984
        %v1006 = vsel %vm331, %v954, 0
        %v1009 = vsel %vm331, %v955, 0
        %1011 = vmatpush.bf16.msra.mxu0 0
        %1012 = vmatpush.bf16.msra.mxu0 0
        %1013 = vmatpush.bf16.msra.mxu0 0
        %1014 = vmatpush.bf16.msra.mxu0 0
        %1015 = vmatpush.bf16.msra.mxu0 0
        %1016 = vmatpush.bf16.msra.mxu0 0
        %1017 = vmatpush.bf16.msra.mxu0 %v993
        %1018 = vmatpush.bf16.msra.mxu0 %v989
        %1019 = vmatmul.bf16.gmra.mxu0 %v1006
        %v1020 = vpop.f32.mrf.mxu0
        %v1021 = vadd.f32 0.0, %v1020
        %v1022 = vpop.f32.mrf.mxu0
        %v1023 = vadd.f32 0.0, %v1022
        %1024 = vmatmul.bf16.gmra.mxu0 %v1009
        %v1025 = vpop.f32.mrf.mxu0
        %v1026 = vadd.f32 0.0, %v1025
        %v1027 = vpop.f32.mrf.mxu0
        %v1028 = vadd.f32 0.0, %v1027
        %1029 = vdwg.mxu0
        %1030 = vmatpush.bf16.msra.mxu0 0
        %1031 = vmatpush.bf16.msra.mxu0 0
        %1032 = vmatpush.bf16.msra.mxu0 0
        %1033 = vmatpush.bf16.msra.mxu0 0
        %1034 = vmatpush.bf16.msra.mxu0 0
        %1035 = vmatpush.bf16.msra.mxu0 0
        %1036 = vmatpush.bf16.msra.mxu0 %v994
        %1037 = vmatpush.bf16.msra.mxu0 %v990
        %1038 = vmatmul.bf16.gmra.mxu0 %v1006
        %v1039 = vpop.f32.mrf.mxu0
        %v1040 = vadd.f32 0.0, %v1039
        %v1041 = vpop.f32.mrf.mxu0
        %v1042 = vadd.f32 0.0, %v1041
        %1043 = vmatmul.bf16.gmra.mxu0 %v1009
        %v1044 = vpop.f32.mrf.mxu0
        %v1045 = vadd.f32 0.0, %v1044
        %v1046 = vpop.f32.mrf.mxu0
        %v1047 = vadd.f32 0.0, %v1046
        %1048 = vdwg.mxu0
        %1049 = vmatpush.bf16.msra.mxu0 0
        %1050 = vmatpush.bf16.msra.mxu0 0
        %1051 = vmatpush.bf16.msra.mxu0 0
        %1052 = vmatpush.bf16.msra.mxu0 0
        %1053 = vmatpush.bf16.msra.mxu0 0
        %1054 = vmatpush.bf16.msra.mxu0 0
        %1055 = vmatpush.bf16.msra.mxu0 %v995
        %1056 = vmatpush.bf16.msra.mxu0 %v991
        %1057 = vmatmul.bf16.gmra.mxu0 %v1006
        %v1058 = vpop.f32.mrf.mxu0
        %v1059 = vadd.f32 0.0, %v1058
        %v1060 = vpop.f32.mrf.mxu0
        %v1061 = vadd.f32 0.0, %v1060
        %1062 = vmatmul.bf16.gmra.mxu0 %v1009
        %v1063 = vpop.f32.mrf.mxu0
        %v1064 = vadd.f32 0.0, %v1063
        %v1065 = vpop.f32.mrf.mxu0
        %v1066 = vadd.f32 0.0, %v1065
        %1067 = vdwg.mxu0
        %1068 = vmatpush.bf16.msra.mxu0 0
        %1069 = vmatpush.bf16.msra.mxu0 0
        %1070 = vmatpush.bf16.msra.mxu0 0
        %1071 = vmatpush.bf16.msra.mxu0 0
        %1072 = vmatpush.bf16.msra.mxu0 0
        %1073 = vmatpush.bf16.msra.mxu0 0
        %1074 = vmatpush.bf16.msra.mxu0 %v996
        %1075 = vmatpush.bf16.msra.mxu0 %v992
        %1076 = vmatmul.bf16.gmra.mxu0 %v1006
        %v1077 = vpop.f32.mrf.mxu0
        %v1078 = vadd.f32 0.0, %v1077
        %v1079 = vpop.f32.mrf.mxu0
        %v1080 = vadd.f32 0.0, %v1079
        %1081 = vmatmul.bf16.gmra.mxu0 %v1009
        %v1082 = vpop.f32.mrf.mxu0
        %v1083 = vadd.f32 0.0, %v1082
        %v1084 = vpop.f32.mrf.mxu0
        %v1085 = vadd.f32 0.0, %v1084
        %1086 = vdwg.mxu0
        %v1087 = vadd.f32 %v934, %v1021
        %v1088 = vadd.f32 %v935, %v1040
        %v1089 = vadd.f32 %v936, %v1059
        %v1090 = vadd.f32 %v937, %v1078
        %v1091 = vadd.f32 %v938, %v1023
        %v1092 = vadd.f32 %v939, %v1042
        %v1093 = vadd.f32 %v940, %v1061
        %v1094 = vadd.f32 %v941, %v1080
        %v1095 = vadd.f32 %v942, %v1026
        %v1096 = vadd.f32 %v943, %v1045
        %v1097 = vadd.f32 %v944, %v1064
        %v1098 = vadd.f32 %v945, %v1083
        %v1099 = vadd.f32 %v946, %v1028
        %v1100 = vadd.f32 %v947, %v1047
        %v1101 = vadd.f32 %v948, %v1066
        %v1102 = vadd.f32 %v949, %v1085
        %v1103 = vld [vmem:[#allocation2 + $0x5] sm:$0xff]
        %v1104 = vld [vmem:[#allocation2 + $0xd] sm:$0xff]
        %v1105 = vld [vmem:[#allocation2 + $0x15] sm:$0xff]
        %v1106 = vld [vmem:[#allocation2 + $0x1d] sm:$0x7]
        %v1107 = vpack.c.bf16 %v1104, %v1103
        %v1108 = vpack.c.bf16 %v1106, %v1105
        %s1109 = scalar_lea.vmem %s1, 320
        %v1110 = vld [vmem:[%s1109] sm:$0xff]
        %v1111 = vld [vmem:[%s1109 + $0x8] sm:$0xff]
        %v1112 = vld [vmem:[%s1109 + $0x10] sm:$0xff]
        %v1113 = vld [vmem:[%s1109 + $0x18] sm:$0xff]
        %v1114 = vld [vmem:[%s1109 + $0x20] sm:$0xff]
        %v1115 = vld [vmem:[%s1109 + $0x28] sm:$0xff]
        %v1116 = vld [vmem:[%s1109 + $0x30] sm:$0xff]
        %v1117 = vld [vmem:[%s1109 + $0x38] sm:$0xff]
        %v1126 = vunpack.c.l.b16 %v1110
        %v1127 = vunpack.c.h.b16 %v1110
        %v1128 = vunpack.c.l.b16 %v1111
        %v1129 = vunpack.c.h.b16 %v1111
        %v1130 = vunpack.c.l.b16 %v1112
        %v1131 = vunpack.c.h.b16 %v1112
        %v1132 = vunpack.c.l.b16 %v1113
        %v1133 = vunpack.c.h.b16 %v1113
        %v1134 = vunpack.c.l.b16 %v1114
        %v1135 = vunpack.c.h.b16 %v1114
        %v1136 = vunpack.c.l.b16 %v1115
        %v1137 = vunpack.c.h.b16 %v1115
        %v1138 = vunpack.c.l.b16 %v1116
        %v1139 = vunpack.c.h.b16 %v1116
        %v1140 = vunpack.c.l.b16 %v1117
        %v1141 = vunpack.c.h.b16 %v1117
        %v1142 = vpack.c.b16 %v1130, %v1126
        %v1143 = vpack.c.b16 %v1131, %v1127
        %v1144 = vpack.c.b16 %v1132, %v1128
        %v1145 = vpack.c.b16 %v1133, %v1129
        %v1146 = vpack.c.b16 %v1138, %v1134
        %v1147 = vpack.c.b16 %v1139, %v1135
        %v1148 = vpack.c.b16 %v1140, %v1136
        %v1149 = vpack.c.b16 %v1141, %v1137
        %v1159 = vsel %vm331, %v1107, 0
        %v1162 = vsel %vm331, %v1108, 0
        %1164 = vmatpush.bf16.msra.mxu0 0
        %1165 = vmatpush.bf16.msra.mxu0 0
        %1166 = vmatpush.bf16.msra.mxu0 0
        %1167 = vmatpush.bf16.msra.mxu0 0
        %1168 = vmatpush.bf16.msra.mxu0 0
        %1169 = vmatpush.bf16.msra.mxu0 0
        %1170 = vmatpush.bf16.msra.mxu0 %v1146
        %1171 = vmatpush.bf16.msra.mxu0 %v1142
        %1172 = vmatmul.bf16.gmra.mxu0 %v1159
        %v1173 = vpop.f32.mrf.mxu0
        %v1174 = vadd.f32 0.0, %v1173
        %v1175 = vpop.f32.mrf.mxu0
        %v1176 = vadd.f32 0.0, %v1175
        %1177 = vmatmul.bf16.gmra.mxu0 %v1162
        %v1178 = vpop.f32.mrf.mxu0
        %v1179 = vadd.f32 0.0, %v1178
        %v1180 = vpop.f32.mrf.mxu0
        %v1181 = vadd.f32 0.0, %v1180
        %1182 = vdwg.mxu0
        %1183 = vmatpush.bf16.msra.mxu0 0
        %1184 = vmatpush.bf16.msra.mxu0 0
        %1185 = vmatpush.bf16.msra.mxu0 0
        %1186 = vmatpush.bf16.msra.mxu0 0
        %1187 = vmatpush.bf16.msra.mxu0 0
        %1188 = vmatpush.bf16.msra.mxu0 0
        %1189 = vmatpush.bf16.msra.mxu0 %v1147
        %1190 = vmatpush.bf16.msra.mxu0 %v1143
        %1191 = vmatmul.bf16.gmra.mxu0 %v1159
        %v1192 = vpop.f32.mrf.mxu0
        %v1193 = vadd.f32 0.0, %v1192
        %v1194 = vpop.f32.mrf.mxu0
        %v1195 = vadd.f32 0.0, %v1194
        %1196 = vmatmul.bf16.gmra.mxu0 %v1162
        %v1197 = vpop.f32.mrf.mxu0
        %v1198 = vadd.f32 0.0, %v1197
        %v1199 = vpop.f32.mrf.mxu0
        %v1200 = vadd.f32 0.0, %v1199
        %1201 = vdwg.mxu0
        %1202 = vmatpush.bf16.msra.mxu0 0
        %1203 = vmatpush.bf16.msra.mxu0 0
        %1204 = vmatpush.bf16.msra.mxu0 0
        %1205 = vmatpush.bf16.msra.mxu0 0
        %1206 = vmatpush.bf16.msra.mxu0 0
        %1207 = vmatpush.bf16.msra.mxu0 0
        %1208 = vmatpush.bf16.msra.mxu0 %v1148
        %1209 = vmatpush.bf16.msra.mxu0 %v1144
        %1210 = vmatmul.bf16.gmra.mxu0 %v1159
        %v1211 = vpop.f32.mrf.mxu0
        %v1212 = vadd.f32 0.0, %v1211
        %v1213 = vpop.f32.mrf.mxu0
        %v1214 = vadd.f32 0.0, %v1213
        %1215 = vmatmul.bf16.gmra.mxu0 %v1162
        %v1216 = vpop.f32.mrf.mxu0
        %v1217 = vadd.f32 0.0, %v1216
        %v1218 = vpop.f32.mrf.mxu0
        %v1219 = vadd.f32 0.0, %v1218
        %1220 = vdwg.mxu0
        %1221 = vmatpush.bf16.msra.mxu0 0
        %1222 = vmatpush.bf16.msra.mxu0 0
        %1223 = vmatpush.bf16.msra.mxu0 0
        %1224 = vmatpush.bf16.msra.mxu0 0
        %1225 = vmatpush.bf16.msra.mxu0 0
        %1226 = vmatpush.bf16.msra.mxu0 0
        %1227 = vmatpush.bf16.msra.mxu0 %v1149
        %1228 = vmatpush.bf16.msra.mxu0 %v1145
        %1229 = vmatmul.bf16.gmra.mxu0 %v1159
        %v1230 = vpop.f32.mrf.mxu0
        %v1231 = vadd.f32 0.0, %v1230
        %v1232 = vpop.f32.mrf.mxu0
        %v1233 = vadd.f32 0.0, %v1232
        %1234 = vmatmul.bf16.gmra.mxu0 %v1162
        %v1235 = vpop.f32.mrf.mxu0
        %v1236 = vadd.f32 0.0, %v1235
        %v1237 = vpop.f32.mrf.mxu0
        %v1238 = vadd.f32 0.0, %v1237
        %1239 = vdwg.mxu0
        %v1240 = vadd.f32 %v1087, %v1174
        %v1241 = vadd.f32 %v1088, %v1193
        %v1242 = vadd.f32 %v1089, %v1212
        %v1243 = vadd.f32 %v1090, %v1231
        %v1244 = vadd.f32 %v1091, %v1176
        %v1245 = vadd.f32 %v1092, %v1195
        %v1246 = vadd.f32 %v1093, %v1214
        %v1247 = vadd.f32 %v1094, %v1233
        %v1248 = vadd.f32 %v1095, %v1179
        %v1249 = vadd.f32 %v1096, %v1198
        %v1250 = vadd.f32 %v1097, %v1217
        %v1251 = vadd.f32 %v1098, %v1236
        %v1252 = vadd.f32 %v1099, %v1181
        %v1253 = vadd.f32 %v1100, %v1200
        %v1254 = vadd.f32 %v1101, %v1219
        %v1255 = vadd.f32 %v1102, %v1238
        %v1256 = vld [vmem:[%s2] sm:$0xf]
        %v1258 = vperm.slane %v1256, 0
        %v1259 = vperm.slane %v1256, 1
        %v1260 = vperm.slane %v1256, 2
        %v1261 = vperm.slane %v1256, 3
        %v1266 = vadd.f32 %v1240, %v1258
        %v1267 = vadd.f32 %v1241, %v1259
        %v1268 = vadd.f32 %v1242, %v1260
        %v1269 = vadd.f32 %v1243, %v1261
        %v1270 = vadd.f32 %v1244, %v1258
        %v1271 = vadd.f32 %v1245, %v1259
        %v1272 = vadd.f32 %v1246, %v1260
        %v1273 = vadd.f32 %v1247, %v1261
        %v1274 = vadd.f32 %v1248, %v1258
        %v1275 = vadd.f32 %v1249, %v1259
        %v1276 = vadd.f32 %v1250, %v1260
        %v1277 = vadd.f32 %v1251, %v1261
        %v1278 = vadd.f32 %v1252, %v1258
        %v1279 = vadd.f32 %v1253, %v1259
        %v1280 = vadd.f32 %v1254, %v1260
        %v1281 = vadd.f32 %v1255, %v1261
        %v1282 = vmax.f32 %v1266, 0.0
        %v1283 = vmax.f32 %v1267, 0.0
        %v1284 = vmax.f32 %v1268, 0.0
        %v1285 = vmax.f32 %v1269, 0.0
        %v1286 = vmax.f32 %v1270, 0.0
        %v1287 = vmax.f32 %v1271, 0.0
        %v1288 = vmax.f32 %v1272, 0.0
        %v1289 = vmax.f32 %v1273, 0.0
        %v1290 = vmax.f32 %v1274, 0.0
        %v1291 = vmax.f32 %v1275, 0.0
        %v1292 = vmax.f32 %v1276, 0.0
        %v1293 = vmax.f32 %v1277, 0.0
        %v1294 = vmax.f32 %v1278, 0.0
        %v1295 = vmax.f32 %v1279, 0.0
        %v1296 = vmax.f32 %v1280, 0.0
        %v1297 = vmax.f32 %v1281, 0.0
        %1306 = vrot.lane.b32.xlu0 %v1283, 112
        %v1307 = vpop.permute.xlu0 %1306
        %1308 = vrot.lane.b32.xlu0 %v1284, 112
        %v1309 = vpop.permute.xlu0 %1308
        %1310 = vrot.lane.b32.xlu0 %v1287, 112
        %v1311 = vpop.permute.xlu0 %1310
        %1312 = vrot.lane.b32.xlu0 %v1288, 112
        %v1313 = vpop.permute.xlu0 %1312
        %1314 = vrot.lane.b32.xlu0 %v1291, 112
        %v1315 = vpop.permute.xlu0 %1314
        %1316 = vrot.lane.b32.xlu0 %v1292, 112
        %v1317 = vpop.permute.xlu0 %1316
        %1318 = vrot.lane.b32.xlu0 %v1295, 112
        %v1319 = vpop.permute.xlu0 %1318
        %1320 = vrot.lane.b32.xlu0 %v1296, 112
        %v1321 = vpop.permute.xlu0 %1320
        %vm1322 = vcmask 916480
        %v1323 = vsel %vm1322, %v1307, %v1309
        %v1324 = vsel %vm1322, %v1311, %v1313
        %v1325 = vsel %vm1322, %v1315, %v1317
        %v1326 = vsel %vm1322, %v1319, %v1321
        %v1335 = vmax.f32 %v1282, %v1323
        %v1336 = vmax.f32 %v1283, %v1309
        %v1337 = vmax.f32 %v1286, %v1324
        %v1338 = vmax.f32 %v1287, %v1313
        %v1339 = vmax.f32 %v1290, %v1325
        %v1340 = vmax.f32 %v1291, %v1317
        %v1341 = vmax.f32 %v1294, %v1326
        %v1342 = vmax.f32 %v1295, %v1321
        %1347 = vrot.lane.b32.xlu0 %v1284, 96
        %v1348 = vpop.permute.xlu0 %1347
        %1349 = vrot.lane.b32.xlu0 %v1285, 96
        %v1350 = vpop.permute.xlu0 %1349
        %1351 = vrot.lane.b32.xlu0 %v1288, 96
        %v1352 = vpop.permute.xlu0 %1351
        %1353 = vrot.lane.b32.xlu0 %v1289, 96
        %v1354 = vpop.permute.xlu0 %1353
        %1355 = vrot.lane.b32.xlu0 %v1292, 96
        %v1356 = vpop.permute.xlu0 %1355
        %1357 = vrot.lane.b32.xlu0 %v1293, 96
        %v1358 = vpop.permute.xlu0 %1357
        %1359 = vrot.lane.b32.xlu0 %v1296, 96
        %v1360 = vpop.permute.xlu0 %1359
        %1361 = vrot.lane.b32.xlu0 %v1297, 96
        %v1362 = vpop.permute.xlu0 %1361
        %vm1363 = vcmask 785408
        %v1364 = vsel %vm1363, %v1348, %v1350
        %v1365 = vsel %vm1363, %v1352, %v1354
        %v1366 = vsel %vm1363, %v1356, %v1358
        %v1367 = vsel %vm1363, %v1360, %v1362
        %v1376 = vmax.f32 %v1335, %v1364
        %v1377 = vmax.f32 %v1336, %v1350
        %v1378 = vmax.f32 %v1337, %v1365
        %v1379 = vmax.f32 %v1338, %v1354
        %v1380 = vmax.f32 %v1339, %v1366
        %v1381 = vmax.f32 %v1340, %v1358
        %v1382 = vmax.f32 %v1341, %v1367
        %v1383 = vmax.f32 %v1342, %v1362
        %vm1384 = vcmask 1042432
        %v1385 = vsel %vm1384, %v1376, -inf
        %v1386 = vrot.slane %v1385, 4
        %v1387 = vmax.f32 %v1385, %v1386
        %v1388 = vrot.slane %v1387, 2
        %v1389 = vmax.f32 %v1387, %v1388
        %v1390 = vrot.slane %v1389, 1
        %v1391 = vmax.f32 %v1389, %v1390
        %vm1392 = vcmask 124928
        %v1393 = vsel %vm1392, %v1377, -inf
        %v1394 = vrot.slane %v1393, 4
        %v1395 = vmax.f32 %v1393, %v1394
        %v1396 = vrot.slane %v1395, 2
        %v1397 = vmax.f32 %v1395, %v1396
        %v1398 = vrot.slane %v1397, 1
        %v1399 = vmax.f32 %v1397, %v1398
        %v1402 = vrot.slane %v1399, 7
        %vm1403 = vcmask 1040384
        %v1404 = vsel %vm1403, %v1391, %v1402
        %1405 = vrot.lane.b32.xlu0 %v1404, 32
        %v1406 = vpop.permute.xlu0 %1405
        %v1407 = vrot.slane %v1406, 7
        %v1408 = vsel %vm331, %v1407, %v1406
        %v1410 = vlaneseq
        %vm1411 = vcmp.ge.s32.totalorder %v1410, 32
        %vm1412 = vcmp.lt.s32.totalorder %v1410, 176
        %vm1413 = vmand %vm1411, %vm1412
        %s1414 = scalar_lea.vmem [#allocation3], 2
        %1415 = vst.msk [vmem:[%s1414] ss:$8 sm:$0x3] %vm1413, %v1408
        %1416 = vst.msk [vmem:[%s1414] ss:$8 sm:$0x0] %vm1413, %v1408
        %vm1417 = vcmask 1045507
        %v1418 = vsel %vm1417, %v1376, -inf
        %v1419 = vrot.slane %v1418, 4
        %v1420 = vmax.f32 %v1418, %v1419
        %v1421 = vrot.slane %v1420, 2
        %v1422 = vmax.f32 %v1420, %v1421
        %v1423 = vrot.slane %v1422, 1
        %v1424 = vmax.f32 %v1422, %v1423
        %vm1425 = vcmask 128003
        %v1426 = vsel %vm1425, %v1377, -inf
        %v1427 = vrot.slane %v1426, 4
        %v1428 = vmax.f32 %v1426, %v1427
        %v1429 = vrot.slane %v1428, 2
        %v1430 = vmax.f32 %v1428, %v1429
        %v1431 = vrot.slane %v1430, 1
        %v1432 = vmax.f32 %v1430, %v1431
        %v1435 = vrot.slane %v1432, 7
        %v1436 = vsel %vm1403, %v1424, %v1435
        %1437 = vrot.lane.b32.xlu0 %v1436, 32
        %v1438 = vpop.permute.xlu0 %1437
        %v1439 = vrot.slane %v1438, 7
        %v1440 = vsel %vm331, %v1439, %v1438
        %s1442 = scalar_lea.vmem [#allocation3], 3
        %1443 = vst.msk [vmem:[%s1442] ss:$8 sm:$0x3] %vm1413, %v1440
        %1444 = vst.msk [vmem:[%s1442] ss:$8 sm:$0x0] %vm1413, %v1440
        %vm1445 = vcmask 1047558
        %v1446 = vsel %vm1445, %v1376, -inf
        %v1447 = vsel %vm1403, %v1378, -inf
        %v1448 = vmax.f32 %v1446, %v1447
        %v1449 = vrot.slane %v1448, 4
        %v1450 = vmax.f32 %v1448, %v1449
        %v1451 = vrot.slane %v1450, 2
        %v1452 = vmax.f32 %v1450, %v1451
        %v1453 = vrot.slane %v1452, 1
        %v1454 = vmax.f32 %v1452, %v1453
        %vm1455 = vcmask 130054
        %v1456 = vsel %vm1455, %v1377, -inf
        %vm1457 = vcmask 122880
        %v1458 = vsel %vm1457, %v1379, -inf
        %v1459 = vmax.f32 %v1456, %v1458
        %v1460 = vrot.slane %v1459, 4
        %v1461 = vmax.f32 %v1459, %v1460
        %v1462 = vrot.slane %v1461, 2
        %v1463 = vmax.f32 %v1461, %v1462
        %v1464 = vrot.slane %v1463, 1
        %v1465 = vmax.f32 %v1463, %v1464
        %v1468 = vrot.slane %v1465, 7
        %v1469 = vsel %vm1403, %v1454, %v1468
        %1470 = vrot.lane.b32.xlu0 %v1469, 32
        %v1471 = vpop.permute.xlu0 %1470
        %v1472 = vrot.slane %v1471, 7
        %v1473 = vsel %vm331, %v1472, %v1471
        %s1475 = scalar_lea.vmem [#allocation3], 4
        %1476 = vst.msk [vmem:[%s1475] ss:$8 sm:$0x3] %vm1413, %v1473
        %1477 = vst.msk [vmem:[%s1475] ss:$8 sm:$0x0] %vm1413, %v1473
        %vm1478 = vcmask 1043457
        %v1479 = vsel %vm1478, %v1378, -inf
        %v1480 = vrot.slane %v1479, 4
        %v1481 = vmax.f32 %v1479, %v1480
        %v1482 = vrot.slane %v1481, 2
        %v1483 = vmax.f32 %v1481, %v1482
        %v1484 = vrot.slane %v1483, 1
        %v1485 = vmax.f32 %v1483, %v1484
        %vm1486 = vcmask 125953
        %v1487 = vsel %vm1486, %v1379, -inf
        %v1488 = vrot.slane %v1487, 4
        %v1489 = vmax.f32 %v1487, %v1488
        %v1490 = vrot.slane %v1489, 2
        %v1491 = vmax.f32 %v1489, %v1490
        %v1492 = vrot.slane %v1491, 1
        %v1493 = vmax.f32 %v1491, %v1492
        %v1496 = vrot.slane %v1493, 7
        %v1497 = vsel %vm1403, %v1485, %v1496
        %1498 = vrot.lane.b32.xlu0 %v1497, 32
        %v1499 = vpop.permute.xlu0 %1498
        %v1500 = vrot.slane %v1499, 7
        %v1501 = vsel %vm331, %v1500, %v1499
        %s1503 = scalar_lea.vmem [#allocation3], 5
        %1504 = vst.msk [vmem:[%s1503] ss:$8 sm:$0x3] %vm1413, %v1501
        %1505 = vst.msk [vmem:[%s1503] ss:$8 sm:$0x0] %vm1413, %v1501
        %vm1506 = vcmask 1046532
        %v1507 = vsel %vm1506, %v1378, -inf
        %v1508 = vrot.slane %v1507, 4
        %v1509 = vmax.f32 %v1507, %v1508
        %v1510 = vrot.slane %v1509, 2
        %v1511 = vmax.f32 %v1509, %v1510
        %v1512 = vrot.slane %v1511, 1
        %v1513 = vmax.f32 %v1511, %v1512
        %vm1514 = vcmask 129028
        %v1515 = vsel %vm1514, %v1379, -inf
        %v1516 = vrot.slane %v1515, 4
        %v1517 = vmax.f32 %v1515, %v1516
        %v1518 = vrot.slane %v1517, 2
        %v1519 = vmax.f32 %v1517, %v1518
        %v1520 = vrot.slane %v1519, 1
        %v1521 = vmax.f32 %v1519, %v1520
        %v1524 = vrot.slane %v1521, 7
        %v1525 = vsel %vm1403, %v1513, %v1524
        %1526 = vrot.lane.b32.xlu0 %v1525, 32
        %v1527 = vpop.permute.xlu0 %1526
        %v1528 = vrot.slane %v1527, 7
        %v1529 = vsel %vm331, %v1528, %v1527
        %s1531 = scalar_lea.vmem [#allocation3], 6
        %1532 = vst.msk [vmem:[%s1531] ss:$8 sm:$0x3] %vm1413, %v1529
        %1533 = vst.msk [vmem:[%s1531] ss:$8 sm:$0x0] %vm1413, %v1529
        %vm1534 = vcmask 1047559
        %v1535 = vsel %vm1534, %v1378, -inf
        %vm1536 = vcmask 1041408
        %v1537 = vsel %vm1536, %v1380, -inf
        %v1538 = vmax.f32 %v1535, %v1537
        %v1539 = vrot.slane %v1538, 4
        %v1540 = vmax.f32 %v1538, %v1539
        %v1541 = vrot.slane %v1540, 2
        %v1542 = vmax.f32 %v1540, %v1541
        %v1543 = vrot.slane %v1542, 1
        %v1544 = vmax.f32 %v1542, %v1543
        %vm1545 = vcmask 130055
        %v1546 = vsel %vm1545, %v1379, -inf
        %vm1547 = vcmask 123904
        %v1548 = vsel %vm1547, %v1381, -inf
        %v1549 = vmax.f32 %v1546, %v1548
        %v1550 = vrot.slane %v1549, 4
        %v1551 = vmax.f32 %v1549, %v1550
        %v1552 = vrot.slane %v1551, 2
        %v1553 = vmax.f32 %v1551, %v1552
        %v1554 = vrot.slane %v1553, 1
        %v1555 = vmax.f32 %v1553, %v1554
        %v1558 = vrot.slane %v1555, 7
        %v1559 = vsel %vm1403, %v1544, %v1558
        %1560 = vrot.lane.b32.xlu0 %v1559, 32
        %v1561 = vpop.permute.xlu0 %1560
        %v1562 = vrot.slane %v1561, 7
        %v1563 = vsel %vm331, %v1562, %v1561
        %s1565 = scalar_lea.vmem [#allocation3], 7
        %1566 = vst.msk [vmem:[%s1565] ss:$8 sm:$0x3] %vm1413, %v1563
        %1567 = vst.msk [vmem:[%s1565] ss:$8 sm:$0x0] %vm1413, %v1563
        %vm1568 = vcmask 1044482
        %v1569 = vsel %vm1568, %v1380, -inf
        %v1570 = vrot.slane %v1569, 4
        %v1571 = vmax.f32 %v1569, %v1570
        %v1572 = vrot.slane %v1571, 2
        %v1573 = vmax.f32 %v1571, %v1572
        %v1574 = vrot.slane %v1573, 1
        %v1575 = vmax.f32 %v1573, %v1574
        %vm1576 = vcmask 126978
        %v1577 = vsel %vm1576, %v1381, -inf
        %v1578 = vrot.slane %v1577, 4
        %v1579 = vmax.f32 %v1577, %v1578
        %v1580 = vrot.slane %v1579, 2
        %v1581 = vmax.f32 %v1579, %v1580
        %v1582 = vrot.slane %v1581, 1
        %v1583 = vmax.f32 %v1581, %v1582
        %v1586 = vrot.slane %v1583, 7
        %v1587 = vsel %vm1403, %v1575, %v1586
        %1588 = vrot.lane.b32.xlu0 %v1587, 32
        %v1589 = vpop.permute.xlu0 %1588
        %v1590 = vrot.slane %v1589, 7
        %v1591 = vsel %vm331, %v1590, %v1589
        %s1593 = scalar_lea.vmem [#allocation3], 16
        %1594 = vst.msk [vmem:[%s1593] ss:$8 sm:$0x3] %vm1413, %v1591
        %1595 = vst.msk [vmem:[%s1593] ss:$8 sm:$0x0] %vm1413, %v1591
        %vm1596 = vcmask 1047557
        %v1597 = vsel %vm1596, %v1380, -inf
        %v1598 = vrot.slane %v1597, 4
        %v1599 = vmax.f32 %v1597, %v1598
        %v1600 = vrot.slane %v1599, 2
        %v1601 = vmax.f32 %v1599, %v1600
        %v1602 = vrot.slane %v1601, 1
        %v1603 = vmax.f32 %v1601, %v1602
        %vm1604 = vcmask 130053
        %v1605 = vsel %vm1604, %v1381, -inf
        %v1606 = vrot.slane %v1605, 4
        %v1607 = vmax.f32 %v1605, %v1606
        %v1608 = vrot.slane %v1607, 2
        %v1609 = vmax.f32 %v1607, %v1608
        %v1610 = vrot.slane %v1609, 1
        %v1611 = vmax.f32 %v1609, %v1610
        %v1614 = vrot.slane %v1611, 7
        %v1615 = vsel %vm1403, %v1603, %v1614
        %1616 = vrot.lane.b32.xlu0 %v1615, 32
        %v1617 = vpop.permute.xlu0 %1616
        %v1618 = vrot.slane %v1617, 7
        %v1619 = vsel %vm331, %v1618, %v1617
        %s1621 = scalar_lea.vmem [#allocation3], 17
        %1622 = vst.msk [vmem:[%s1621] ss:$8 sm:$0x3] %vm1413, %v1619
        %1623 = vst.msk [vmem:[%s1621] ss:$8 sm:$0x0] %vm1413, %v1619
        %v1624 = vsel %vm1384, %v1382, -inf
        %v1625 = vrot.slane %v1624, 4
        %v1626 = vmax.f32 %v1624, %v1625
        %v1627 = vrot.slane %v1626, 2
        %v1628 = vmax.f32 %v1626, %v1627
        %v1629 = vrot.slane %v1628, 1
        %v1630 = vmax.f32 %v1628, %v1629
        %v1631 = vsel %vm1392, %v1383, -inf
        %v1632 = vrot.slane %v1631, 4
        %v1633 = vmax.f32 %v1631, %v1632
        %v1634 = vrot.slane %v1633, 2
        %v1635 = vmax.f32 %v1633, %v1634
        %v1636 = vrot.slane %v1635, 1
        %v1637 = vmax.f32 %v1635, %v1636
        %v1640 = vrot.slane %v1637, 7
        %v1641 = vsel %vm1403, %v1630, %v1640
        %1642 = vrot.lane.b32.xlu0 %v1641, 32
        %v1643 = vpop.permute.xlu0 %1642
        %v1644 = vrot.slane %v1643, 7
        %v1645 = vsel %vm331, %v1644, %v1643
        %s1647 = scalar_lea.vmem [#allocation3], 18
        %1648 = vst.msk [vmem:[%s1647] ss:$8 sm:$0x3] %vm1413, %v1645
        %1649 = vst.msk [vmem:[%s1647] ss:$8 sm:$0x0] %vm1413, %v1645
        %v1650 = vld [vmem:[#allocation3] sm:$0xff]
        %v1651 = vld [vmem:[#allocation3 + $0x8] sm:$0xff]
        %v1652 = vld [vmem:[#allocation3 + $0x10] sm:$0x1]
        %v1653 = vld [vmem:[#allocation3 + $0x18] sm:$0x1]
        %v1654 = vpack.c.bf16 %v1652, %v1650
        %v1655 = vpack.c.bf16 %v1653, %v1651
        %v1656 = vld [vmem:[%s3] sm:$0xff]
        %v1657 = vld [vmem:[%s3 + $0x8] sm:$0xf]
        %v1658 = vld [vmem:[%s3 + $0xc] sm:$0xff]
        %v1659 = vld [vmem:[%s3 + $0x14] sm:$0xf]
        %v1660 = vld [vmem:[%s3 + $0x18] sm:$0xff]
        %v1661 = vld [vmem:[%s3 + $0x20] sm:$0xf]
        %v1662 = vld [vmem:[%s3 + $0x24] sm:$0xff]
        %v1663 = vld [vmem:[%s3 + $0x2c] sm:$0xf]
        %v1664 = vld [vmem:[%s3 + $0x30] sm:$0xff]
        %v1665 = vld [vmem:[%s3 + $0x38] sm:$0xf]
        %v1666 = vld [vmem:[%s3 + $0x3c] sm:$0xff]
        %v1667 = vld [vmem:[%s3 + $0x44] sm:$0xf]
        %v1668 = vld [vmem:[%s3 + $0x48] sm:$0xff]
        %v1669 = vld [vmem:[%s3 + $0x50] sm:$0xf]
        %v1670 = vld [vmem:[%s3 + $0x54] sm:$0xff]
        %v1671 = vld [vmem:[%s3 + $0x5c] sm:$0xf]
        %v1672 = vld [vmem:[%s3 + $0x60] sm:$0xff]
        %v1673 = vld [vmem:[%s3 + $0x68] sm:$0xf]
        %v1674 = vld [vmem:[%s3 + $0x6c] sm:$0xff]
        %v1675 = vld [vmem:[%s3 + $0x74] sm:$0xf]
        %v1676 = vld [vmem:[%s3 + $0x78] sm:$0xff]
        %v1677 = vld [vmem:[%s3 + $0x80] sm:$0xf]
        %v1678 = vld [vmem:[%s3 + $0x84] sm:$0xff]
        %v1679 = vld [vmem:[%s3 + $0x8c] sm:$0xf]
        %v1680 = vld [vmem:[%s3 + $0x90] sm:$0xff]
        %v1681 = vld [vmem:[%s3 + $0x98] sm:$0xf]
        %v1682 = vld [vmem:[%s3 + $0x9c] sm:$0xff]
        %v1683 = vld [vmem:[%s3 + $0xa4] sm:$0xf]
        %v1684 = vld [vmem:[%s3 + $0xa8] sm:$0xff]
        %v1685 = vld [vmem:[%s3 + $0xb0] sm:$0xf]
        %v1686 = vld [vmem:[%s3 + $0xb4] sm:$0xff]
        %v1687 = vld [vmem:[%s3 + $0xbc] sm:$0xf]
        %v1688 = vld [vmem:[%s3 + $0xc0] sm:$0xff]
        %v1689 = vld [vmem:[%s3 + $0xc8] sm:$0xf]
        %v1690 = vld [vmem:[%s3 + $0xcc] sm:$0xff]
        %v1691 = vld [vmem:[%s3 + $0xd4] sm:$0xf]
        %v1692 = vld [vmem:[%s3 + $0xd8] sm:$0xff]
        %v1693 = vld [vmem:[%s3 + $0xe0] sm:$0xf]
        %v1694 = vld [vmem:[%s3 + $0xe4] sm:$0xff]
        %v1695 = vld [vmem:[%s3 + $0xec] sm:$0xf]
        %v1696 = vld [vmem:[%s3 + $0xf0] sm:$0xff]
        %v1697 = vld [vmem:[%s3 + $0xf8] sm:$0xf]
        %v1698 = vld [vmem:[%s3 + $0xfc] sm:$0xff]
        %v1699 = vld [vmem:[%s3 + $0x104] sm:$0xf]
        %v1700 = vld [vmem:[%s3 + $0x108] sm:$0xff]
        %v1701 = vld [vmem:[%s3 + $0x110] sm:$0xf]
        %v1702 = vld [vmem:[%s3 + $0x114] sm:$0xff]
        %v1703 = vld [vmem:[%s3 + $0x11c] sm:$0xf]
        %v1704 = vld [vmem:[%s3 + $0x120] sm:$0xff]
        %v1705 = vld [vmem:[%s3 + $0x128] sm:$0xf]
        %v1706 = vld [vmem:[%s3 + $0x12c] sm:$0xff]
        %v1707 = vld [vmem:[%s3 + $0x134] sm:$0xf]
        %v1708 = vld [vmem:[#allocation3] sm:$0xfe]
        %v1709 = vld [vmem:[#allocation3 + $0x8] sm:$0xfe]
        %v1710 = vld [vmem:[#allocation3 + $0x10] sm:$0x3]
        %v1711 = vld [vmem:[#allocation3 + $0x18] sm:$0x3]
        %v1712 = vpack.c.bf16 %v1710, %v1708
        %v1713 = vpack.c.bf16 %v1711, %v1709
        %s1714 = scalar_lea.vmem %s3, 312
        %v1715 = vld [vmem:[%s1714] sm:$0xff]
        %v1716 = vld [vmem:[%s1714 + $0x8] sm:$0xf]
        %v1717 = vld [vmem:[%s1714 + $0xc] sm:$0xff]
        %v1718 = vld [vmem:[%s1714 + $0x14] sm:$0xf]
        %v1719 = vld [vmem:[%s1714 + $0x18] sm:$0xff]
        %v1720 = vld [vmem:[%s1714 + $0x20] sm:$0xf]
        %v1721 = vld [vmem:[%s1714 + $0x24] sm:$0xff]
        %v1722 = vld [vmem:[%s1714 + $0x2c] sm:$0xf]
        %v1723 = vld [vmem:[%s1714 + $0x30] sm:$0xff]
        %v1724 = vld [vmem:[%s1714 + $0x38] sm:$0xf]
        %v1725 = vld [vmem:[%s1714 + $0x3c] sm:$0xff]
        %v1726 = vld [vmem:[%s1714 + $0x44] sm:$0xf]
        %v1727 = vld [vmem:[%s1714 + $0x48] sm:$0xff]
        %v1728 = vld [vmem:[%s1714 + $0x50] sm:$0xf]
        %v1729 = vld [vmem:[%s1714 + $0x54] sm:$0xff]
        %v1730 = vld [vmem:[%s1714 + $0x5c] sm:$0xf]
        %v1731 = vld [vmem:[%s1714 + $0x60] sm:$0xff]
        %v1732 = vld [vmem:[%s1714 + $0x68] sm:$0xf]
        %v1733 = vld [vmem:[%s1714 + $0x6c] sm:$0xff]
        %v1734 = vld [vmem:[%s1714 + $0x74] sm:$0xf]
        %v1735 = vld [vmem:[%s1714 + $0x78] sm:$0xff]
        %v1736 = vld [vmem:[%s1714 + $0x80] sm:$0xf]
        %v1737 = vld [vmem:[%s1714 + $0x84] sm:$0xff]
        %v1738 = vld [vmem:[%s1714 + $0x8c] sm:$0xf]
        %v1739 = vld [vmem:[%s1714 + $0x90] sm:$0xff]
        %v1740 = vld [vmem:[%s1714 + $0x98] sm:$0xf]
        %v1741 = vld [vmem:[%s1714 + $0x9c] sm:$0xff]
        %v1742 = vld [vmem:[%s1714 + $0xa4] sm:$0xf]
        %v1743 = vld [vmem:[%s1714 + $0xa8] sm:$0xff]
        %v1744 = vld [vmem:[%s1714 + $0xb0] sm:$0xf]
        %v1745 = vld [vmem:[%s1714 + $0xb4] sm:$0xff]
        %v1746 = vld [vmem:[%s1714 + $0xbc] sm:$0xf]
        %v1747 = vld [vmem:[%s1714 + $0xc0] sm:$0xff]
        %v1748 = vld [vmem:[%s1714 + $0xc8] sm:$0xf]
        %v1749 = vld [vmem:[%s1714 + $0xcc] sm:$0xff]
        %v1750 = vld [vmem:[%s1714 + $0xd4] sm:$0xf]
        %v1751 = vld [vmem:[%s1714 + $0xd8] sm:$0xff]
        %v1752 = vld [vmem:[%s1714 + $0xe0] sm:$0xf]
        %v1753 = vld [vmem:[%s1714 + $0xe4] sm:$0xff]
        %v1754 = vld [vmem:[%s1714 + $0xec] sm:$0xf]
        %v1755 = vld [vmem:[%s1714 + $0xf0] sm:$0xff]
        %v1756 = vld [vmem:[%s1714 + $0xf8] sm:$0xf]
        %v1757 = vld [vmem:[%s1714 + $0xfc] sm:$0xff]
        %v1758 = vld [vmem:[%s1714 + $0x104] sm:$0xf]
        %v1759 = vld [vmem:[%s1714 + $0x108] sm:$0xff]
        %v1760 = vld [vmem:[%s1714 + $0x110] sm:$0xf]
        %v1761 = vld [vmem:[%s1714 + $0x114] sm:$0xff]
        %v1762 = vld [vmem:[%s1714 + $0x11c] sm:$0xf]
        %v1763 = vld [vmem:[%s1714 + $0x120] sm:$0xff]
        %v1764 = vld [vmem:[%s1714 + $0x128] sm:$0xf]
        %v1765 = vld [vmem:[%s1714 + $0x12c] sm:$0xff]
        %v1766 = vld [vmem:[%s1714 + $0x134] sm:$0xf]
        %v1768 = vshrl.u32 %v1712, 16
        %v1770 = vshll.u32 %v1712, 16
        %v1772 = vrot.slane %v1770, 1
        %v1773 = vor.u32 %v1768, %v1772
        %v1775 = vshrl.u32 %v1713, 16
        %v1777 = vshll.u32 %v1713, 16
        %v1779 = vrot.slane %v1777, 1
        %v1780 = vor.u32 %v1775, %v1779
        %v1834 = vunpack.c.l.b16 %v1715
        %v1835 = vunpack.c.h.b16 %v1715
        %v1836 = vunpack.c.l.b16 %v1716
        %v1837 = vunpack.c.l.b16 %v1717
        %v1838 = vunpack.c.h.b16 %v1717
        %v1839 = vunpack.c.l.b16 %v1718
        %v1840 = vunpack.c.l.b16 %v1719
        %v1841 = vunpack.c.h.b16 %v1719
        %v1842 = vunpack.c.l.b16 %v1720
        %v1843 = vunpack.c.l.b16 %v1721
        %v1844 = vunpack.c.h.b16 %v1721
        %v1845 = vunpack.c.l.b16 %v1722
        %v1846 = vunpack.c.l.b16 %v1723
        %v1847 = vunpack.c.h.b16 %v1723
        %v1848 = vunpack.c.l.b16 %v1724
        %v1849 = vunpack.c.l.b16 %v1725
        %v1850 = vunpack.c.h.b16 %v1725
        %v1851 = vunpack.c.l.b16 %v1726
        %v1852 = vunpack.c.l.b16 %v1727
        %v1853 = vunpack.c.h.b16 %v1727
        %v1854 = vunpack.c.l.b16 %v1728
        %v1855 = vunpack.c.l.b16 %v1729
        %v1856 = vunpack.c.h.b16 %v1729
        %v1857 = vunpack.c.l.b16 %v1730
        %v1858 = vunpack.c.l.b16 %v1731
        %v1859 = vunpack.c.h.b16 %v1731
        %v1860 = vunpack.c.l.b16 %v1732
        %v1861 = vunpack.c.l.b16 %v1733
        %v1862 = vunpack.c.h.b16 %v1733
        %v1863 = vunpack.c.l.b16 %v1734
        %v1864 = vunpack.c.l.b16 %v1735
        %v1865 = vunpack.c.h.b16 %v1735
        %v1866 = vunpack.c.l.b16 %v1736
        %v1867 = vunpack.c.l.b16 %v1737
        %v1868 = vunpack.c.h.b16 %v1737
        %v1869 = vunpack.c.l.b16 %v1738
        %v1870 = vunpack.c.l.b16 %v1739
        %v1871 = vunpack.c.h.b16 %v1739
        %v1872 = vunpack.c.l.b16 %v1740
        %v1873 = vunpack.c.l.b16 %v1741
        %v1874 = vunpack.c.h.b16 %v1741
        %v1875 = vunpack.c.l.b16 %v1742
        %v1876 = vunpack.c.l.b16 %v1743
        %v1877 = vunpack.c.h.b16 %v1743
        %v1878 = vunpack.c.l.b16 %v1744
        %v1879 = vunpack.c.l.b16 %v1745
        %v1880 = vunpack.c.h.b16 %v1745
        %v1881 = vunpack.c.l.b16 %v1746
        %v1882 = vunpack.c.l.b16 %v1747
        %v1883 = vunpack.c.h.b16 %v1747
        %v1884 = vunpack.c.l.b16 %v1748
        %v1885 = vunpack.c.l.b16 %v1749
        %v1886 = vunpack.c.h.b16 %v1749
        %v1887 = vunpack.c.l.b16 %v1750
        %v1888 = vunpack.c.l.b16 %v1751
        %v1889 = vunpack.c.h.b16 %v1751
        %v1890 = vunpack.c.l.b16 %v1752
        %v1891 = vunpack.c.l.b16 %v1753
        %v1892 = vunpack.c.h.b16 %v1753
        %v1893 = vunpack.c.l.b16 %v1754
        %v1894 = vunpack.c.l.b16 %v1755
        %v1895 = vunpack.c.h.b16 %v1755
        %v1896 = vunpack.c.l.b16 %v1756
        %v1897 = vunpack.c.l.b16 %v1757
        %v1898 = vunpack.c.h.b16 %v1757
        %v1899 = vunpack.c.l.b16 %v1758
        %v1900 = vunpack.c.l.b16 %v1759
        %v1901 = vunpack.c.h.b16 %v1759
        %v1902 = vunpack.c.l.b16 %v1760
        %v1903 = vunpack.c.l.b16 %v1761
        %v1904 = vunpack.c.h.b16 %v1761
        %v1905 = vunpack.c.l.b16 %v1762
        %v1906 = vunpack.c.l.b16 %v1763
        %v1907 = vunpack.c.h.b16 %v1763
        %v1908 = vunpack.c.l.b16 %v1764
        %v1909 = vunpack.c.l.b16 %v1765
        %v1910 = vunpack.c.h.b16 %v1765
        %v1911 = vunpack.c.l.b16 %v1766
        %v1912 = vpack.c.b16 %v1837, %v1834
        %v1913 = vpack.c.b16 %v1838, %v1835
        %v1914 = vpack.c.b16 %v1839, %v1836
        %v1915 = vpack.c.b16 %v1843, %v1840
        %v1916 = vpack.c.b16 %v1844, %v1841
        %v1917 = vpack.c.b16 %v1845, %v1842
        %v1918 = vpack.c.b16 %v1849, %v1846
        %v1919 = vpack.c.b16 %v1850, %v1847
        %v1920 = vpack.c.b16 %v1851, %v1848
        %v1921 = vpack.c.b16 %v1855, %v1852
        %v1922 = vpack.c.b16 %v1856, %v1853
        %v1923 = vpack.c.b16 %v1857, %v1854
        %v1924 = vpack.c.b16 %v1861, %v1858
        %v1925 = vpack.c.b16 %v1862, %v1859
        %v1926 = vpack.c.b16 %v1863, %v1860
        %v1927 = vpack.c.b16 %v1867, %v1864
        %v1928 = vpack.c.b16 %v1868, %v1865
        %v1929 = vpack.c.b16 %v1869, %v1866
        %v1930 = vpack.c.b16 %v1873, %v1870
        %v1931 = vpack.c.b16 %v1874, %v1871
        %v1932 = vpack.c.b16 %v1875, %v1872
        %v1933 = vpack.c.b16 %v1879, %v1876
        %v1934 = vpack.c.b16 %v1880, %v1877
        %v1935 = vpack.c.b16 %v1881, %v1878
        %v1936 = vpack.c.b16 %v1885, %v1882
        %v1937 = vpack.c.b16 %v1886, %v1883
        %v1938 = vpack.c.b16 %v1887, %v1884
        %v1939 = vpack.c.b16 %v1891, %v1888
        %v1940 = vpack.c.b16 %v1892, %v1889
        %v1941 = vpack.c.b16 %v1893, %v1890
        %v1942 = vpack.c.b16 %v1897, %v1894
        %v1943 = vpack.c.b16 %v1898, %v1895
        %v1944 = vpack.c.b16 %v1899, %v1896
        %v1945 = vpack.c.b16 %v1903, %v1900
        %v1946 = vpack.c.b16 %v1904, %v1901
        %v1947 = vpack.c.b16 %v1905, %v1902
        %v1948 = vpack.c.b16 %v1909, %v1906
        %v1949 = vpack.c.b16 %v1910, %v1907
        %v1950 = vpack.c.b16 %v1911, %v1908
        %v1991 = vsel %vm337, %v1780, 0
        %1993 = vmatpush.bf16.msra.mxu0 %v1933
        %1994 = vmatpush.bf16.msra.mxu0 %v1930
        %1995 = vmatpush.bf16.msra.mxu0 %v1927
        %1996 = vmatpush.bf16.msra.mxu0 %v1924
        %1997 = vmatpush.bf16.msra.mxu0 %v1921
        %1998 = vmatpush.bf16.msra.mxu0 %v1918
        %1999 = vmatpush.bf16.msra.mxu0 %v1915
        %2000 = vmatpush.bf16.msra.mxu0 %v1912
        %2001 = vmatmul.bf16.gmra.mxu0 %v1773
        %v2002 = vpop.f32.mrf.mxu0
        %v2003 = vadd.f32 0.0, %v2002
        %v2004 = vpop.f32.mrf.mxu0
        %v2005 = vadd.f32 0.0, %v2004
        %2006 = vdwg.mxu0
        %2007 = vmatpush.bf16.msra.mxu0 0
        %2008 = vmatpush.bf16.msra.mxu0 0
        %2009 = vmatpush.bf16.msra.mxu0 0
        %2010 = vmatpush.bf16.msra.mxu0 %v1948
        %2011 = vmatpush.bf16.msra.mxu0 %v1945
        %2012 = vmatpush.bf16.msra.mxu0 %v1942
        %2013 = vmatpush.bf16.msra.mxu0 %v1939
        %2014 = vmatpush.bf16.msra.mxu0 %v1936
        %2015 = vmatmul.bf16.gmra.mxu0 %v1991
        %v2016 = vpop.f32.mrf.mxu0
        %v2017 = vadd.f32 %v2003, %v2016
        %v2018 = vpop.f32.mrf.mxu0
        %v2019 = vadd.f32 %v2005, %v2018
        %2020 = vdwg.mxu0
        %2021 = vmatpush.bf16.msra.mxu0 %v1934
        %2022 = vmatpush.bf16.msra.mxu0 %v1931
        %2023 = vmatpush.bf16.msra.mxu0 %v1928
        %2024 = vmatpush.bf16.msra.mxu0 %v1925
        %2025 = vmatpush.bf16.msra.mxu0 %v1922
        %2026 = vmatpush.bf16.msra.mxu0 %v1919
        %2027 = vmatpush.bf16.msra.mxu0 %v1916
        %2028 = vmatpush.bf16.msra.mxu0 %v1913
        %2029 = vmatmul.bf16.gmra.mxu0 %v1773
        %v2030 = vpop.f32.mrf.mxu0
        %v2031 = vadd.f32 0.0, %v2030
        %v2032 = vpop.f32.mrf.mxu0
        %v2033 = vadd.f32 0.0, %v2032
        %2034 = vdwg.mxu0
        %2035 = vmatpush.bf16.msra.mxu0 0
        %2036 = vmatpush.bf16.msra.mxu0 0
        %2037 = vmatpush.bf16.msra.mxu0 0
        %2038 = vmatpush.bf16.msra.mxu0 %v1949
        %2039 = vmatpush.bf16.msra.mxu0 %v1946
        %2040 = vmatpush.bf16.msra.mxu0 %v1943
        %2041 = vmatpush.bf16.msra.mxu0 %v1940
        %2042 = vmatpush.bf16.msra.mxu0 %v1937
        %2043 = vmatmul.bf16.gmra.mxu0 %v1991
        %v2044 = vpop.f32.mrf.mxu0
        %v2045 = vadd.f32 %v2031, %v2044
        %v2046 = vpop.f32.mrf.mxu0
        %v2047 = vadd.f32 %v2033, %v2046
        %2048 = vdwg.mxu0
        %2049 = vmatpush.bf16.msra.mxu0 %v1935
        %2050 = vmatpush.bf16.msra.mxu0 %v1932
        %2051 = vmatpush.bf16.msra.mxu0 %v1929
        %2052 = vmatpush.bf16.msra.mxu0 %v1926
        %2053 = vmatpush.bf16.msra.mxu0 %v1923
        %2054 = vmatpush.bf16.msra.mxu0 %v1920
        %2055 = vmatpush.bf16.msra.mxu0 %v1917
        %2056 = vmatpush.bf16.msra.mxu0 %v1914
        %2057 = vmatmul.bf16.gmra.mxu0 %v1773
        %v2058 = vpop.f32.mrf.mxu0
        %v2059 = vadd.f32 0.0, %v2058
        %v2060 = vpop.f32.mrf.mxu0
        %v2061 = vadd.f32 0.0, %v2060
        %2062 = vdwg.mxu0
        %2063 = vmatpush.bf16.msra.mxu0 0
        %2064 = vmatpush.bf16.msra.mxu0 0
        %2065 = vmatpush.bf16.msra.mxu0 0
        %2066 = vmatpush.bf16.msra.mxu0 %v1950
        %2067 = vmatpush.bf16.msra.mxu0 %v1947
        %2068 = vmatpush.bf16.msra.mxu0 %v1944
        %2069 = vmatpush.bf16.msra.mxu0 %v1941
        %2070 = vmatpush.bf16.msra.mxu0 %v1938
        %2071 = vmatmul.bf16.gmra.mxu0 %v1991
        %v2072 = vpop.f32.mrf.mxu0
        %v2073 = vadd.f32 %v2059, %v2072
        %v2074 = vpop.f32.mrf.mxu0
        %v2075 = vadd.f32 %v2061, %v2074
        %2076 = vdwg.mxu0
        %v2129 = vunpack.c.l.b16 %v1656
        %v2130 = vunpack.c.h.b16 %v1656
        %v2131 = vunpack.c.l.b16 %v1657
        %v2132 = vunpack.c.l.b16 %v1658
        %v2133 = vunpack.c.h.b16 %v1658
        %v2134 = vunpack.c.l.b16 %v1659
        %v2135 = vunpack.c.l.b16 %v1660
        %v2136 = vunpack.c.h.b16 %v1660
        %v2137 = vunpack.c.l.b16 %v1661
        %v2138 = vunpack.c.l.b16 %v1662
        %v2139 = vunpack.c.h.b16 %v1662
        %v2140 = vunpack.c.l.b16 %v1663
        %v2141 = vunpack.c.l.b16 %v1664
        %v2142 = vunpack.c.h.b16 %v1664
        %v2143 = vunpack.c.l.b16 %v1665
        %v2144 = vunpack.c.l.b16 %v1666
        %v2145 = vunpack.c.h.b16 %v1666
        %v2146 = vunpack.c.l.b16 %v1667
        %v2147 = vunpack.c.l.b16 %v1668
        %v2148 = vunpack.c.h.b16 %v1668
        %v2149 = vunpack.c.l.b16 %v1669
        %v2150 = vunpack.c.l.b16 %v1670
        %v2151 = vunpack.c.h.b16 %v1670
        %v2152 = vunpack.c.l.b16 %v1671
        %v2153 = vunpack.c.l.b16 %v1672
        %v2154 = vunpack.c.h.b16 %v1672
        %v2155 = vunpack.c.l.b16 %v1673
        %v2156 = vunpack.c.l.b16 %v1674
        %v2157 = vunpack.c.h.b16 %v1674
        %v2158 = vunpack.c.l.b16 %v1675
        %v2159 = vunpack.c.l.b16 %v1676
        %v2160 = vunpack.c.h.b16 %v1676
        %v2161 = vunpack.c.l.b16 %v1677
        %v2162 = vunpack.c.l.b16 %v1678
        %v2163 = vunpack.c.h.b16 %v1678
        %v2164 = vunpack.c.l.b16 %v1679
        %v2165 = vunpack.c.l.b16 %v1680
        %v2166 = vunpack.c.h.b16 %v1680
        %v2167 = vunpack.c.l.b16 %v1681
        %v2168 = vunpack.c.l.b16 %v1682
        %v2169 = vunpack.c.h.b16 %v1682
        %v2170 = vunpack.c.l.b16 %v1683
        %v2171 = vunpack.c.l.b16 %v1684
        %v2172 = vunpack.c.h.b16 %v1684
        %v2173 = vunpack.c.l.b16 %v1685
        %v2174 = vunpack.c.l.b16 %v1686
        %v2175 = vunpack.c.h.b16 %v1686
        %v2176 = vunpack.c.l.b16 %v1687
        %v2177 = vunpack.c.l.b16 %v1688
        %v2178 = vunpack.c.h.b16 %v1688
        %v2179 = vunpack.c.l.b16 %v1689
        %v2180 = vunpack.c.l.b16 %v1690
        %v2181 = vunpack.c.h.b16 %v1690
        %v2182 = vunpack.c.l.b16 %v1691
        %v2183 = vunpack.c.l.b16 %v1692
        %v2184 = vunpack.c.h.b16 %v1692
        %v2185 = vunpack.c.l.b16 %v1693
        %v2186 = vunpack.c.l.b16 %v1694
        %v2187 = vunpack.c.h.b16 %v1694
        %v2188 = vunpack.c.l.b16 %v1695
        %v2189 = vunpack.c.l.b16 %v1696
        %v2190 = vunpack.c.h.b16 %v1696
        %v2191 = vunpack.c.l.b16 %v1697
        %v2192 = vunpack.c.l.b16 %v1698
        %v2193 = vunpack.c.h.b16 %v1698
        %v2194 = vunpack.c.l.b16 %v1699
        %v2195 = vunpack.c.l.b16 %v1700
        %v2196 = vunpack.c.h.b16 %v1700
        %v2197 = vunpack.c.l.b16 %v1701
        %v2198 = vunpack.c.l.b16 %v1702
        %v2199 = vunpack.c.h.b16 %v1702
        %v2200 = vunpack.c.l.b16 %v1703
        %v2201 = vunpack.c.l.b16 %v1704
        %v2202 = vunpack.c.h.b16 %v1704
        %v2203 = vunpack.c.l.b16 %v1705
        %v2204 = vunpack.c.l.b16 %v1706
        %v2205 = vunpack.c.h.b16 %v1706
        %v2206 = vunpack.c.l.b16 %v1707
        %v2207 = vpack.c.b16 %v2132, %v2129
        %v2208 = vpack.c.b16 %v2133, %v2130
        %v2209 = vpack.c.b16 %v2134, %v2131
        %v2210 = vpack.c.b16 %v2138, %v2135
        %v2211 = vpack.c.b16 %v2139, %v2136
        %v2212 = vpack.c.b16 %v2140, %v2137
        %v2213 = vpack.c.b16 %v2144, %v2141
        %v2214 = vpack.c.b16 %v2145, %v2142
        %v2215 = vpack.c.b16 %v2146, %v2143
        %v2216 = vpack.c.b16 %v2150, %v2147
        %v2217 = vpack.c.b16 %v2151, %v2148
        %v2218 = vpack.c.b16 %v2152, %v2149
        %v2219 = vpack.c.b16 %v2156, %v2153
        %v2220 = vpack.c.b16 %v2157, %v2154
        %v2221 = vpack.c.b16 %v2158, %v2155
        %v2222 = vpack.c.b16 %v2162, %v2159
        %v2223 = vpack.c.b16 %v2163, %v2160
        %v2224 = vpack.c.b16 %v2164, %v2161
        %v2225 = vpack.c.b16 %v2168, %v2165
        %v2226 = vpack.c.b16 %v2169, %v2166
        %v2227 = vpack.c.b16 %v2170, %v2167
        %v2228 = vpack.c.b16 %v2174, %v2171
        %v2229 = vpack.c.b16 %v2175, %v2172
        %v2230 = vpack.c.b16 %v2176, %v2173
        %v2231 = vpack.c.b16 %v2180, %v2177
        %v2232 = vpack.c.b16 %v2181, %v2178
        %v2233 = vpack.c.b16 %v2182, %v2179
        %v2234 = vpack.c.b16 %v2186, %v2183
        %v2235 = vpack.c.b16 %v2187, %v2184
        %v2236 = vpack.c.b16 %v2188, %v2185
        %v2237 = vpack.c.b16 %v2192, %v2189
        %v2238 = vpack.c.b16 %v2193, %v2190
        %v2239 = vpack.c.b16 %v2194, %v2191
        %v2240 = vpack.c.b16 %v2198, %v2195
        %v2241 = vpack.c.b16 %v2199, %v2196
        %v2242 = vpack.c.b16 %v2200, %v2197
        %v2243 = vpack.c.b16 %v2204, %v2201
        %v2244 = vpack.c.b16 %v2205, %v2202
        %v2245 = vpack.c.b16 %v2206, %v2203
        %v2286 = vsel %vm337, %v1655, 0
        %2288 = vmatpush.bf16.msra.mxu0 %v2228
        %2289 = vmatpush.bf16.msra.mxu0 %v2225
        %2290 = vmatpush.bf16.msra.mxu0 %v2222
        %2291 = vmatpush.bf16.msra.mxu0 %v2219
        %2292 = vmatpush.bf16.msra.mxu0 %v2216
        %2293 = vmatpush.bf16.msra.mxu0 %v2213
        %2294 = vmatpush.bf16.msra.mxu0 %v2210
        %2295 = vmatpush.bf16.msra.mxu0 %v2207
        %2296 = vmatmul.bf16.gmra.mxu0 %v1654
        %v2297 = vpop.f32.mrf.mxu0
        %v2298 = vadd.f32 %v2017, %v2297
        %v2299 = vpop.f32.mrf.mxu0
        %v2300 = vadd.f32 %v2019, %v2299
        %2301 = vdwg.mxu0
        %2302 = vmatpush.bf16.msra.mxu0 0
        %2303 = vmatpush.bf16.msra.mxu0 0
        %2304 = vmatpush.bf16.msra.mxu0 0
        %2305 = vmatpush.bf16.msra.mxu0 %v2243
        %2306 = vmatpush.bf16.msra.mxu0 %v2240
        %2307 = vmatpush.bf16.msra.mxu0 %v2237
        %2308 = vmatpush.bf16.msra.mxu0 %v2234
        %2309 = vmatpush.bf16.msra.mxu0 %v2231
        %2310 = vmatmul.bf16.gmra.mxu0 %v2286
        %v2311 = vpop.f32.mrf.mxu0
        %v2312 = vadd.f32 %v2298, %v2311
        %v2313 = vpop.f32.mrf.mxu0
        %v2314 = vadd.f32 %v2300, %v2313
        %2315 = vdwg.mxu0
        %2316 = vmatpush.bf16.msra.mxu0 %v2229
        %2317 = vmatpush.bf16.msra.mxu0 %v2226
        %2318 = vmatpush.bf16.msra.mxu0 %v2223
        %2319 = vmatpush.bf16.msra.mxu0 %v2220
        %2320 = vmatpush.bf16.msra.mxu0 %v2217
        %2321 = vmatpush.bf16.msra.mxu0 %v2214
        %2322 = vmatpush.bf16.msra.mxu0 %v2211
        %2323 = vmatpush.bf16.msra.mxu0 %v2208
        %2324 = vmatmul.bf16.gmra.mxu0 %v1654
        %v2325 = vpop.f32.mrf.mxu0
        %v2326 = vadd.f32 %v2045, %v2325
        %v2327 = vpop.f32.mrf.mxu0
        %v2328 = vadd.f32 %v2047, %v2327
        %2329 = vdwg.mxu0
        %2330 = vmatpush.bf16.msra.mxu0 0
        %2331 = vmatpush.bf16.msra.mxu0 0
        %2332 = vmatpush.bf16.msra.mxu0 0
        %2333 = vmatpush.bf16.msra.mxu0 %v2244
        %2334 = vmatpush.bf16.msra.mxu0 %v2241
        %2335 = vmatpush.bf16.msra.mxu0 %v2238
        %2336 = vmatpush.bf16.msra.mxu0 %v2235
        %2337 = vmatpush.bf16.msra.mxu0 %v2232
        %2338 = vmatmul.bf16.gmra.mxu0 %v2286
        %v2339 = vpop.f32.mrf.mxu0
        %v2340 = vadd.f32 %v2326, %v2339
        %v2341 = vpop.f32.mrf.mxu0
        %v2342 = vadd.f32 %v2328, %v2341
        %2343 = vdwg.mxu0
        %2344 = vmatpush.bf16.msra.mxu0 %v2230
        %2345 = vmatpush.bf16.msra.mxu0 %v2227
        %2346 = vmatpush.bf16.msra.mxu0 %v2224
        %2347 = vmatpush.bf16.msra.mxu0 %v2221
        %2348 = vmatpush.bf16.msra.mxu0 %v2218
        %2349 = vmatpush.bf16.msra.mxu0 %v2215
        %2350 = vmatpush.bf16.msra.mxu0 %v2212
        %2351 = vmatpush.bf16.msra.mxu0 %v2209
        %2352 = vmatmul.bf16.gmra.mxu0 %v1654
        %v2353 = vpop.f32.mrf.mxu0
        %v2354 = vadd.f32 %v2073, %v2353
        %v2355 = vpop.f32.mrf.mxu0
        %v2356 = vadd.f32 %v2075, %v2355
        %2357 = vdwg.mxu0
        %2358 = vmatpush.bf16.msra.mxu0 0
        %2359 = vmatpush.bf16.msra.mxu0 0
        %2360 = vmatpush.bf16.msra.mxu0 0
        %2361 = vmatpush.bf16.msra.mxu0 %v2245
        %2362 = vmatpush.bf16.msra.mxu0 %v2242
        %2363 = vmatpush.bf16.msra.mxu0 %v2239
        %2364 = vmatpush.bf16.msra.mxu0 %v2236
        %2365 = vmatpush.bf16.msra.mxu0 %v2233
        %2366 = vmatmul.bf16.gmra.mxu0 %v2286
        %v2367 = vpop.f32.mrf.mxu0
        %v2368 = vadd.f32 %v2354, %v2367
        %v2369 = vpop.f32.mrf.mxu0
        %v2370 = vadd.f32 %v2356, %v2369
        %2371 = vdwg.mxu0
        %v2372 = vld [vmem:[#allocation3] sm:$0xfc]
        %v2373 = vld [vmem:[#allocation3 + $0x8] sm:$0xfc]
        %v2374 = vld [vmem:[#allocation3 + $0x10] sm:$0x7]
        %v2375 = vld [vmem:[#allocation3 + $0x18] sm:$0x7]
        %v2376 = vpack.c.bf16 %v2374, %v2372
        %v2377 = vpack.c.bf16 %v2375, %v2373
        %s2378 = scalar_lea.vmem %s3, 624
        %v2379 = vld [vmem:[%s2378] sm:$0xff]
        %v2380 = vld [vmem:[%s2378 + $0x8] sm:$0xf]
        %v2381 = vld [vmem:[%s2378 + $0xc] sm:$0xff]
        %v2382 = vld [vmem:[%s2378 + $0x14] sm:$0xf]
        %v2383 = vld [vmem:[%s2378 + $0x18] sm:$0xff]
        %v2384 = vld [vmem:[%s2378 + $0x20] sm:$0xf]
        %v2385 = vld [vmem:[%s2378 + $0x24] sm:$0xff]
        %v2386 = vld [vmem:[%s2378 + $0x2c] sm:$0xf]
        %v2387 = vld [vmem:[%s2378 + $0x30] sm:$0xff]
        %v2388 = vld [vmem:[%s2378 + $0x38] sm:$0xf]
        %v2389 = vld [vmem:[%s2378 + $0x3c] sm:$0xff]
        %v2390 = vld [vmem:[%s2378 + $0x44] sm:$0xf]
        %v2391 = vld [vmem:[%s2378 + $0x48] sm:$0xff]
        %v2392 = vld [vmem:[%s2378 + $0x50] sm:$0xf]
        %v2393 = vld [vmem:[%s2378 + $0x54] sm:$0xff]
        %v2394 = vld [vmem:[%s2378 + $0x5c] sm:$0xf]
        %v2395 = vld [vmem:[%s2378 + $0x60] sm:$0xff]
        %v2396 = vld [vmem:[%s2378 + $0x68] sm:$0xf]
        %v2397 = vld [vmem:[%s2378 + $0x6c] sm:$0xff]
        %v2398 = vld [vmem:[%s2378 + $0x74] sm:$0xf]
        %v2399 = vld [vmem:[%s2378 + $0x78] sm:$0xff]
        %v2400 = vld [vmem:[%s2378 + $0x80] sm:$0xf]
        %v2401 = vld [vmem:[%s2378 + $0x84] sm:$0xff]
        %v2402 = vld [vmem:[%s2378 + $0x8c] sm:$0xf]
        %v2403 = vld [vmem:[%s2378 + $0x90] sm:$0xff]
        %v2404 = vld [vmem:[%s2378 + $0x98] sm:$0xf]
        %v2405 = vld [vmem:[%s2378 + $0x9c] sm:$0xff]
        %v2406 = vld [vmem:[%s2378 + $0xa4] sm:$0xf]
        %v2407 = vld [vmem:[%s2378 + $0xa8] sm:$0xff]
        %v2408 = vld [vmem:[%s2378 + $0xb0] sm:$0xf]
        %v2409 = vld [vmem:[%s2378 + $0xb4] sm:$0xff]
        %v2410 = vld [vmem:[%s2378 + $0xbc] sm:$0xf]
        %v2411 = vld [vmem:[%s2378 + $0xc0] sm:$0xff]
        %v2412 = vld [vmem:[%s2378 + $0xc8] sm:$0xf]
        %v2413 = vld [vmem:[%s2378 + $0xcc] sm:$0xff]
        %v2414 = vld [vmem:[%s2378 + $0xd4] sm:$0xf]
        %v2415 = vld [vmem:[%s2378 + $0xd8] sm:$0xff]
        %v2416 = vld [vmem:[%s2378 + $0xe0] sm:$0xf]
        %v2417 = vld [vmem:[%s2378 + $0xe4] sm:$0xff]
        %v2418 = vld [vmem:[%s2378 + $0xec] sm:$0xf]
        %v2419 = vld [vmem:[%s2378 + $0xf0] sm:$0xff]
        %v2420 = vld [vmem:[%s2378 + $0xf8] sm:$0xf]
        %v2421 = vld [vmem:[%s2378 + $0xfc] sm:$0xff]
        %v2422 = vld [vmem:[%s2378 + $0x104] sm:$0xf]
        %v2423 = vld [vmem:[%s2378 + $0x108] sm:$0xff]
        %v2424 = vld [vmem:[%s2378 + $0x110] sm:$0xf]
        %v2425 = vld [vmem:[%s2378 + $0x114] sm:$0xff]
        %v2426 = vld [vmem:[%s2378 + $0x11c] sm:$0xf]
        %v2427 = vld [vmem:[%s2378 + $0x120] sm:$0xff]
        %v2428 = vld [vmem:[%s2378 + $0x128] sm:$0xf]
        %v2429 = vld [vmem:[%s2378 + $0x12c] sm:$0xff]
        %v2430 = vld [vmem:[%s2378 + $0x134] sm:$0xf]
        %v2433 = vrot.slane %v2376, 1
        %v2434 = vrot.slane %v2377, 1
        %v2488 = vunpack.c.l.b16 %v2379
        %v2489 = vunpack.c.h.b16 %v2379
        %v2490 = vunpack.c.l.b16 %v2380
        %v2491 = vunpack.c.l.b16 %v2381
        %v2492 = vunpack.c.h.b16 %v2381
        %v2493 = vunpack.c.l.b16 %v2382
        %v2494 = vunpack.c.l.b16 %v2383
        %v2495 = vunpack.c.h.b16 %v2383
        %v2496 = vunpack.c.l.b16 %v2384
        %v2497 = vunpack.c.l.b16 %v2385
        %v2498 = vunpack.c.h.b16 %v2385
        %v2499 = vunpack.c.l.b16 %v2386
        %v2500 = vunpack.c.l.b16 %v2387
        %v2501 = vunpack.c.h.b16 %v2387
        %v2502 = vunpack.c.l.b16 %v2388
        %v2503 = vunpack.c.l.b16 %v2389
        %v2504 = vunpack.c.h.b16 %v2389
        %v2505 = vunpack.c.l.b16 %v2390
        %v2506 = vunpack.c.l.b16 %v2391
        %v2507 = vunpack.c.h.b16 %v2391
        %v2508 = vunpack.c.l.b16 %v2392
        %v2509 = vunpack.c.l.b16 %v2393
        %v2510 = vunpack.c.h.b16 %v2393
        %v2511 = vunpack.c.l.b16 %v2394
        %v2512 = vunpack.c.l.b16 %v2395
        %v2513 = vunpack.c.h.b16 %v2395
        %v2514 = vunpack.c.l.b16 %v2396
        %v2515 = vunpack.c.l.b16 %v2397
        %v2516 = vunpack.c.h.b16 %v2397
        %v2517 = vunpack.c.l.b16 %v2398
        %v2518 = vunpack.c.l.b16 %v2399
        %v2519 = vunpack.c.h.b16 %v2399
        %v2520 = vunpack.c.l.b16 %v2400
        %v2521 = vunpack.c.l.b16 %v2401
        %v2522 = vunpack.c.h.b16 %v2401
        %v2523 = vunpack.c.l.b16 %v2402
        %v2524 = vunpack.c.l.b16 %v2403
        %v2525 = vunpack.c.h.b16 %v2403
        %v2526 = vunpack.c.l.b16 %v2404
        %v2527 = vunpack.c.l.b16 %v2405
        %v2528 = vunpack.c.h.b16 %v2405
        %v2529 = vunpack.c.l.b16 %v2406
        %v2530 = vunpack.c.l.b16 %v2407
        %v2531 = vunpack.c.h.b16 %v2407
        %v2532 = vunpack.c.l.b16 %v2408
        %v2533 = vunpack.c.l.b16 %v2409
        %v2534 = vunpack.c.h.b16 %v2409
        %v2535 = vunpack.c.l.b16 %v2410
        %v2536 = vunpack.c.l.b16 %v2411
        %v2537 = vunpack.c.h.b16 %v2411
        %v2538 = vunpack.c.l.b16 %v2412
        %v2539 = vunpack.c.l.b16 %v2413
        %v2540 = vunpack.c.h.b16 %v2413
        %v2541 = vunpack.c.l.b16 %v2414
        %v2542 = vunpack.c.l.b16 %v2415
        %v2543 = vunpack.c.h.b16 %v2415
        %v2544 = vunpack.c.l.b16 %v2416
        %v2545 = vunpack.c.l.b16 %v2417
        %v2546 = vunpack.c.h.b16 %v2417
        %v2547 = vunpack.c.l.b16 %v2418
        %v2548 = vunpack.c.l.b16 %v2419
        %v2549 = vunpack.c.h.b16 %v2419
        %v2550 = vunpack.c.l.b16 %v2420
        %v2551 = vunpack.c.l.b16 %v2421
        %v2552 = vunpack.c.h.b16 %v2421
        %v2553 = vunpack.c.l.b16 %v2422
        %v2554 = vunpack.c.l.b16 %v2423
        %v2555 = vunpack.c.h.b16 %v2423
        %v2556 = vunpack.c.l.b16 %v2424
        %v2557 = vunpack.c.l.b16 %v2425
        %v2558 = vunpack.c.h.b16 %v2425
        %v2559 = vunpack.c.l.b16 %v2426
        %v2560 = vunpack.c.l.b16 %v2427
        %v2561 = vunpack.c.h.b16 %v2427
        %v2562 = vunpack.c.l.b16 %v2428
        %v2563 = vunpack.c.l.b16 %v2429
        %v2564 = vunpack.c.h.b16 %v2429
        %v2565 = vunpack.c.l.b16 %v2430
        %v2566 = vpack.c.b16 %v2491, %v2488
        %v2567 = vpack.c.b16 %v2492, %v2489
        %v2568 = vpack.c.b16 %v2493, %v2490
        %v2569 = vpack.c.b16 %v2497, %v2494
        %v2570 = vpack.c.b16 %v2498, %v2495
        %v2571 = vpack.c.b16 %v2499, %v2496
        %v2572 = vpack.c.b16 %v2503, %v2500
        %v2573 = vpack.c.b16 %v2504, %v2501
        %v2574 = vpack.c.b16 %v2505, %v2502
        %v2575 = vpack.c.b16 %v2509, %v2506
        %v2576 = vpack.c.b16 %v2510, %v2507
        %v2577 = vpack.c.b16 %v2511, %v2508
        %v2578 = vpack.c.b16 %v2515, %v2512
        %v2579 = vpack.c.b16 %v2516, %v2513
        %v2580 = vpack.c.b16 %v2517, %v2514
        %v2581 = vpack.c.b16 %v2521, %v2518
        %v2582 = vpack.c.b16 %v2522, %v2519
        %v2583 = vpack.c.b16 %v2523, %v2520
        %v2584 = vpack.c.b16 %v2527, %v2524
        %v2585 = vpack.c.b16 %v2528, %v2525
        %v2586 = vpack.c.b16 %v2529, %v2526
        %v2587 = vpack.c.b16 %v2533, %v2530
        %v2588 = vpack.c.b16 %v2534, %v2531
        %v2589 = vpack.c.b16 %v2535, %v2532
        %v2590 = vpack.c.b16 %v2539, %v2536
        %v2591 = vpack.c.b16 %v2540, %v2537
        %v2592 = vpack.c.b16 %v2541, %v2538
        %v2593 = vpack.c.b16 %v2545, %v2542
        %v2594 = vpack.c.b16 %v2546, %v2543
        %v2595 = vpack.c.b16 %v2547, %v2544
        %v2596 = vpack.c.b16 %v2551, %v2548
        %v2597 = vpack.c.b16 %v2552, %v2549
        %v2598 = vpack.c.b16 %v2553, %v2550
        %v2599 = vpack.c.b16 %v2557, %v2554
        %v2600 = vpack.c.b16 %v2558, %v2555
        %v2601 = vpack.c.b16 %v2559, %v2556
        %v2602 = vpack.c.b16 %v2563, %v2560
        %v2603 = vpack.c.b16 %v2564, %v2561
        %v2604 = vpack.c.b16 %v2565, %v2562
        %v2645 = vsel %vm337, %v2434, 0
        %2647 = vmatpush.bf16.msra.mxu0 %v2587
        %2648 = vmatpush.bf16.msra.mxu0 %v2584
        %2649 = vmatpush.bf16.msra.mxu0 %v2581
        %2650 = vmatpush.bf16.msra.mxu0 %v2578
        %2651 = vmatpush.bf16.msra.mxu0 %v2575
        %2652 = vmatpush.bf16.msra.mxu0 %v2572
        %2653 = vmatpush.bf16.msra.mxu0 %v2569
        %2654 = vmatpush.bf16.msra.mxu0 %v2566
        %2655 = vmatmul.bf16.gmra.mxu0 %v2433
        %v2656 = vpop.f32.mrf.mxu0
        %v2657 = vadd.f32 0.0, %v2656
        %v2658 = vpop.f32.mrf.mxu0
        %v2659 = vadd.f32 0.0, %v2658
        %2660 = vdwg.mxu0
        %2661 = vmatpush.bf16.msra.mxu0 0
        %2662 = vmatpush.bf16.msra.mxu0 0
        %2663 = vmatpush.bf16.msra.mxu0 0
        %2664 = vmatpush.bf16.msra.mxu0 %v2602
        %2665 = vmatpush.bf16.msra.mxu0 %v2599
        %2666 = vmatpush.bf16.msra.mxu0 %v2596
        %2667 = vmatpush.bf16.msra.mxu0 %v2593
        %2668 = vmatpush.bf16.msra.mxu0 %v2590
        %2669 = vmatmul.bf16.gmra.mxu0 %v2645
        %v2670 = vpop.f32.mrf.mxu0
        %v2671 = vadd.f32 %v2657, %v2670
        %v2672 = vpop.f32.mrf.mxu0
        %v2673 = vadd.f32 %v2659, %v2672
        %2674 = vdwg.mxu0
        %2675 = vmatpush.bf16.msra.mxu0 %v2588
        %2676 = vmatpush.bf16.msra.mxu0 %v2585
        %2677 = vmatpush.bf16.msra.mxu0 %v2582
        %2678 = vmatpush.bf16.msra.mxu0 %v2579
        %2679 = vmatpush.bf16.msra.mxu0 %v2576
        %2680 = vmatpush.bf16.msra.mxu0 %v2573
        %2681 = vmatpush.bf16.msra.mxu0 %v2570
        %2682 = vmatpush.bf16.msra.mxu0 %v2567
        %2683 = vmatmul.bf16.gmra.mxu0 %v2433
        %v2684 = vpop.f32.mrf.mxu0
        %v2685 = vadd.f32 0.0, %v2684
        %v2686 = vpop.f32.mrf.mxu0
        %v2687 = vadd.f32 0.0, %v2686
        %2688 = vdwg.mxu0
        %2689 = vmatpush.bf16.msra.mxu0 0
        %2690 = vmatpush.bf16.msra.mxu0 0
        %2691 = vmatpush.bf16.msra.mxu0 0
        %2692 = vmatpush.bf16.msra.mxu0 %v2603
        %2693 = vmatpush.bf16.msra.mxu0 %v2600
        %2694 = vmatpush.bf16.msra.mxu0 %v2597
        %2695 = vmatpush.bf16.msra.mxu0 %v2594
        %2696 = vmatpush.bf16.msra.mxu0 %v2591
        %2697 = vmatmul.bf16.gmra.mxu0 %v2645
        %v2698 = vpop.f32.mrf.mxu0
        %v2699 = vadd.f32 %v2685, %v2698
        %v2700 = vpop.f32.mrf.mxu0
        %v2701 = vadd.f32 %v2687, %v2700
        %2702 = vdwg.mxu0
        %2703 = vmatpush.bf16.msra.mxu0 %v2589
        %2704 = vmatpush.bf16.msra.mxu0 %v2586
        %2705 = vmatpush.bf16.msra.mxu0 %v2583
        %2706 = vmatpush.bf16.msra.mxu0 %v2580
        %2707 = vmatpush.bf16.msra.mxu0 %v2577
        %2708 = vmatpush.bf16.msra.mxu0 %v2574
        %2709 = vmatpush.bf16.msra.mxu0 %v2571
        %2710 = vmatpush.bf16.msra.mxu0 %v2568
        %2711 = vmatmul.bf16.gmra.mxu0 %v2433
        %v2712 = vpop.f32.mrf.mxu0
        %v2713 = vadd.f32 0.0, %v2712
        %v2714 = vpop.f32.mrf.mxu0
        %v2715 = vadd.f32 0.0, %v2714
        %2716 = vdwg.mxu0
        %2717 = vmatpush.bf16.msra.mxu0 0
        %2718 = vmatpush.bf16.msra.mxu0 0
        %2719 = vmatpush.bf16.msra.mxu0 0
        %2720 = vmatpush.bf16.msra.mxu0 %v2604
        %2721 = vmatpush.bf16.msra.mxu0 %v2601
        %2722 = vmatpush.bf16.msra.mxu0 %v2598
        %2723 = vmatpush.bf16.msra.mxu0 %v2595
        %2724 = vmatpush.bf16.msra.mxu0 %v2592
        %2725 = vmatmul.bf16.gmra.mxu0 %v2645
        %v2726 = vpop.f32.mrf.mxu0
        %v2727 = vadd.f32 %v2713, %v2726
        %v2728 = vpop.f32.mrf.mxu0
        %v2729 = vadd.f32 %v2715, %v2728
        %2730 = vdwg.mxu0
        %v2731 = vadd.f32 %v2312, %v2671
        %v2732 = vadd.f32 %v2340, %v2699
        %v2733 = vadd.f32 %v2368, %v2727
        %v2734 = vadd.f32 %v2314, %v2673
        %v2735 = vadd.f32 %v2342, %v2701
        %v2736 = vadd.f32 %v2370, %v2729
        %v2737 = vld [vmem:[#allocation3] sm:$0xf8]
        %v2738 = vld [vmem:[#allocation3 + $0x8] sm:$0xf8]
        %v2739 = vld [vmem:[#allocation3 + $0x10] sm:$0xf]
        %v2740 = vld [vmem:[#allocation3 + $0x18] sm:$0xf]
        %v2741 = vpack.c.bf16 %v2739, %v2737
        %v2742 = vpack.c.bf16 %v2740, %v2738
        %s2743 = scalar_lea.vmem %s3, 936
        %v2744 = vld [vmem:[%s2743] sm:$0xff]
        %v2745 = vld [vmem:[%s2743 + $0x8] sm:$0xf]
        %v2746 = vld [vmem:[%s2743 + $0xc] sm:$0xff]
        %v2747 = vld [vmem:[%s2743 + $0x14] sm:$0xf]
        %v2748 = vld [vmem:[%s2743 + $0x18] sm:$0xff]
        %v2749 = vld [vmem:[%s2743 + $0x20] sm:$0xf]
        %v2750 = vld [vmem:[%s2743 + $0x24] sm:$0xff]
        %v2751 = vld [vmem:[%s2743 + $0x2c] sm:$0xf]
        %v2752 = vld [vmem:[%s2743 + $0x30] sm:$0xff]
        %v2753 = vld [vmem:[%s2743 + $0x38] sm:$0xf]
        %v2754 = vld [vmem:[%s2743 + $0x3c] sm:$0xff]
        %v2755 = vld [vmem:[%s2743 + $0x44] sm:$0xf]
        %v2756 = vld [vmem:[%s2743 + $0x48] sm:$0xff]
        %v2757 = vld [vmem:[%s2743 + $0x50] sm:$0xf]
        %v2758 = vld [vmem:[%s2743 + $0x54] sm:$0xff]
        %v2759 = vld [vmem:[%s2743 + $0x5c] sm:$0xf]
        %v2760 = vld [vmem:[%s2743 + $0x60] sm:$0xff]
        %v2761 = vld [vmem:[%s2743 + $0x68] sm:$0xf]
        %v2762 = vld [vmem:[%s2743 + $0x6c] sm:$0xff]
        %v2763 = vld [vmem:[%s2743 + $0x74] sm:$0xf]
        %v2764 = vld [vmem:[%s2743 + $0x78] sm:$0xff]
        %v2765 = vld [vmem:[%s2743 + $0x80] sm:$0xf]
        %v2766 = vld [vmem:[%s2743 + $0x84] sm:$0xff]
        %v2767 = vld [vmem:[%s2743 + $0x8c] sm:$0xf]
        %v2768 = vld [vmem:[%s2743 + $0x90] sm:$0xff]
        %v2769 = vld [vmem:[%s2743 + $0x98] sm:$0xf]
        %v2770 = vld [vmem:[%s2743 + $0x9c] sm:$0xff]
        %v2771 = vld [vmem:[%s2743 + $0xa4] sm:$0xf]
        %v2772 = vld [vmem:[%s2743 + $0xa8] sm:$0xff]
        %v2773 = vld [vmem:[%s2743 + $0xb0] sm:$0xf]
        %v2774 = vld [vmem:[%s2743 + $0xb4] sm:$0xff]
        %v2775 = vld [vmem:[%s2743 + $0xbc] sm:$0xf]
        %v2776 = vld [vmem:[%s2743 + $0xc0] sm:$0xff]
        %v2777 = vld [vmem:[%s2743 + $0xc8] sm:$0xf]
        %v2778 = vld [vmem:[%s2743 + $0xcc] sm:$0xff]
        %v2779 = vld [vmem:[%s2743 + $0xd4] sm:$0xf]
        %v2780 = vld [vmem:[%s2743 + $0xd8] sm:$0xff]
        %v2781 = vld [vmem:[%s2743 + $0xe0] sm:$0xf]
        %v2782 = vld [vmem:[%s2743 + $0xe4] sm:$0xff]
        %v2783 = vld [vmem:[%s2743 + $0xec] sm:$0xf]
        %v2784 = vld [vmem:[%s2743 + $0xf0] sm:$0xff]
        %v2785 = vld [vmem:[%s2743 + $0xf8] sm:$0xf]
        %v2786 = vld [vmem:[%s2743 + $0xfc] sm:$0xff]
        %v2787 = vld [vmem:[%s2743 + $0x104] sm:$0xf]
        %v2788 = vld [vmem:[%s2743 + $0x108] sm:$0xff]
        %v2789 = vld [vmem:[%s2743 + $0x110] sm:$0xf]
        %v2790 = vld [vmem:[%s2743 + $0x114] sm:$0xff]
        %v2791 = vld [vmem:[%s2743 + $0x11c] sm:$0xf]
        %v2792 = vld [vmem:[%s2743 + $0x120] sm:$0xff]
        %v2793 = vld [vmem:[%s2743 + $0x128] sm:$0xf]
        %v2794 = vld [vmem:[%s2743 + $0x12c] sm:$0xff]
        %v2795 = vld [vmem:[%s2743 + $0x134] sm:$0xf]
        %v2797 = vshrl.u32 %v2741, 16
        %v2799 = vrot.slane %v2797, 1
        %v2800 = vshll.u32 %v2741, 16
        %v2802 = vrot.slane %v2800, 2
        %v2803 = vor.u32 %v2799, %v2802
        %v2805 = vshrl.u32 %v2742, 16
        %v2807 = vrot.slane %v2805, 1
        %v2808 = vshll.u32 %v2742, 16
        %v2810 = vrot.slane %v2808, 2
        %v2811 = vor.u32 %v2807, %v2810
        %v2865 = vunpack.c.l.b16 %v2744
        %v2866 = vunpack.c.h.b16 %v2744
        %v2867 = vunpack.c.l.b16 %v2745
        %v2868 = vunpack.c.l.b16 %v2746
        %v2869 = vunpack.c.h.b16 %v2746
        %v2870 = vunpack.c.l.b16 %v2747
        %v2871 = vunpack.c.l.b16 %v2748
        %v2872 = vunpack.c.h.b16 %v2748
        %v2873 = vunpack.c.l.b16 %v2749
        %v2874 = vunpack.c.l.b16 %v2750
        %v2875 = vunpack.c.h.b16 %v2750
        %v2876 = vunpack.c.l.b16 %v2751
        %v2877 = vunpack.c.l.b16 %v2752
        %v2878 = vunpack.c.h.b16 %v2752
        %v2879 = vunpack.c.l.b16 %v2753
        %v2880 = vunpack.c.l.b16 %v2754
        %v2881 = vunpack.c.h.b16 %v2754
        %v2882 = vunpack.c.l.b16 %v2755
        %v2883 = vunpack.c.l.b16 %v2756
        %v2884 = vunpack.c.h.b16 %v2756
        %v2885 = vunpack.c.l.b16 %v2757
        %v2886 = vunpack.c.l.b16 %v2758
        %v2887 = vunpack.c.h.b16 %v2758
        %v2888 = vunpack.c.l.b16 %v2759
        %v2889 = vunpack.c.l.b16 %v2760
        %v2890 = vunpack.c.h.b16 %v2760
        %v2891 = vunpack.c.l.b16 %v2761
        %v2892 = vunpack.c.l.b16 %v2762
        %v2893 = vunpack.c.h.b16 %v2762
        %v2894 = vunpack.c.l.b16 %v2763
        %v2895 = vunpack.c.l.b16 %v2764
        %v2896 = vunpack.c.h.b16 %v2764
        %v2897 = vunpack.c.l.b16 %v2765
        %v2898 = vunpack.c.l.b16 %v2766
        %v2899 = vunpack.c.h.b16 %v2766
        %v2900 = vunpack.c.l.b16 %v2767
        %v2901 = vunpack.c.l.b16 %v2768
        %v2902 = vunpack.c.h.b16 %v2768
        %v2903 = vunpack.c.l.b16 %v2769
        %v2904 = vunpack.c.l.b16 %v2770
        %v2905 = vunpack.c.h.b16 %v2770
        %v2906 = vunpack.c.l.b16 %v2771
        %v2907 = vunpack.c.l.b16 %v2772
        %v2908 = vunpack.c.h.b16 %v2772
        %v2909 = vunpack.c.l.b16 %v2773
        %v2910 = vunpack.c.l.b16 %v2774
        %v2911 = vunpack.c.h.b16 %v2774
        %v2912 = vunpack.c.l.b16 %v2775
        %v2913 = vunpack.c.l.b16 %v2776
        %v2914 = vunpack.c.h.b16 %v2776
        %v2915 = vunpack.c.l.b16 %v2777
        %v2916 = vunpack.c.l.b16 %v2778
        %v2917 = vunpack.c.h.b16 %v2778
        %v2918 = vunpack.c.l.b16 %v2779
        %v2919 = vunpack.c.l.b16 %v2780
        %v2920 = vunpack.c.h.b16 %v2780
        %v2921 = vunpack.c.l.b16 %v2781
        %v2922 = vunpack.c.l.b16 %v2782
        %v2923 = vunpack.c.h.b16 %v2782
        %v2924 = vunpack.c.l.b16 %v2783
        %v2925 = vunpack.c.l.b16 %v2784
        %v2926 = vunpack.c.h.b16 %v2784
        %v2927 = vunpack.c.l.b16 %v2785
        %v2928 = vunpack.c.l.b16 %v2786
        %v2929 = vunpack.c.h.b16 %v2786
        %v2930 = vunpack.c.l.b16 %v2787
        %v2931 = vunpack.c.l.b16 %v2788
        %v2932 = vunpack.c.h.b16 %v2788
        %v2933 = vunpack.c.l.b16 %v2789
        %v2934 = vunpack.c.l.b16 %v2790
        %v2935 = vunpack.c.h.b16 %v2790
        %v2936 = vunpack.c.l.b16 %v2791
        %v2937 = vunpack.c.l.b16 %v2792
        %v2938 = vunpack.c.h.b16 %v2792
        %v2939 = vunpack.c.l.b16 %v2793
        %v2940 = vunpack.c.l.b16 %v2794
        %v2941 = vunpack.c.h.b16 %v2794
        %v2942 = vunpack.c.l.b16 %v2795
        %v2943 = vpack.c.b16 %v2868, %v2865
        %v2944 = vpack.c.b16 %v2869, %v2866
        %v2945 = vpack.c.b16 %v2870, %v2867
        %v2946 = vpack.c.b16 %v2874, %v2871
        %v2947 = vpack.c.b16 %v2875, %v2872
        %v2948 = vpack.c.b16 %v2876, %v2873
        %v2949 = vpack.c.b16 %v2880, %v2877
        %v2950 = vpack.c.b16 %v2881, %v2878
        %v2951 = vpack.c.b16 %v2882, %v2879
        %v2952 = vpack.c.b16 %v2886, %v2883
        %v2953 = vpack.c.b16 %v2887, %v2884
        %v2954 = vpack.c.b16 %v2888, %v2885
        %v2955 = vpack.c.b16 %v2892, %v2889
        %v2956 = vpack.c.b16 %v2893, %v2890
        %v2957 = vpack.c.b16 %v2894, %v2891
        %v2958 = vpack.c.b16 %v2898, %v2895
        %v2959 = vpack.c.b16 %v2899, %v2896
        %v2960 = vpack.c.b16 %v2900, %v2897
        %v2961 = vpack.c.b16 %v2904, %v2901
        %v2962 = vpack.c.b16 %v2905, %v2902
        %v2963 = vpack.c.b16 %v2906, %v2903
        %v2964 = vpack.c.b16 %v2910, %v2907
        %v2965 = vpack.c.b16 %v2911, %v2908
        %v2966 = vpack.c.b16 %v2912, %v2909
        %v2967 = vpack.c.b16 %v2916, %v2913
        %v2968 = vpack.c.b16 %v2917, %v2914
        %v2969 = vpack.c.b16 %v2918, %v2915
        %v2970 = vpack.c.b16 %v2922, %v2919
        %v2971 = vpack.c.b16 %v2923, %v2920
        %v2972 = vpack.c.b16 %v2924, %v2921
        %v2973 = vpack.c.b16 %v2928, %v2925
        %v2974 = vpack.c.b16 %v2929, %v2926
        %v2975 = vpack.c.b16 %v2930, %v2927
        %v2976 = vpack.c.b16 %v2934, %v2931
        %v2977 = vpack.c.b16 %v2935, %v2932
        %v2978 = vpack.c.b16 %v2936, %v2933
        %v2979 = vpack.c.b16 %v2940, %v2937
        %v2980 = vpack.c.b16 %v2941, %v2938
        %v2981 = vpack.c.b16 %v2942, %v2939
        %v3022 = vsel %vm337, %v2811, 0
        %3024 = vmatpush.bf16.msra.mxu0 %v2964
        %3025 = vmatpush.bf16.msra.mxu0 %v2961
        %3026 = vmatpush.bf16.msra.mxu0 %v2958
        %3027 = vmatpush.bf16.msra.mxu0 %v2955
        %3028 = vmatpush.bf16.msra.mxu0 %v2952
        %3029 = vmatpush.bf16.msra.mxu0 %v2949
        %3030 = vmatpush.bf16.msra.mxu0 %v2946
        %3031 = vmatpush.bf16.msra.mxu0 %v2943
        %3032 = vmatmul.bf16.gmra.mxu0 %v2803
        %v3033 = vpop.f32.mrf.mxu0
        %v3034 = vadd.f32 0.0, %v3033
        %v3035 = vpop.f32.mrf.mxu0
        %v3036 = vadd.f32 0.0, %v3035
        %3037 = vdwg.mxu0
        %3038 = vmatpush.bf16.msra.mxu0 0
        %3039 = vmatpush.bf16.msra.mxu0 0
        %3040 = vmatpush.bf16.msra.mxu0 0
        %3041 = vmatpush.bf16.msra.mxu0 %v2979
        %3042 = vmatpush.bf16.msra.mxu0 %v2976
        %3043 = vmatpush.bf16.msra.mxu0 %v2973
        %3044 = vmatpush.bf16.msra.mxu0 %v2970
        %3045 = vmatpush.bf16.msra.mxu0 %v2967
        %3046 = vmatmul.bf16.gmra.mxu0 %v3022
        %v3047 = vpop.f32.mrf.mxu0
        %v3048 = vadd.f32 %v3034, %v3047
        %v3049 = vpop.f32.mrf.mxu0
        %v3050 = vadd.f32 %v3036, %v3049
        %3051 = vdwg.mxu0
        %3052 = vmatpush.bf16.msra.mxu0 %v2965
        %3053 = vmatpush.bf16.msra.mxu0 %v2962
        %3054 = vmatpush.bf16.msra.mxu0 %v2959
        %3055 = vmatpush.bf16.msra.mxu0 %v2956
        %3056 = vmatpush.bf16.msra.mxu0 %v2953
        %3057 = vmatpush.bf16.msra.mxu0 %v2950
        %3058 = vmatpush.bf16.msra.mxu0 %v2947
        %3059 = vmatpush.bf16.msra.mxu0 %v2944
        %3060 = vmatmul.bf16.gmra.mxu0 %v2803
        %v3061 = vpop.f32.mrf.mxu0
        %v3062 = vadd.f32 0.0, %v3061
        %v3063 = vpop.f32.mrf.mxu0
        %v3064 = vadd.f32 0.0, %v3063
        %3065 = vdwg.mxu0
        %3066 = vmatpush.bf16.msra.mxu0 0
        %3067 = vmatpush.bf16.msra.mxu0 0
        %3068 = vmatpush.bf16.msra.mxu0 0
        %3069 = vmatpush.bf16.msra.mxu0 %v2980
        %3070 = vmatpush.bf16.msra.mxu0 %v2977
        %3071 = vmatpush.bf16.msra.mxu0 %v2974
        %3072 = vmatpush.bf16.msra.mxu0 %v2971
        %3073 = vmatpush.bf16.msra.mxu0 %v2968
        %3074 = vmatmul.bf16.gmra.mxu0 %v3022
        %v3075 = vpop.f32.mrf.mxu0
        %v3076 = vadd.f32 %v3062, %v3075
        %v3077 = vpop.f32.mrf.mxu0
        %v3078 = vadd.f32 %v3064, %v3077
        %3079 = vdwg.mxu0
        %3080 = vmatpush.bf16.msra.mxu0 %v2966
        %3081 = vmatpush.bf16.msra.mxu0 %v2963
        %3082 = vmatpush.bf16.msra.mxu0 %v2960
        %3083 = vmatpush.bf16.msra.mxu0 %v2957
        %3084 = vmatpush.bf16.msra.mxu0 %v2954
        %3085 = vmatpush.bf16.msra.mxu0 %v2951
        %3086 = vmatpush.bf16.msra.mxu0 %v2948
        %3087 = vmatpush.bf16.msra.mxu0 %v2945
        %3088 = vmatmul.bf16.gmra.mxu0 %v2803
        %v3089 = vpop.f32.mrf.mxu0
        %v3090 = vadd.f32 0.0, %v3089
        %v3091 = vpop.f32.mrf.mxu0
        %v3092 = vadd.f32 0.0, %v3091
        %3093 = vdwg.mxu0
        %3094 = vmatpush.bf16.msra.mxu0 0
        %3095 = vmatpush.bf16.msra.mxu0 0
        %3096 = vmatpush.bf16.msra.mxu0 0
        %3097 = vmatpush.bf16.msra.mxu0 %v2981
        %3098 = vmatpush.bf16.msra.mxu0 %v2978
        %3099 = vmatpush.bf16.msra.mxu0 %v2975
        %3100 = vmatpush.bf16.msra.mxu0 %v2972
        %3101 = vmatpush.bf16.msra.mxu0 %v2969
        %3102 = vmatmul.bf16.gmra.mxu0 %v3022
        %v3103 = vpop.f32.mrf.mxu0
        %v3104 = vadd.f32 %v3090, %v3103
        %v3105 = vpop.f32.mrf.mxu0
        %v3106 = vadd.f32 %v3092, %v3105
        %3107 = vdwg.mxu0
        %v3108 = vadd.f32 %v2731, %v3048
        %v3109 = vadd.f32 %v2732, %v3076
        %v3110 = vadd.f32 %v2733, %v3104
        %v3111 = vadd.f32 %v2734, %v3050
        %v3112 = vadd.f32 %v2735, %v3078
        %v3113 = vadd.f32 %v2736, %v3106
        %v3114 = vld [vmem:[#allocation3] sm:$0xf0]
        %v3115 = vld [vmem:[#allocation3 + $0x8] sm:$0xf0]
        %v3116 = vld [vmem:[#allocation3 + $0x10] sm:$0x1f]
        %v3117 = vld [vmem:[#allocation3 + $0x18] sm:$0x1f]
        %v3118 = vpack.c.bf16 %v3116, %v3114
        %v3119 = vpack.c.bf16 %v3117, %v3115
        %s3120 = scalar_lea.vmem %s3, 1248
        %v3121 = vld [vmem:[%s3120] sm:$0xff]
        %v3122 = vld [vmem:[%s3120 + $0x8] sm:$0xf]
        %v3123 = vld [vmem:[%s3120 + $0xc] sm:$0xff]
        %v3124 = vld [vmem:[%s3120 + $0x14] sm:$0xf]
        %v3125 = vld [vmem:[%s3120 + $0x18] sm:$0xff]
        %v3126 = vld [vmem:[%s3120 + $0x20] sm:$0xf]
        %v3127 = vld [vmem:[%s3120 + $0x24] sm:$0xff]
        %v3128 = vld [vmem:[%s3120 + $0x2c] sm:$0xf]
        %v3129 = vld [vmem:[%s3120 + $0x30] sm:$0xff]
        %v3130 = vld [vmem:[%s3120 + $0x38] sm:$0xf]
        %v3131 = vld [vmem:[%s3120 + $0x3c] sm:$0xff]
        %v3132 = vld [vmem:[%s3120 + $0x44] sm:$0xf]
        %v3133 = vld [vmem:[%s3120 + $0x48] sm:$0xff]
        %v3134 = vld [vmem:[%s3120 + $0x50] sm:$0xf]
        %v3135 = vld [vmem:[%s3120 + $0x54] sm:$0xff]
        %v3136 = vld [vmem:[%s3120 + $0x5c] sm:$0xf]
        %v3137 = vld [vmem:[%s3120 + $0x60] sm:$0xff]
        %v3138 = vld [vmem:[%s3120 + $0x68] sm:$0xf]
        %v3139 = vld [vmem:[%s3120 + $0x6c] sm:$0xff]
        %v3140 = vld [vmem:[%s3120 + $0x74] sm:$0xf]
        %v3141 = vld [vmem:[%s3120 + $0x78] sm:$0xff]
        %v3142 = vld [vmem:[%s3120 + $0x80] sm:$0xf]
        %v3143 = vld [vmem:[%s3120 + $0x84] sm:$0xff]
        %v3144 = vld [vmem:[%s3120 + $0x8c] sm:$0xf]
        %v3145 = vld [vmem:[%s3120 + $0x90] sm:$0xff]
        %v3146 = vld [vmem:[%s3120 + $0x98] sm:$0xf]
        %v3147 = vld [vmem:[%s3120 + $0x9c] sm:$0xff]
        %v3148 = vld [vmem:[%s3120 + $0xa4] sm:$0xf]
        %v3149 = vld [vmem:[%s3120 + $0xa8] sm:$0xff]
        %v3150 = vld [vmem:[%s3120 + $0xb0] sm:$0xf]
        %v3151 = vld [vmem:[%s3120 + $0xb4] sm:$0xff]
        %v3152 = vld [vmem:[%s3120 + $0xbc] sm:$0xf]
        %v3153 = vld [vmem:[%s3120 + $0xc0] sm:$0xff]
        %v3154 = vld [vmem:[%s3120 + $0xc8] sm:$0xf]
        %v3155 = vld [vmem:[%s3120 + $0xcc] sm:$0xff]
        %v3156 = vld [vmem:[%s3120 + $0xd4] sm:$0xf]
        %v3157 = vld [vmem:[%s3120 + $0xd8] sm:$0xff]
        %v3158 = vld [vmem:[%s3120 + $0xe0] sm:$0xf]
        %v3159 = vld [vmem:[%s3120 + $0xe4] sm:$0xff]
        %v3160 = vld [vmem:[%s3120 + $0xec] sm:$0xf]
        %v3161 = vld [vmem:[%s3120 + $0xf0] sm:$0xff]
        %v3162 = vld [vmem:[%s3120 + $0xf8] sm:$0xf]
        %v3163 = vld [vmem:[%s3120 + $0xfc] sm:$0xff]
        %v3164 = vld [vmem:[%s3120 + $0x104] sm:$0xf]
        %v3165 = vld [vmem:[%s3120 + $0x108] sm:$0xff]
        %v3166 = vld [vmem:[%s3120 + $0x110] sm:$0xf]
        %v3167 = vld [vmem:[%s3120 + $0x114] sm:$0xff]
        %v3168 = vld [vmem:[%s3120 + $0x11c] sm:$0xf]
        %v3169 = vld [vmem:[%s3120 + $0x120] sm:$0xff]
        %v3170 = vld [vmem:[%s3120 + $0x128] sm:$0xf]
        %v3171 = vld [vmem:[%s3120 + $0x12c] sm:$0xff]
        %v3172 = vld [vmem:[%s3120 + $0x134] sm:$0xf]
        %v3175 = vrot.slane %v3118, 2
        %v3176 = vrot.slane %v3119, 2
        %v3230 = vunpack.c.l.b16 %v3121
        %v3231 = vunpack.c.h.b16 %v3121
        %v3232 = vunpack.c.l.b16 %v3122
        %v3233 = vunpack.c.l.b16 %v3123
        %v3234 = vunpack.c.h.b16 %v3123
        %v3235 = vunpack.c.l.b16 %v3124
        %v3236 = vunpack.c.l.b16 %v3125
        %v3237 = vunpack.c.h.b16 %v3125
        %v3238 = vunpack.c.l.b16 %v3126
        %v3239 = vunpack.c.l.b16 %v3127
        %v3240 = vunpack.c.h.b16 %v3127
        %v3241 = vunpack.c.l.b16 %v3128
        %v3242 = vunpack.c.l.b16 %v3129
        %v3243 = vunpack.c.h.b16 %v3129
        %v3244 = vunpack.c.l.b16 %v3130
        %v3245 = vunpack.c.l.b16 %v3131
        %v3246 = vunpack.c.h.b16 %v3131
        %v3247 = vunpack.c.l.b16 %v3132
        %v3248 = vunpack.c.l.b16 %v3133
        %v3249 = vunpack.c.h.b16 %v3133
        %v3250 = vunpack.c.l.b16 %v3134
        %v3251 = vunpack.c.l.b16 %v3135
        %v3252 = vunpack.c.h.b16 %v3135
        %v3253 = vunpack.c.l.b16 %v3136
        %v3254 = vunpack.c.l.b16 %v3137
        %v3255 = vunpack.c.h.b16 %v3137
        %v3256 = vunpack.c.l.b16 %v3138
        %v3257 = vunpack.c.l.b16 %v3139
        %v3258 = vunpack.c.h.b16 %v3139
        %v3259 = vunpack.c.l.b16 %v3140
        %v3260 = vunpack.c.l.b16 %v3141
        %v3261 = vunpack.c.h.b16 %v3141
        %v3262 = vunpack.c.l.b16 %v3142
        %v3263 = vunpack.c.l.b16 %v3143
        %v3264 = vunpack.c.h.b16 %v3143
        %v3265 = vunpack.c.l.b16 %v3144
        %v3266 = vunpack.c.l.b16 %v3145
        %v3267 = vunpack.c.h.b16 %v3145
        %v3268 = vunpack.c.l.b16 %v3146
        %v3269 = vunpack.c.l.b16 %v3147
        %v3270 = vunpack.c.h.b16 %v3147
        %v3271 = vunpack.c.l.b16 %v3148
        %v3272 = vunpack.c.l.b16 %v3149
        %v3273 = vunpack.c.h.b16 %v3149
        %v3274 = vunpack.c.l.b16 %v3150
        %v3275 = vunpack.c.l.b16 %v3151
        %v3276 = vunpack.c.h.b16 %v3151
        %v3277 = vunpack.c.l.b16 %v3152
        %v3278 = vunpack.c.l.b16 %v3153
        %v3279 = vunpack.c.h.b16 %v3153
        %v3280 = vunpack.c.l.b16 %v3154
        %v3281 = vunpack.c.l.b16 %v3155
        %v3282 = vunpack.c.h.b16 %v3155
        %v3283 = vunpack.c.l.b16 %v3156
        %v3284 = vunpack.c.l.b16 %v3157
        %v3285 = vunpack.c.h.b16 %v3157
        %v3286 = vunpack.c.l.b16 %v3158
        %v3287 = vunpack.c.l.b16 %v3159
        %v3288 = vunpack.c.h.b16 %v3159
        %v3289 = vunpack.c.l.b16 %v3160
        %v3290 = vunpack.c.l.b16 %v3161
        %v3291 = vunpack.c.h.b16 %v3161
        %v3292 = vunpack.c.l.b16 %v3162
        %v3293 = vunpack.c.l.b16 %v3163
        %v3294 = vunpack.c.h.b16 %v3163
        %v3295 = vunpack.c.l.b16 %v3164
        %v3296 = vunpack.c.l.b16 %v3165
        %v3297 = vunpack.c.h.b16 %v3165
        %v3298 = vunpack.c.l.b16 %v3166
        %v3299 = vunpack.c.l.b16 %v3167
        %v3300 = vunpack.c.h.b16 %v3167
        %v3301 = vunpack.c.l.b16 %v3168
        %v3302 = vunpack.c.l.b16 %v3169
        %v3303 = vunpack.c.h.b16 %v3169
        %v3304 = vunpack.c.l.b16 %v3170
        %v3305 = vunpack.c.l.b16 %v3171
        %v3306 = vunpack.c.h.b16 %v3171
        %v3307 = vunpack.c.l.b16 %v3172
        %v3308 = vpack.c.b16 %v3233, %v3230
        %v3309 = vpack.c.b16 %v3234, %v3231
        %v3310 = vpack.c.b16 %v3235, %v3232
        %v3311 = vpack.c.b16 %v3239, %v3236
        %v3312 = vpack.c.b16 %v3240, %v3237
        %v3313 = vpack.c.b16 %v3241, %v3238
        %v3314 = vpack.c.b16 %v3245, %v3242
        %v3315 = vpack.c.b16 %v3246, %v3243
        %v3316 = vpack.c.b16 %v3247, %v3244
        %v3317 = vpack.c.b16 %v3251, %v3248
        %v3318 = vpack.c.b16 %v3252, %v3249
        %v3319 = vpack.c.b16 %v3253, %v3250
        %v3320 = vpack.c.b16 %v3257, %v3254
        %v3321 = vpack.c.b16 %v3258, %v3255
        %v3322 = vpack.c.b16 %v3259, %v3256
        %v3323 = vpack.c.b16 %v3263, %v3260
        %v3324 = vpack.c.b16 %v3264, %v3261
        %v3325 = vpack.c.b16 %v3265, %v3262
        %v3326 = vpack.c.b16 %v3269, %v3266
        %v3327 = vpack.c.b16 %v3270, %v3267
        %v3328 = vpack.c.b16 %v3271, %v3268
        %v3329 = vpack.c.b16 %v3275, %v3272
        %v3330 = vpack.c.b16 %v3276, %v3273
        %v3331 = vpack.c.b16 %v3277, %v3274
        %v3332 = vpack.c.b16 %v3281, %v3278
        %v3333 = vpack.c.b16 %v3282, %v3279
        %v3334 = vpack.c.b16 %v3283, %v3280
        %v3335 = vpack.c.b16 %v3287, %v3284
        %v3336 = vpack.c.b16 %v3288, %v3285
        %v3337 = vpack.c.b16 %v3289, %v3286
        %v3338 = vpack.c.b16 %v3293, %v3290
        %v3339 = vpack.c.b16 %v3294, %v3291
        %v3340 = vpack.c.b16 %v3295, %v3292
        %v3341 = vpack.c.b16 %v3299, %v3296
        %v3342 = vpack.c.b16 %v3300, %v3297
        %v3343 = vpack.c.b16 %v3301, %v3298
        %v3344 = vpack.c.b16 %v3305, %v3302
        %v3345 = vpack.c.b16 %v3306, %v3303
        %v3346 = vpack.c.b16 %v3307, %v3304
        %v3387 = vsel %vm337, %v3176, 0
        %3389 = vmatpush.bf16.msra.mxu0 %v3329
        %3390 = vmatpush.bf16.msra.mxu0 %v3326
        %3391 = vmatpush.bf16.msra.mxu0 %v3323
        %3392 = vmatpush.bf16.msra.mxu0 %v3320
        %3393 = vmatpush.bf16.msra.mxu0 %v3317
        %3394 = vmatpush.bf16.msra.mxu0 %v3314
        %3395 = vmatpush.bf16.msra.mxu0 %v3311
        %3396 = vmatpush.bf16.msra.mxu0 %v3308
        %3397 = vmatmul.bf16.gmra.mxu0 %v3175
        %v3398 = vpop.f32.mrf.mxu0
        %v3399 = vadd.f32 0.0, %v3398
        %v3400 = vpop.f32.mrf.mxu0
        %v3401 = vadd.f32 0.0, %v3400
        %3402 = vdwg.mxu0
        %3403 = vmatpush.bf16.msra.mxu0 0
        %3404 = vmatpush.bf16.msra.mxu0 0
        %3405 = vmatpush.bf16.msra.mxu0 0
        %3406 = vmatpush.bf16.msra.mxu0 %v3344
        %3407 = vmatpush.bf16.msra.mxu0 %v3341
        %3408 = vmatpush.bf16.msra.mxu0 %v3338
        %3409 = vmatpush.bf16.msra.mxu0 %v3335
        %3410 = vmatpush.bf16.msra.mxu0 %v3332
        %3411 = vmatmul.bf16.gmra.mxu0 %v3387
        %v3412 = vpop.f32.mrf.mxu0
        %v3413 = vadd.f32 %v3399, %v3412
        %v3414 = vpop.f32.mrf.mxu0
        %v3415 = vadd.f32 %v3401, %v3414
        %3416 = vdwg.mxu0
        %3417 = vmatpush.bf16.msra.mxu0 %v3330
        %3418 = vmatpush.bf16.msra.mxu0 %v3327
        %3419 = vmatpush.bf16.msra.mxu0 %v3324
        %3420 = vmatpush.bf16.msra.mxu0 %v3321
        %3421 = vmatpush.bf16.msra.mxu0 %v3318
        %3422 = vmatpush.bf16.msra.mxu0 %v3315
        %3423 = vmatpush.bf16.msra.mxu0 %v3312
        %3424 = vmatpush.bf16.msra.mxu0 %v3309
        %3425 = vmatmul.bf16.gmra.mxu0 %v3175
        %v3426 = vpop.f32.mrf.mxu0
        %v3427 = vadd.f32 0.0, %v3426
        %v3428 = vpop.f32.mrf.mxu0
        %v3429 = vadd.f32 0.0, %v3428
        %3430 = vdwg.mxu0
        %3431 = vmatpush.bf16.msra.mxu0 0
        %3432 = vmatpush.bf16.msra.mxu0 0
        %3433 = vmatpush.bf16.msra.mxu0 0
        %3434 = vmatpush.bf16.msra.mxu0 %v3345
        %3435 = vmatpush.bf16.msra.mxu0 %v3342
        %3436 = vmatpush.bf16.msra.mxu0 %v3339
        %3437 = vmatpush.bf16.msra.mxu0 %v3336
        %3438 = vmatpush.bf16.msra.mxu0 %v3333
        %3439 = vmatmul.bf16.gmra.mxu0 %v3387
        %v3440 = vpop.f32.mrf.mxu0
        %v3441 = vadd.f32 %v3427, %v3440
        %v3442 = vpop.f32.mrf.mxu0
        %v3443 = vadd.f32 %v3429, %v3442
        %3444 = vdwg.mxu0
        %3445 = vmatpush.bf16.msra.mxu0 %v3331
        %3446 = vmatpush.bf16.msra.mxu0 %v3328
        %3447 = vmatpush.bf16.msra.mxu0 %v3325
        %3448 = vmatpush.bf16.msra.mxu0 %v3322
        %3449 = vmatpush.bf16.msra.mxu0 %v3319
        %3450 = vmatpush.bf16.msra.mxu0 %v3316
        %3451 = vmatpush.bf16.msra.mxu0 %v3313
        %3452 = vmatpush.bf16.msra.mxu0 %v3310
        %3453 = vmatmul.bf16.gmra.mxu0 %v3175
        %v3454 = vpop.f32.mrf.mxu0
        %v3455 = vadd.f32 0.0, %v3454
        %v3456 = vpop.f32.mrf.mxu0
        %v3457 = vadd.f32 0.0, %v3456
        %3458 = vdwg.mxu0
        %3459 = vmatpush.bf16.msra.mxu0 0
        %3460 = vmatpush.bf16.msra.mxu0 0
        %3461 = vmatpush.bf16.msra.mxu0 0
        %3462 = vmatpush.bf16.msra.mxu0 %v3346
        %3463 = vmatpush.bf16.msra.mxu0 %v3343
        %3464 = vmatpush.bf16.msra.mxu0 %v3340
        %3465 = vmatpush.bf16.msra.mxu0 %v3337
        %3466 = vmatpush.bf16.msra.mxu0 %v3334
        %3467 = vmatmul.bf16.gmra.mxu0 %v3387
        %v3468 = vpop.f32.mrf.mxu0
        %v3469 = vadd.f32 %v3455, %v3468
        %v3470 = vpop.f32.mrf.mxu0
        %v3471 = vadd.f32 %v3457, %v3470
        %3472 = vdwg.mxu0
        %v3473 = vadd.f32 %v3108, %v3413
        %v3474 = vadd.f32 %v3109, %v3441
        %v3475 = vadd.f32 %v3110, %v3469
        %v3476 = vadd.f32 %v3111, %v3415
        %v3477 = vadd.f32 %v3112, %v3443
        %v3478 = vadd.f32 %v3113, %v3471
        %v3479 = vld [vmem:[%s4] sm:$0x7]
        %v3481 = vperm.slane %v3479, 0
        %v3482 = vperm.slane %v3479, 1
        %v3483 = vperm.slane %v3479, 2
        %v3487 = vadd.f32 %v3473, %v3481
        %v3488 = vadd.f32 %v3474, %v3482
        %v3489 = vadd.f32 %v3475, %v3483
        %v3490 = vadd.f32 %v3476, %v3481
        %v3491 = vadd.f32 %v3477, %v3482
        %v3492 = vadd.f32 %v3478, %v3483
        %v3493 = vmax.f32 %v3487, 0.0
        %v3494 = vmax.f32 %v3488, 0.0
        %v3495 = vmax.f32 %v3489, 0.0
        %v3496 = vmax.f32 %v3490, 0.0
        %v3497 = vmax.f32 %v3491, 0.0
        %v3498 = vmax.f32 %v3492, 0.0
        %3503 = vrot.lane.b32.xlu0 %v3493, 32
        %v3504 = vpop.permute.xlu0 %3503
        %3505 = vrot.lane.b32.xlu0 %v3494, 32
        %v3506 = vpop.permute.xlu0 %3505
        %3507 = vrot.lane.b32.xlu0 %v3496, 32
        %v3508 = vpop.permute.xlu0 %3507
        %3509 = vrot.lane.b32.xlu0 %v3497, 32
        %v3510 = vpop.permute.xlu0 %3509
        %v3511 = vsel %vm331, %v3504, %v3506
        %v3512 = vsel %vm331, %v3508, %v3510
        %v3515 = vmax.f32 %v3493, %v3511
        %v3516 = vmax.f32 %v3496, %v3512
        %3519 = vrot.lane.b32.xlu0 %v3494, 64
        %v3520 = vpop.permute.xlu0 %3519
        %3521 = vrot.lane.b32.xlu0 %v3495, 64
        %v3522 = vpop.permute.xlu0 %3521
        %3523 = vrot.lane.b32.xlu0 %v3497, 64
        %v3524 = vpop.permute.xlu0 %3523
        %3525 = vrot.lane.b32.xlu0 %v3498, 64
        %v3526 = vpop.permute.xlu0 %3525
        %vm3527 = vcmask 523264
        %v3528 = vsel %vm3527, %v3520, %v3522
        %v3529 = vsel %vm3527, %v3524, %v3526
        %v3532 = vmax.f32 %v3515, %v3528
        %v3533 = vmax.f32 %v3516, %v3529
        %vm3534 = vcmask 780288
        %v3535 = vsel %vm3534, %v3532, -inf
        %v3536 = vrot.slane %v3535, 4
        %v3537 = vmax.f32 %v3535, %v3536
        %v3538 = vrot.slane %v3537, 2
        %v3539 = vmax.f32 %v3537, %v3538
        %v3540 = vrot.slane %v3539, 1
        %v3541 = vmax.f32 %v3539, %v3540
        %3543 = vrot.lane.b32.xlu0 %v3541, 64
        %v3544 = vpop.permute.xlu0 %3543
        %vm3546 = vcmask 1040896
        %3547 = vst.msk [vmem:[#allocation4 + $0x2] sm:$0x1] %vm3546, %v3544
        %vm3548 = vcmask 253952
        %3549 = vst.msk [vmem:[#allocation4 + $0xa] sm:$0x1] %vm3548, %v3544
        %vm3550 = vcmask 783363
        %v3551 = vsel %vm3550, %v3532, -inf
        %v3552 = vrot.slane %v3551, 4
        %v3553 = vmax.f32 %v3551, %v3552
        %v3554 = vrot.slane %v3553, 2
        %v3555 = vmax.f32 %v3553, %v3554
        %v3556 = vrot.slane %v3555, 1
        %v3557 = vmax.f32 %v3555, %v3556
        %3559 = vrot.lane.b32.xlu0 %v3557, 64
        %v3560 = vpop.permute.xlu0 %3559
        %3562 = vst.msk [vmem:[#allocation4 + $0x3] sm:$0x1] %vm3546, %v3560
        %3563 = vst.msk [vmem:[#allocation4 + $0xb] sm:$0x1] %vm3548, %v3560
        %vm3564 = vcmask 785414
        %v3565 = vsel %vm3564, %v3532, -inf
        %vm3566 = vcmask 778240
        %v3567 = vsel %vm3566, %v3533, -inf
        %v3568 = vmax.f32 %v3565, %v3567
        %v3569 = vrot.slane %v3568, 4
        %v3570 = vmax.f32 %v3568, %v3569
        %v3571 = vrot.slane %v3570, 2
        %v3572 = vmax.f32 %v3570, %v3571
        %v3573 = vrot.slane %v3572, 1
        %v3574 = vmax.f32 %v3572, %v3573
        %3576 = vrot.lane.b32.xlu0 %v3574, 64
        %v3577 = vpop.permute.xlu0 %3576
        %3579 = vst.msk [vmem:[#allocation4 + $0x4] sm:$0x1] %vm3546, %v3577
        %3580 = vst.msk [vmem:[#allocation4 + $0xc] sm:$0x1] %vm3548, %v3577
        %v3581 = vld [vmem:[#allocation4] sm:$0x7]
        %v3582 = vld [vmem:[#allocation4 + $0x8] sm:$0x7]
        %v3583 = vpack.c.bf16 %v3581, %v3581
        %v3584 = vpack.c.bf16 %v3582, %v3582
        %v3585 = vld [vmem:[%s5] sm:$0xff]
        %v3586 = vld [vmem:[%s5 + $0x8] sm:$0xff]
        %v3587 = vld [vmem:[%s5 + $0x10] sm:$0xff]
        %v3588 = vld [vmem:[%s5 + $0x18] sm:$0xff]
        %v3589 = vld [vmem:[%s5 + $0x20] sm:$0xff]
        %v3590 = vld [vmem:[%s5 + $0x28] sm:$0xff]
        %v3591 = vld [vmem:[%s5 + $0x30] sm:$0xff]
        %v3592 = vld [vmem:[%s5 + $0x38] sm:$0xff]
        %v3593 = vld [vmem:[%s5 + $0x40] sm:$0xff]
        %v3594 = vld [vmem:[%s5 + $0x48] sm:$0xff]
        %v3595 = vld [vmem:[%s5 + $0x50] sm:$0xff]
        %v3596 = vld [vmem:[%s5 + $0x58] sm:$0xff]
        %v3597 = vld [vmem:[%s5 + $0x60] sm:$0xff]
        %v3598 = vld [vmem:[%s5 + $0x68] sm:$0xff]
        %v3599 = vld [vmem:[%s5 + $0x70] sm:$0xff]
        %v3600 = vld [vmem:[%s5 + $0x78] sm:$0xff]
        %v3601 = vld [vmem:[%s5 + $0x80] sm:$0xff]
        %v3602 = vld [vmem:[%s5 + $0x88] sm:$0xff]
        %v3603 = vld [vmem:[%s5 + $0x90] sm:$0xff]
        %v3604 = vld [vmem:[%s5 + $0x98] sm:$0xff]
        %v3605 = vld [vmem:[%s5 + $0xa0] sm:$0xff]
        %v3606 = vld [vmem:[%s5 + $0xa8] sm:$0xff]
        %v3607 = vld [vmem:[%s5 + $0xb0] sm:$0xff]
        %v3608 = vld [vmem:[%s5 + $0xb8] sm:$0xff]
        %v3609 = vld [vmem:[%s5 + $0xc0] sm:$0xff]
        %v3610 = vld [vmem:[%s5 + $0xc8] sm:$0xff]
        %v3611 = vld [vmem:[%s5 + $0xd0] sm:$0xff]
        %v3612 = vld [vmem:[%s5 + $0xd8] sm:$0xff]
        %v3613 = vld [vmem:[#allocation4] sm:$0xe]
        %v3614 = vld [vmem:[#allocation4 + $0x8] sm:$0xe]
        %v3615 = vpack.c.bf16 %v3613, %v3613
        %v3616 = vpack.c.bf16 %v3614, %v3614
        %s3617 = scalar_lea.vmem %s5, 224
        %v3618 = vld [vmem:[%s3617] sm:$0xff]
        %v3619 = vld [vmem:[%s3617 + $0x8] sm:$0xff]
        %v3620 = vld [vmem:[%s3617 + $0x10] sm:$0xff]
        %v3621 = vld [vmem:[%s3617 + $0x18] sm:$0xff]
        %v3622 = vld [vmem:[%s3617 + $0x20] sm:$0xff]
        %v3623 = vld [vmem:[%s3617 + $0x28] sm:$0xff]
        %v3624 = vld [vmem:[%s3617 + $0x30] sm:$0xff]
        %v3625 = vld [vmem:[%s3617 + $0x38] sm:$0xff]
        %v3626 = vld [vmem:[%s3617 + $0x40] sm:$0xff]
        %v3627 = vld [vmem:[%s3617 + $0x48] sm:$0xff]
        %v3628 = vld [vmem:[%s3617 + $0x50] sm:$0xff]
        %v3629 = vld [vmem:[%s3617 + $0x58] sm:$0xff]
        %v3630 = vld [vmem:[%s3617 + $0x60] sm:$0xff]
        %v3631 = vld [vmem:[%s3617 + $0x68] sm:$0xff]
        %v3632 = vld [vmem:[%s3617 + $0x70] sm:$0xff]
        %v3633 = vld [vmem:[%s3617 + $0x78] sm:$0xff]
        %v3634 = vld [vmem:[%s3617 + $0x80] sm:$0xff]
        %v3635 = vld [vmem:[%s3617 + $0x88] sm:$0xff]
        %v3636 = vld [vmem:[%s3617 + $0x90] sm:$0xff]
        %v3637 = vld [vmem:[%s3617 + $0x98] sm:$0xff]
        %v3638 = vld [vmem:[%s3617 + $0xa0] sm:$0xff]
        %v3639 = vld [vmem:[%s3617 + $0xa8] sm:$0xff]
        %v3640 = vld [vmem:[%s3617 + $0xb0] sm:$0xff]
        %v3641 = vld [vmem:[%s3617 + $0xb8] sm:$0xff]
        %v3642 = vld [vmem:[%s3617 + $0xc0] sm:$0xff]
        %v3643 = vld [vmem:[%s3617 + $0xc8] sm:$0xff]
        %v3644 = vld [vmem:[%s3617 + $0xd0] sm:$0xff]
        %v3645 = vld [vmem:[%s3617 + $0xd8] sm:$0xff]
        %v3647 = vshrl.u32 %v3615, 16
        %v3649 = vshll.u32 %v3615, 16
        %v3651 = vrot.slane %v3649, 1
        %v3652 = vor.u32 %v3647, %v3651
        %v3654 = vshrl.u32 %v3616, 16
        %v3656 = vshll.u32 %v3616, 16
        %v3658 = vrot.slane %v3656, 1
        %v3659 = vor.u32 %v3654, %v3658
        %v3689 = vunpack.c.l.b16 %v3618
        %v3690 = vunpack.c.h.b16 %v3618
        %v3691 = vunpack.c.l.b16 %v3619
        %v3692 = vunpack.c.h.b16 %v3619
        %v3693 = vunpack.c.l.b16 %v3620
        %v3694 = vunpack.c.h.b16 %v3620
        %v3695 = vunpack.c.l.b16 %v3621
        %v3696 = vunpack.c.h.b16 %v3621
        %v3697 = vunpack.c.l.b16 %v3622
        %v3698 = vunpack.c.h.b16 %v3622
        %v3699 = vunpack.c.l.b16 %v3623
        %v3700 = vunpack.c.h.b16 %v3623
        %v3701 = vunpack.c.l.b16 %v3624
        %v3702 = vunpack.c.h.b16 %v3624
        %v3703 = vunpack.c.l.b16 %v3625
        %v3704 = vunpack.c.h.b16 %v3625
        %v3705 = vunpack.c.l.b16 %v3626
        %v3706 = vunpack.c.h.b16 %v3626
        %v3707 = vunpack.c.l.b16 %v3627
        %v3708 = vunpack.c.h.b16 %v3627
        %v3709 = vunpack.c.l.b16 %v3628
        %v3710 = vunpack.c.h.b16 %v3628
        %v3711 = vunpack.c.l.b16 %v3629
        %v3712 = vunpack.c.h.b16 %v3629
        %v3713 = vunpack.c.l.b16 %v3630
        %v3714 = vunpack.c.h.b16 %v3630
        %v3715 = vunpack.c.l.b16 %v3631
        %v3716 = vunpack.c.h.b16 %v3631
        %v3717 = vunpack.c.l.b16 %v3632
        %v3718 = vunpack.c.h.b16 %v3632
        %v3719 = vunpack.c.l.b16 %v3633
        %v3720 = vunpack.c.h.b16 %v3633
        %v3721 = vunpack.c.l.b16 %v3634
        %v3722 = vunpack.c.h.b16 %v3634
        %v3723 = vunpack.c.l.b16 %v3635
        %v3724 = vunpack.c.h.b16 %v3635
        %v3725 = vunpack.c.l.b16 %v3636
        %v3726 = vunpack.c.h.b16 %v3636
        %v3727 = vunpack.c.l.b16 %v3637
        %v3728 = vunpack.c.h.b16 %v3637
        %v3729 = vunpack.c.l.b16 %v3638
        %v3730 = vunpack.c.h.b16 %v3638
        %v3731 = vunpack.c.l.b16 %v3639
        %v3732 = vunpack.c.h.b16 %v3639
        %v3733 = vunpack.c.l.b16 %v3640
        %v3734 = vunpack.c.h.b16 %v3640
        %v3735 = vunpack.c.l.b16 %v3641
        %v3736 = vunpack.c.h.b16 %v3641
        %v3737 = vunpack.c.l.b16 %v3642
        %v3738 = vunpack.c.h.b16 %v3642
        %v3739 = vunpack.c.l.b16 %v3643
        %v3740 = vunpack.c.h.b16 %v3643
        %v3741 = vunpack.c.l.b16 %v3644
        %v3742 = vunpack.c.h.b16 %v3644
        %v3743 = vunpack.c.l.b16 %v3645
        %v3744 = vunpack.c.h.b16 %v3645
        %v3745 = vpack.c.b16 %v3691, %v3689
        %v3746 = vpack.c.b16 %v3692, %v3690
        %v3747 = vpack.c.b16 %v3695, %v3693
        %v3748 = vpack.c.b16 %v3696, %v3694
        %v3749 = vpack.c.b16 %v3699, %v3697
        %v3750 = vpack.c.b16 %v3700, %v3698
        %v3751 = vpack.c.b16 %v3703, %v3701
        %v3752 = vpack.c.b16 %v3704, %v3702
        %v3753 = vpack.c.b16 %v3707, %v3705
        %v3754 = vpack.c.b16 %v3708, %v3706
        %v3755 = vpack.c.b16 %v3711, %v3709
        %v3756 = vpack.c.b16 %v3712, %v3710
        %v3757 = vpack.c.b16 %v3715, %v3713
        %v3758 = vpack.c.b16 %v3716, %v3714
        %v3759 = vpack.c.b16 %v3719, %v3717
        %v3760 = vpack.c.b16 %v3720, %v3718
        %v3761 = vpack.c.b16 %v3723, %v3721
        %v3762 = vpack.c.b16 %v3724, %v3722
        %v3763 = vpack.c.b16 %v3727, %v3725
        %v3764 = vpack.c.b16 %v3728, %v3726
        %v3765 = vpack.c.b16 %v3731, %v3729
        %v3766 = vpack.c.b16 %v3732, %v3730
        %v3767 = vpack.c.b16 %v3735, %v3733
        %v3768 = vpack.c.b16 %v3736, %v3734
        %v3769 = vpack.c.b16 %v3739, %v3737
        %v3770 = vpack.c.b16 %v3740, %v3738
        %v3771 = vpack.c.b16 %v3743, %v3741
        %v3772 = vpack.c.b16 %v3744, %v3742
        %v3802 = vsel %vm1363, %v3659, 0
        %3804 = vmatpush.bf16.msra.mxu0 %v3759
        %3805 = vmatpush.bf16.msra.mxu0 %v3757
        %3806 = vmatpush.bf16.msra.mxu0 %v3755
        %3807 = vmatpush.bf16.msra.mxu0 %v3753
        %3808 = vmatpush.bf16.msra.mxu0 %v3751
        %3809 = vmatpush.bf16.msra.mxu0 %v3749
        %3810 = vmatpush.bf16.msra.mxu0 %v3747
        %3811 = vmatpush.bf16.msra.mxu0 %v3745
        %3812 = vmatmul.bf16.gmra.mxu0 %v3652
        %v3813 = vpop.f32.mrf.mxu0
        %v3814 = vadd.f32 0.0, %v3813
        %v3815 = vpop.f32.mrf.mxu0
        %3816 = vdwg.mxu0
        %3817 = vmatpush.bf16.msra.mxu0 0
        %3818 = vmatpush.bf16.msra.mxu0 0
        %3819 = vmatpush.bf16.msra.mxu0 %v3771
        %3820 = vmatpush.bf16.msra.mxu0 %v3769
        %3821 = vmatpush.bf16.msra.mxu0 %v3767
        %3822 = vmatpush.bf16.msra.mxu0 %v3765
        %3823 = vmatpush.bf16.msra.mxu0 %v3763
        %3824 = vmatpush.bf16.msra.mxu0 %v3761
        %3825 = vmatmul.bf16.gmra.mxu0 %v3802
        %v3826 = vpop.f32.mrf.mxu0
        %v3827 = vadd.f32 %v3814, %v3826
        %v3828 = vpop.f32.mrf.mxu0
        %3829 = vdwg.mxu0
        %3830 = vmatpush.bf16.msra.mxu0 %v3760
        %3831 = vmatpush.bf16.msra.mxu0 %v3758
        %3832 = vmatpush.bf16.msra.mxu0 %v3756
        %3833 = vmatpush.bf16.msra.mxu0 %v3754
        %3834 = vmatpush.bf16.msra.mxu0 %v3752
        %3835 = vmatpush.bf16.msra.mxu0 %v3750
        %3836 = vmatpush.bf16.msra.mxu0 %v3748
        %3837 = vmatpush.bf16.msra.mxu0 %v3746
        %3838 = vmatmul.bf16.gmra.mxu0 %v3652
        %v3839 = vpop.f32.mrf.mxu0
        %v3840 = vadd.f32 0.0, %v3839
        %v3841 = vpop.f32.mrf.mxu0
        %3842 = vdwg.mxu0
        %3843 = vmatpush.bf16.msra.mxu0 0
        %3844 = vmatpush.bf16.msra.mxu0 0
        %3845 = vmatpush.bf16.msra.mxu0 %v3772
        %3846 = vmatpush.bf16.msra.mxu0 %v3770
        %3847 = vmatpush.bf16.msra.mxu0 %v3768
        %3848 = vmatpush.bf16.msra.mxu0 %v3766
        %3849 = vmatpush.bf16.msra.mxu0 %v3764
        %3850 = vmatpush.bf16.msra.mxu0 %v3762
        %3851 = vmatmul.bf16.gmra.mxu0 %v3802
        %v3852 = vpop.f32.mrf.mxu0
        %v3853 = vadd.f32 %v3840, %v3852
        %v3854 = vpop.f32.mrf.mxu0
        %3855 = vdwg.mxu0
        %v3884 = vunpack.c.l.b16 %v3585
        %v3885 = vunpack.c.h.b16 %v3585
        %v3886 = vunpack.c.l.b16 %v3586
        %v3887 = vunpack.c.h.b16 %v3586
        %v3888 = vunpack.c.l.b16 %v3587
        %v3889 = vunpack.c.h.b16 %v3587
        %v3890 = vunpack.c.l.b16 %v3588
        %v3891 = vunpack.c.h.b16 %v3588
        %v3892 = vunpack.c.l.b16 %v3589
        %v3893 = vunpack.c.h.b16 %v3589
        %v3894 = vunpack.c.l.b16 %v3590
        %v3895 = vunpack.c.h.b16 %v3590
        %v3896 = vunpack.c.l.b16 %v3591
        %v3897 = vunpack.c.h.b16 %v3591
        %v3898 = vunpack.c.l.b16 %v3592
        %v3899 = vunpack.c.h.b16 %v3592
        %v3900 = vunpack.c.l.b16 %v3593
        %v3901 = vunpack.c.h.b16 %v3593
        %v3902 = vunpack.c.l.b16 %v3594
        %v3903 = vunpack.c.h.b16 %v3594
        %v3904 = vunpack.c.l.b16 %v3595
        %v3905 = vunpack.c.h.b16 %v3595
        %v3906 = vunpack.c.l.b16 %v3596
        %v3907 = vunpack.c.h.b16 %v3596
        %v3908 = vunpack.c.l.b16 %v3597
        %v3909 = vunpack.c.h.b16 %v3597
        %v3910 = vunpack.c.l.b16 %v3598
        %v3911 = vunpack.c.h.b16 %v3598
        %v3912 = vunpack.c.l.b16 %v3599
        %v3913 = vunpack.c.h.b16 %v3599
        %v3914 = vunpack.c.l.b16 %v3600
        %v3915 = vunpack.c.h.b16 %v3600
        %v3916 = vunpack.c.l.b16 %v3601
        %v3917 = vunpack.c.h.b16 %v3601
        %v3918 = vunpack.c.l.b16 %v3602
        %v3919 = vunpack.c.h.b16 %v3602
        %v3920 = vunpack.c.l.b16 %v3603
        %v3921 = vunpack.c.h.b16 %v3603
        %v3922 = vunpack.c.l.b16 %v3604
        %v3923 = vunpack.c.h.b16 %v3604
        %v3924 = vunpack.c.l.b16 %v3605
        %v3925 = vunpack.c.h.b16 %v3605
        %v3926 = vunpack.c.l.b16 %v3606
        %v3927 = vunpack.c.h.b16 %v3606
        %v3928 = vunpack.c.l.b16 %v3607
        %v3929 = vunpack.c.h.b16 %v3607
        %v3930 = vunpack.c.l.b16 %v3608
        %v3931 = vunpack.c.h.b16 %v3608
        %v3932 = vunpack.c.l.b16 %v3609
        %v3933 = vunpack.c.h.b16 %v3609
        %v3934 = vunpack.c.l.b16 %v3610
        %v3935 = vunpack.c.h.b16 %v3610
        %v3936 = vunpack.c.l.b16 %v3611
        %v3937 = vunpack.c.h.b16 %v3611
        %v3938 = vunpack.c.l.b16 %v3612
        %v3939 = vunpack.c.h.b16 %v3612
        %v3940 = vpack.c.b16 %v3886, %v3884
        %v3941 = vpack.c.b16 %v3887, %v3885
        %v3942 = vpack.c.b16 %v3890, %v3888
        %v3943 = vpack.c.b16 %v3891, %v3889
        %v3944 = vpack.c.b16 %v3894, %v3892
        %v3945 = vpack.c.b16 %v3895, %v3893
        %v3946 = vpack.c.b16 %v3898, %v3896
        %v3947 = vpack.c.b16 %v3899, %v3897
        %v3948 = vpack.c.b16 %v3902, %v3900
        %v3949 = vpack.c.b16 %v3903, %v3901
        %v3950 = vpack.c.b16 %v3906, %v3904
        %v3951 = vpack.c.b16 %v3907, %v3905
        %v3952 = vpack.c.b16 %v3910, %v3908
        %v3953 = vpack.c.b16 %v3911, %v3909
        %v3954 = vpack.c.b16 %v3914, %v3912
        %v3955 = vpack.c.b16 %v3915, %v3913
        %v3956 = vpack.c.b16 %v3918, %v3916
        %v3957 = vpack.c.b16 %v3919, %v3917
        %v3958 = vpack.c.b16 %v3922, %v3920
        %v3959 = vpack.c.b16 %v3923, %v3921
        %v3960 = vpack.c.b16 %v3926, %v3924
        %v3961 = vpack.c.b16 %v3927, %v3925
        %v3962 = vpack.c.b16 %v3930, %v3928
        %v3963 = vpack.c.b16 %v3931, %v3929
        %v3964 = vpack.c.b16 %v3934, %v3932
        %v3965 = vpack.c.b16 %v3935, %v3933
        %v3966 = vpack.c.b16 %v3938, %v3936
        %v3967 = vpack.c.b16 %v3939, %v3937
        %v3997 = vsel %vm1363, %v3584, 0
        %3999 = vmatpush.bf16.msra.mxu0 %v3954
        %4000 = vmatpush.bf16.msra.mxu0 %v3952
        %4001 = vmatpush.bf16.msra.mxu0 %v3950
        %4002 = vmatpush.bf16.msra.mxu0 %v3948
        %4003 = vmatpush.bf16.msra.mxu0 %v3946
        %4004 = vmatpush.bf16.msra.mxu0 %v3944
        %4005 = vmatpush.bf16.msra.mxu0 %v3942
        %4006 = vmatpush.bf16.msra.mxu0 %v3940
        %4007 = vmatmul.bf16.gmra.mxu0 %v3583
        %v4008 = vpop.f32.mrf.mxu0
        %v4009 = vadd.f32 %v3827, %v4008
        %v4010 = vpop.f32.mrf.mxu0
        %4011 = vdwg.mxu0
        %4012 = vmatpush.bf16.msra.mxu0 0
        %4013 = vmatpush.bf16.msra.mxu0 0
        %4014 = vmatpush.bf16.msra.mxu0 %v3966
        %4015 = vmatpush.bf16.msra.mxu0 %v3964
        %4016 = vmatpush.bf16.msra.mxu0 %v3962
        %4017 = vmatpush.bf16.msra.mxu0 %v3960
        %4018 = vmatpush.bf16.msra.mxu0 %v3958
        %4019 = vmatpush.bf16.msra.mxu0 %v3956
        %4020 = vmatmul.bf16.gmra.mxu0 %v3997
        %v4021 = vpop.f32.mrf.mxu0
        %v4022 = vadd.f32 %v4009, %v4021
        %v4023 = vpop.f32.mrf.mxu0
        %4024 = vdwg.mxu0
        %4025 = vmatpush.bf16.msra.mxu0 %v3955
        %4026 = vmatpush.bf16.msra.mxu0 %v3953
        %4027 = vmatpush.bf16.msra.mxu0 %v3951
        %4028 = vmatpush.bf16.msra.mxu0 %v3949
        %4029 = vmatpush.bf16.msra.mxu0 %v3947
        %4030 = vmatpush.bf16.msra.mxu0 %v3945
        %4031 = vmatpush.bf16.msra.mxu0 %v3943
        %4032 = vmatpush.bf16.msra.mxu0 %v3941
        %4033 = vmatmul.bf16.gmra.mxu0 %v3583
        %v4034 = vpop.f32.mrf.mxu0
        %v4035 = vadd.f32 %v3853, %v4034
        %v4036 = vpop.f32.mrf.mxu0
        %4037 = vdwg.mxu0
        %4038 = vmatpush.bf16.msra.mxu0 0
        %4039 = vmatpush.bf16.msra.mxu0 0
        %4040 = vmatpush.bf16.msra.mxu0 %v3967
        %4041 = vmatpush.bf16.msra.mxu0 %v3965
        %4042 = vmatpush.bf16.msra.mxu0 %v3963
        %4043 = vmatpush.bf16.msra.mxu0 %v3961
        %4044 = vmatpush.bf16.msra.mxu0 %v3959
        %4045 = vmatpush.bf16.msra.mxu0 %v3957
        %4046 = vmatmul.bf16.gmra.mxu0 %v3997
        %v4047 = vpop.f32.mrf.mxu0
        %v4048 = vadd.f32 %v4035, %v4047
        %v4049 = vpop.f32.mrf.mxu0
        %4050 = vdwg.mxu0
        %v4051 = vld [vmem:[#allocation4] sm:$0x1c]
        %v4052 = vld [vmem:[#allocation4 + $0x8] sm:$0x1c]
        %v4053 = vpack.c.bf16 %v4051, %v4051
        %v4054 = vpack.c.bf16 %v4052, %v4052
        %s4055 = scalar_lea.vmem %s5, 448
        %v4056 = vld [vmem:[%s4055] sm:$0xff]
        %v4057 = vld [vmem:[%s4055 + $0x8] sm:$0xff]
        %v4058 = vld [vmem:[%s4055 + $0x10] sm:$0xff]
        %v4059 = vld [vmem:[%s4055 + $0x18] sm:$0xff]
        %v4060 = vld [vmem:[%s4055 + $0x20] sm:$0xff]
        %v4061 = vld [vmem:[%s4055 + $0x28] sm:$0xff]
        %v4062 = vld [vmem:[%s4055 + $0x30] sm:$0xff]
        %v4063 = vld [vmem:[%s4055 + $0x38] sm:$0xff]
        %v4064 = vld [vmem:[%s4055 + $0x40] sm:$0xff]
        %v4065 = vld [vmem:[%s4055 + $0x48] sm:$0xff]
        %v4066 = vld [vmem:[%s4055 + $0x50] sm:$0xff]
        %v4067 = vld [vmem:[%s4055 + $0x58] sm:$0xff]
        %v4068 = vld [vmem:[%s4055 + $0x60] sm:$0xff]
        %v4069 = vld [vmem:[%s4055 + $0x68] sm:$0xff]
        %v4070 = vld [vmem:[%s4055 + $0x70] sm:$0xff]
        %v4071 = vld [vmem:[%s4055 + $0x78] sm:$0xff]
        %v4072 = vld [vmem:[%s4055 + $0x80] sm:$0xff]
        %v4073 = vld [vmem:[%s4055 + $0x88] sm:$0xff]
        %v4074 = vld [vmem:[%s4055 + $0x90] sm:$0xff]
        %v4075 = vld [vmem:[%s4055 + $0x98] sm:$0xff]
        %v4076 = vld [vmem:[%s4055 + $0xa0] sm:$0xff]
        %v4077 = vld [vmem:[%s4055 + $0xa8] sm:$0xff]
        %v4078 = vld [vmem:[%s4055 + $0xb0] sm:$0xff]
        %v4079 = vld [vmem:[%s4055 + $0xb8] sm:$0xff]
        %v4080 = vld [vmem:[%s4055 + $0xc0] sm:$0xff]
        %v4081 = vld [vmem:[%s4055 + $0xc8] sm:$0xff]
        %v4082 = vld [vmem:[%s4055 + $0xd0] sm:$0xff]
        %v4083 = vld [vmem:[%s4055 + $0xd8] sm:$0xff]
        %v4086 = vrot.slane %v4053, 1
        %v4087 = vrot.slane %v4054, 1
        %v4117 = vunpack.c.l.b16 %v4056
        %v4118 = vunpack.c.h.b16 %v4056
        %v4119 = vunpack.c.l.b16 %v4057
        %v4120 = vunpack.c.h.b16 %v4057
        %v4121 = vunpack.c.l.b16 %v4058
        %v4122 = vunpack.c.h.b16 %v4058
        %v4123 = vunpack.c.l.b16 %v4059
        %v4124 = vunpack.c.h.b16 %v4059
        %v4125 = vunpack.c.l.b16 %v4060
        %v4126 = vunpack.c.h.b16 %v4060
        %v4127 = vunpack.c.l.b16 %v4061
        %v4128 = vunpack.c.h.b16 %v4061
        %v4129 = vunpack.c.l.b16 %v4062
        %v4130 = vunpack.c.h.b16 %v4062
        %v4131 = vunpack.c.l.b16 %v4063
        %v4132 = vunpack.c.h.b16 %v4063
        %v4133 = vunpack.c.l.b16 %v4064
        %v4134 = vunpack.c.h.b16 %v4064
        %v4135 = vunpack.c.l.b16 %v4065
        %v4136 = vunpack.c.h.b16 %v4065
        %v4137 = vunpack.c.l.b16 %v4066
        %v4138 = vunpack.c.h.b16 %v4066
        %v4139 = vunpack.c.l.b16 %v4067
        %v4140 = vunpack.c.h.b16 %v4067
        %v4141 = vunpack.c.l.b16 %v4068
        %v4142 = vunpack.c.h.b16 %v4068
        %v4143 = vunpack.c.l.b16 %v4069
        %v4144 = vunpack.c.h.b16 %v4069
        %v4145 = vunpack.c.l.b16 %v4070
        %v4146 = vunpack.c.h.b16 %v4070
        %v4147 = vunpack.c.l.b16 %v4071
        %v4148 = vunpack.c.h.b16 %v4071
        %v4149 = vunpack.c.l.b16 %v4072
        %v4150 = vunpack.c.h.b16 %v4072
        %v4151 = vunpack.c.l.b16 %v4073
        %v4152 = vunpack.c.h.b16 %v4073
        %v4153 = vunpack.c.l.b16 %v4074
        %v4154 = vunpack.c.h.b16 %v4074
        %v4155 = vunpack.c.l.b16 %v4075
        %v4156 = vunpack.c.h.b16 %v4075
        %v4157 = vunpack.c.l.b16 %v4076
        %v4158 = vunpack.c.h.b16 %v4076
        %v4159 = vunpack.c.l.b16 %v4077
        %v4160 = vunpack.c.h.b16 %v4077
        %v4161 = vunpack.c.l.b16 %v4078
        %v4162 = vunpack.c.h.b16 %v4078
        %v4163 = vunpack.c.l.b16 %v4079
        %v4164 = vunpack.c.h.b16 %v4079
        %v4165 = vunpack.c.l.b16 %v4080
        %v4166 = vunpack.c.h.b16 %v4080
        %v4167 = vunpack.c.l.b16 %v4081
        %v4168 = vunpack.c.h.b16 %v4081
        %v4169 = vunpack.c.l.b16 %v4082
        %v4170 = vunpack.c.h.b16 %v4082
        %v4171 = vunpack.c.l.b16 %v4083
        %v4172 = vunpack.c.h.b16 %v4083
        %v4173 = vpack.c.b16 %v4119, %v4117
        %v4174 = vpack.c.b16 %v4120, %v4118
        %v4175 = vpack.c.b16 %v4123, %v4121
        %v4176 = vpack.c.b16 %v4124, %v4122
        %v4177 = vpack.c.b16 %v4127, %v4125
        %v4178 = vpack.c.b16 %v4128, %v4126
        %v4179 = vpack.c.b16 %v4131, %v4129
        %v4180 = vpack.c.b16 %v4132, %v4130
        %v4181 = vpack.c.b16 %v4135, %v4133
        %v4182 = vpack.c.b16 %v4136, %v4134
        %v4183 = vpack.c.b16 %v4139, %v4137
        %v4184 = vpack.c.b16 %v4140, %v4138
        %v4185 = vpack.c.b16 %v4143, %v4141
        %v4186 = vpack.c.b16 %v4144, %v4142
        %v4187 = vpack.c.b16 %v4147, %v4145
        %v4188 = vpack.c.b16 %v4148, %v4146
        %v4189 = vpack.c.b16 %v4151, %v4149
        %v4190 = vpack.c.b16 %v4152, %v4150
        %v4191 = vpack.c.b16 %v4155, %v4153
        %v4192 = vpack.c.b16 %v4156, %v4154
        %v4193 = vpack.c.b16 %v4159, %v4157
        %v4194 = vpack.c.b16 %v4160, %v4158
        %v4195 = vpack.c.b16 %v4163, %v4161
        %v4196 = vpack.c.b16 %v4164, %v4162
        %v4197 = vpack.c.b16 %v4167, %v4165
        %v4198 = vpack.c.b16 %v4168, %v4166
        %v4199 = vpack.c.b16 %v4171, %v4169
        %v4200 = vpack.c.b16 %v4172, %v4170
        %v4230 = vsel %vm1363, %v4087, 0
        %4232 = vmatpush.bf16.msra.mxu0 %v4187
        %4233 = vmatpush.bf16.msra.mxu0 %v4185
        %4234 = vmatpush.bf16.msra.mxu0 %v4183
        %4235 = vmatpush.bf16.msra.mxu0 %v4181
        %4236 = vmatpush.bf16.msra.mxu0 %v4179
        %4237 = vmatpush.bf16.msra.mxu0 %v4177
        %4238 = vmatpush.bf16.msra.mxu0 %v4175
        %4239 = vmatpush.bf16.msra.mxu0 %v4173
        %4240 = vmatmul.bf16.gmra.mxu0 %v4086
        %v4241 = vpop.f32.mrf.mxu0
        %v4242 = vadd.f32 0.0, %v4241
        %v4243 = vpop.f32.mrf.mxu0
        %4244 = vdwg.mxu0
        %4245 = vmatpush.bf16.msra.mxu0 0
        %4246 = vmatpush.bf16.msra.mxu0 0
        %4247 = vmatpush.bf16.msra.mxu0 %v4199
        %4248 = vmatpush.bf16.msra.mxu0 %v4197
        %4249 = vmatpush.bf16.msra.mxu0 %v4195
        %4250 = vmatpush.bf16.msra.mxu0 %v4193
        %4251 = vmatpush.bf16.msra.mxu0 %v4191
        %4252 = vmatpush.bf16.msra.mxu0 %v4189
        %4253 = vmatmul.bf16.gmra.mxu0 %v4230
        %v4254 = vpop.f32.mrf.mxu0
        %v4255 = vadd.f32 %v4242, %v4254
        %v4256 = vpop.f32.mrf.mxu0
        %4257 = vdwg.mxu0
        %4258 = vmatpush.bf16.msra.mxu0 %v4188
        %4259 = vmatpush.bf16.msra.mxu0 %v4186
        %4260 = vmatpush.bf16.msra.mxu0 %v4184
        %4261 = vmatpush.bf16.msra.mxu0 %v4182
        %4262 = vmatpush.bf16.msra.mxu0 %v4180
        %4263 = vmatpush.bf16.msra.mxu0 %v4178
        %4264 = vmatpush.bf16.msra.mxu0 %v4176
        %4265 = vmatpush.bf16.msra.mxu0 %v4174
        %4266 = vmatmul.bf16.gmra.mxu0 %v4086
        %v4267 = vpop.f32.mrf.mxu0
        %v4268 = vadd.f32 0.0, %v4267
        %v4269 = vpop.f32.mrf.mxu0
        %4270 = vdwg.mxu0
        %4271 = vmatpush.bf16.msra.mxu0 0
        %4272 = vmatpush.bf16.msra.mxu0 0
        %4273 = vmatpush.bf16.msra.mxu0 %v4200
        %4274 = vmatpush.bf16.msra.mxu0 %v4198
        %4275 = vmatpush.bf16.msra.mxu0 %v4196
        %4276 = vmatpush.bf16.msra.mxu0 %v4194
        %4277 = vmatpush.bf16.msra.mxu0 %v4192
        %4278 = vmatpush.bf16.msra.mxu0 %v4190
        %4279 = vmatmul.bf16.gmra.mxu0 %v4230
        %v4280 = vpop.f32.mrf.mxu0
        %v4281 = vadd.f32 %v4268, %v4280
        %v4282 = vpop.f32.mrf.mxu0
        %4283 = vdwg.mxu0
        %v4284 = vadd.f32 %v4022, %v4255
        %v4285 = vadd.f32 %v4048, %v4281
        %v4286 = vld [vmem:[#allocation4] sm:$0x38]
        %v4287 = vld [vmem:[#allocation4 + $0x8] sm:$0x38]
        %v4288 = vpack.c.bf16 %v4286, %v4286
        %v4289 = vpack.c.bf16 %v4287, %v4287
        %s4290 = scalar_lea.vmem %s5, 672
        %v4291 = vld [vmem:[%s4290] sm:$0xff]
        %v4292 = vld [vmem:[%s4290 + $0x8] sm:$0xff]
        %v4293 = vld [vmem:[%s4290 + $0x10] sm:$0xff]
        %v4294 = vld [vmem:[%s4290 + $0x18] sm:$0xff]
        %v4295 = vld [vmem:[%s4290 + $0x20] sm:$0xff]
        %v4296 = vld [vmem:[%s4290 + $0x28] sm:$0xff]
        %v4297 = vld [vmem:[%s4290 + $0x30] sm:$0xff]
        %v4298 = vld [vmem:[%s4290 + $0x38] sm:$0xff]
        %v4299 = vld [vmem:[%s4290 + $0x40] sm:$0xff]
        %v4300 = vld [vmem:[%s4290 + $0x48] sm:$0xff]
        %v4301 = vld [vmem:[%s4290 + $0x50] sm:$0xff]
        %v4302 = vld [vmem:[%s4290 + $0x58] sm:$0xff]
        %v4303 = vld [vmem:[%s4290 + $0x60] sm:$0xff]
        %v4304 = vld [vmem:[%s4290 + $0x68] sm:$0xff]
        %v4305 = vld [vmem:[%s4290 + $0x70] sm:$0xff]
        %v4306 = vld [vmem:[%s4290 + $0x78] sm:$0xff]
        %v4307 = vld [vmem:[%s4290 + $0x80] sm:$0xff]
        %v4308 = vld [vmem:[%s4290 + $0x88] sm:$0xff]
        %v4309 = vld [vmem:[%s4290 + $0x90] sm:$0xff]
        %v4310 = vld [vmem:[%s4290 + $0x98] sm:$0xff]
        %v4311 = vld [vmem:[%s4290 + $0xa0] sm:$0xff]
        %v4312 = vld [vmem:[%s4290 + $0xa8] sm:$0xff]
        %v4313 = vld [vmem:[%s4290 + $0xb0] sm:$0xff]
        %v4314 = vld [vmem:[%s4290 + $0xb8] sm:$0xff]
        %v4315 = vld [vmem:[%s4290 + $0xc0] sm:$0xff]
        %v4316 = vld [vmem:[%s4290 + $0xc8] sm:$0xff]
        %v4317 = vld [vmem:[%s4290 + $0xd0] sm:$0xff]
        %v4318 = vld [vmem:[%s4290 + $0xd8] sm:$0xff]
        %v4320 = vshrl.u32 %v4288, 16
        %v4322 = vrot.slane %v4320, 1
        %v4323 = vshll.u32 %v4288, 16
        %v4325 = vrot.slane %v4323, 2
        %v4326 = vor.u32 %v4322, %v4325
        %v4328 = vshrl.u32 %v4289, 16
        %v4330 = vrot.slane %v4328, 1
        %v4331 = vshll.u32 %v4289, 16
        %v4333 = vrot.slane %v4331, 2
        %v4334 = vor.u32 %v4330, %v4333
        %v4364 = vunpack.c.l.b16 %v4291
        %v4365 = vunpack.c.h.b16 %v4291
        %v4366 = vunpack.c.l.b16 %v4292
        %v4367 = vunpack.c.h.b16 %v4292
        %v4368 = vunpack.c.l.b16 %v4293
        %v4369 = vunpack.c.h.b16 %v4293
        %v4370 = vunpack.c.l.b16 %v4294
        %v4371 = vunpack.c.h.b16 %v4294
        %v4372 = vunpack.c.l.b16 %v4295
        %v4373 = vunpack.c.h.b16 %v4295
        %v4374 = vunpack.c.l.b16 %v4296
        %v4375 = vunpack.c.h.b16 %v4296
        %v4376 = vunpack.c.l.b16 %v4297
        %v4377 = vunpack.c.h.b16 %v4297
        %v4378 = vunpack.c.l.b16 %v4298
        %v4379 = vunpack.c.h.b16 %v4298
        %v4380 = vunpack.c.l.b16 %v4299
        %v4381 = vunpack.c.h.b16 %v4299
        %v4382 = vunpack.c.l.b16 %v4300
        %v4383 = vunpack.c.h.b16 %v4300
        %v4384 = vunpack.c.l.b16 %v4301
        %v4385 = vunpack.c.h.b16 %v4301
        %v4386 = vunpack.c.l.b16 %v4302
        %v4387 = vunpack.c.h.b16 %v4302
        %v4388 = vunpack.c.l.b16 %v4303
        %v4389 = vunpack.c.h.b16 %v4303
        %v4390 = vunpack.c.l.b16 %v4304
        %v4391 = vunpack.c.h.b16 %v4304
        %v4392 = vunpack.c.l.b16 %v4305
        %v4393 = vunpack.c.h.b16 %v4305
        %v4394 = vunpack.c.l.b16 %v4306
        %v4395 = vunpack.c.h.b16 %v4306
        %v4396 = vunpack.c.l.b16 %v4307
        %v4397 = vunpack.c.h.b16 %v4307
        %v4398 = vunpack.c.l.b16 %v4308
        %v4399 = vunpack.c.h.b16 %v4308
        %v4400 = vunpack.c.l.b16 %v4309
        %v4401 = vunpack.c.h.b16 %v4309
        %v4402 = vunpack.c.l.b16 %v4310
        %v4403 = vunpack.c.h.b16 %v4310
        %v4404 = vunpack.c.l.b16 %v4311
        %v4405 = vunpack.c.h.b16 %v4311
        %v4406 = vunpack.c.l.b16 %v4312
        %v4407 = vunpack.c.h.b16 %v4312
        %v4408 = vunpack.c.l.b16 %v4313
        %v4409 = vunpack.c.h.b16 %v4313
        %v4410 = vunpack.c.l.b16 %v4314
        %v4411 = vunpack.c.h.b16 %v4314
        %v4412 = vunpack.c.l.b16 %v4315
        %v4413 = vunpack.c.h.b16 %v4315
        %v4414 = vunpack.c.l.b16 %v4316
        %v4415 = vunpack.c.h.b16 %v4316
        %v4416 = vunpack.c.l.b16 %v4317
        %v4417 = vunpack.c.h.b16 %v4317
        %v4418 = vunpack.c.l.b16 %v4318
        %v4419 = vunpack.c.h.b16 %v4318
        %v4420 = vpack.c.b16 %v4366, %v4364
        %v4421 = vpack.c.b16 %v4367, %v4365
        %v4422 = vpack.c.b16 %v4370, %v4368
        %v4423 = vpack.c.b16 %v4371, %v4369
        %v4424 = vpack.c.b16 %v4374, %v4372
        %v4425 = vpack.c.b16 %v4375, %v4373
        %v4426 = vpack.c.b16 %v4378, %v4376
        %v4427 = vpack.c.b16 %v4379, %v4377
        %v4428 = vpack.c.b16 %v4382, %v4380
        %v4429 = vpack.c.b16 %v4383, %v4381
        %v4430 = vpack.c.b16 %v4386, %v4384
        %v4431 = vpack.c.b16 %v4387, %v4385
        %v4432 = vpack.c.b16 %v4390, %v4388
        %v4433 = vpack.c.b16 %v4391, %v4389
        %v4434 = vpack.c.b16 %v4394, %v4392
        %v4435 = vpack.c.b16 %v4395, %v4393
        %v4436 = vpack.c.b16 %v4398, %v4396
        %v4437 = vpack.c.b16 %v4399, %v4397
        %v4438 = vpack.c.b16 %v4402, %v4400
        %v4439 = vpack.c.b16 %v4403, %v4401
        %v4440 = vpack.c.b16 %v4406, %v4404
        %v4441 = vpack.c.b16 %v4407, %v4405
        %v4442 = vpack.c.b16 %v4410, %v4408
        %v4443 = vpack.c.b16 %v4411, %v4409
        %v4444 = vpack.c.b16 %v4414, %v4412
        %v4445 = vpack.c.b16 %v4415, %v4413
        %v4446 = vpack.c.b16 %v4418, %v4416
        %v4447 = vpack.c.b16 %v4419, %v4417
        %v4477 = vsel %vm1363, %v4334, 0
        %4479 = vmatpush.bf16.msra.mxu0 %v4434
        %4480 = vmatpush.bf16.msra.mxu0 %v4432
        %4481 = vmatpush.bf16.msra.mxu0 %v4430
        %4482 = vmatpush.bf16.msra.mxu0 %v4428
        %4483 = vmatpush.bf16.msra.mxu0 %v4426
        %4484 = vmatpush.bf16.msra.mxu0 %v4424
        %4485 = vmatpush.bf16.msra.mxu0 %v4422
        %4486 = vmatpush.bf16.msra.mxu0 %v4420
        %4487 = vmatmul.bf16.gmra.mxu0 %v4326
        %v4488 = vpop.f32.mrf.mxu0
        %v4489 = vadd.f32 0.0, %v4488
        %v4490 = vpop.f32.mrf.mxu0
        %4491 = vdwg.mxu0
        %4492 = vmatpush.bf16.msra.mxu0 0
        %4493 = vmatpush.bf16.msra.mxu0 0
        %4494 = vmatpush.bf16.msra.mxu0 %v4446
        %4495 = vmatpush.bf16.msra.mxu0 %v4444
        %4496 = vmatpush.bf16.msra.mxu0 %v4442
        %4497 = vmatpush.bf16.msra.mxu0 %v4440
        %4498 = vmatpush.bf16.msra.mxu0 %v4438
        %4499 = vmatpush.bf16.msra.mxu0 %v4436
        %4500 = vmatmul.bf16.gmra.mxu0 %v4477
        %v4501 = vpop.f32.mrf.mxu0
        %v4502 = vadd.f32 %v4489, %v4501
        %v4503 = vpop.f32.mrf.mxu0
        %4504 = vdwg.mxu0
        %4505 = vmatpush.bf16.msra.mxu0 %v4435
        %4506 = vmatpush.bf16.msra.mxu0 %v4433
        %4507 = vmatpush.bf16.msra.mxu0 %v4431
        %4508 = vmatpush.bf16.msra.mxu0 %v4429
        %4509 = vmatpush.bf16.msra.mxu0 %v4427
        %4510 = vmatpush.bf16.msra.mxu0 %v4425
        %4511 = vmatpush.bf16.msra.mxu0 %v4423
        %4512 = vmatpush.bf16.msra.mxu0 %v4421
        %4513 = vmatmul.bf16.gmra.mxu0 %v4326
        %v4514 = vpop.f32.mrf.mxu0
        %v4515 = vadd.f32 0.0, %v4514
        %v4516 = vpop.f32.mrf.mxu0
        %4517 = vdwg.mxu0
        %4518 = vmatpush.bf16.msra.mxu0 0
        %4519 = vmatpush.bf16.msra.mxu0 0
        %4520 = vmatpush.bf16.msra.mxu0 %v4447
        %4521 = vmatpush.bf16.msra.mxu0 %v4445
        %4522 = vmatpush.bf16.msra.mxu0 %v4443
        %4523 = vmatpush.bf16.msra.mxu0 %v4441
        %4524 = vmatpush.bf16.msra.mxu0 %v4439
        %4525 = vmatpush.bf16.msra.mxu0 %v4437
        %4526 = vmatmul.bf16.gmra.mxu0 %v4477
        %v4527 = vpop.f32.mrf.mxu0
        %v4528 = vadd.f32 %v4515, %v4527
        %v4529 = vpop.f32.mrf.mxu0
        %4530 = vdwg.mxu0
        %v4531 = vadd.f32 %v4284, %v4502
        %v4532 = vadd.f32 %v4285, %v4528
        %v4533 = vld [vmem:[#allocation4] sm:$0x70]
        %v4534 = vld [vmem:[#allocation4 + $0x8] sm:$0x70]
        %v4535 = vpack.c.bf16 %v4533, %v4533
        %v4536 = vpack.c.bf16 %v4534, %v4534
        %s4537 = scalar_lea.vmem %s5, 896
        %v4538 = vld [vmem:[%s4537] sm:$0xff]
        %v4539 = vld [vmem:[%s4537 + $0x8] sm:$0xff]
        %v4540 = vld [vmem:[%s4537 + $0x10] sm:$0xff]
        %v4541 = vld [vmem:[%s4537 + $0x18] sm:$0xff]
        %v4542 = vld [vmem:[%s4537 + $0x20] sm:$0xff]
        %v4543 = vld [vmem:[%s4537 + $0x28] sm:$0xff]
        %v4544 = vld [vmem:[%s4537 + $0x30] sm:$0xff]
        %v4545 = vld [vmem:[%s4537 + $0x38] sm:$0xff]
        %v4546 = vld [vmem:[%s4537 + $0x40] sm:$0xff]
        %v4547 = vld [vmem:[%s4537 + $0x48] sm:$0xff]
        %v4548 = vld [vmem:[%s4537 + $0x50] sm:$0xff]
        %v4549 = vld [vmem:[%s4537 + $0x58] sm:$0xff]
        %v4550 = vld [vmem:[%s4537 + $0x60] sm:$0xff]
        %v4551 = vld [vmem:[%s4537 + $0x68] sm:$0xff]
        %v4552 = vld [vmem:[%s4537 + $0x70] sm:$0xff]
        %v4553 = vld [vmem:[%s4537 + $0x78] sm:$0xff]
        %v4554 = vld [vmem:[%s4537 + $0x80] sm:$0xff]
        %v4555 = vld [vmem:[%s4537 + $0x88] sm:$0xff]
        %v4556 = vld [vmem:[%s4537 + $0x90] sm:$0xff]
        %v4557 = vld [vmem:[%s4537 + $0x98] sm:$0xff]
        %v4558 = vld [vmem:[%s4537 + $0xa0] sm:$0xff]
        %v4559 = vld [vmem:[%s4537 + $0xa8] sm:$0xff]
        %v4560 = vld [vmem:[%s4537 + $0xb0] sm:$0xff]
        %v4561 = vld [vmem:[%s4537 + $0xb8] sm:$0xff]
        %v4562 = vld [vmem:[%s4537 + $0xc0] sm:$0xff]
        %v4563 = vld [vmem:[%s4537 + $0xc8] sm:$0xff]
        %v4564 = vld [vmem:[%s4537 + $0xd0] sm:$0xff]
        %v4565 = vld [vmem:[%s4537 + $0xd8] sm:$0xff]
        %v4568 = vrot.slane %v4535, 2
        %v4569 = vrot.slane %v4536, 2
        %v4599 = vunpack.c.l.b16 %v4538
        %v4600 = vunpack.c.h.b16 %v4538
        %v4601 = vunpack.c.l.b16 %v4539
        %v4602 = vunpack.c.h.b16 %v4539
        %v4603 = vunpack.c.l.b16 %v4540
        %v4604 = vunpack.c.h.b16 %v4540
        %v4605 = vunpack.c.l.b16 %v4541
        %v4606 = vunpack.c.h.b16 %v4541
        %v4607 = vunpack.c.l.b16 %v4542
        %v4608 = vunpack.c.h.b16 %v4542
        %v4609 = vunpack.c.l.b16 %v4543
        %v4610 = vunpack.c.h.b16 %v4543
        %v4611 = vunpack.c.l.b16 %v4544
        %v4612 = vunpack.c.h.b16 %v4544
        %v4613 = vunpack.c.l.b16 %v4545
        %v4614 = vunpack.c.h.b16 %v4545
        %v4615 = vunpack.c.l.b16 %v4546
        %v4616 = vunpack.c.h.b16 %v4546
        %v4617 = vunpack.c.l.b16 %v4547
        %v4618 = vunpack.c.h.b16 %v4547
        %v4619 = vunpack.c.l.b16 %v4548
        %v4620 = vunpack.c.h.b16 %v4548
        %v4621 = vunpack.c.l.b16 %v4549
        %v4622 = vunpack.c.h.b16 %v4549
        %v4623 = vunpack.c.l.b16 %v4550
        %v4624 = vunpack.c.h.b16 %v4550
        %v4625 = vunpack.c.l.b16 %v4551
        %v4626 = vunpack.c.h.b16 %v4551
        %v4627 = vunpack.c.l.b16 %v4552
        %v4628 = vunpack.c.h.b16 %v4552
        %v4629 = vunpack.c.l.b16 %v4553
        %v4630 = vunpack.c.h.b16 %v4553
        %v4631 = vunpack.c.l.b16 %v4554
        %v4632 = vunpack.c.h.b16 %v4554
        %v4633 = vunpack.c.l.b16 %v4555
        %v4634 = vunpack.c.h.b16 %v4555
        %v4635 = vunpack.c.l.b16 %v4556
        %v4636 = vunpack.c.h.b16 %v4556
        %v4637 = vunpack.c.l.b16 %v4557
        %v4638 = vunpack.c.h.b16 %v4557
        %v4639 = vunpack.c.l.b16 %v4558
        %v4640 = vunpack.c.h.b16 %v4558
        %v4641 = vunpack.c.l.b16 %v4559
        %v4642 = vunpack.c.h.b16 %v4559
        %v4643 = vunpack.c.l.b16 %v4560
        %v4644 = vunpack.c.h.b16 %v4560
        %v4645 = vunpack.c.l.b16 %v4561
        %v4646 = vunpack.c.h.b16 %v4561
        %v4647 = vunpack.c.l.b16 %v4562
        %v4648 = vunpack.c.h.b16 %v4562
        %v4649 = vunpack.c.l.b16 %v4563
        %v4650 = vunpack.c.h.b16 %v4563
        %v4651 = vunpack.c.l.b16 %v4564
        %v4652 = vunpack.c.h.b16 %v4564
        %v4653 = vunpack.c.l.b16 %v4565
        %v4654 = vunpack.c.h.b16 %v4565
        %v4655 = vpack.c.b16 %v4601, %v4599
        %v4656 = vpack.c.b16 %v4602, %v4600
        %v4657 = vpack.c.b16 %v4605, %v4603
        %v4658 = vpack.c.b16 %v4606, %v4604
        %v4659 = vpack.c.b16 %v4609, %v4607
        %v4660 = vpack.c.b16 %v4610, %v4608
        %v4661 = vpack.c.b16 %v4613, %v4611
        %v4662 = vpack.c.b16 %v4614, %v4612
        %v4663 = vpack.c.b16 %v4617, %v4615
        %v4664 = vpack.c.b16 %v4618, %v4616
        %v4665 = vpack.c.b16 %v4621, %v4619
        %v4666 = vpack.c.b16 %v4622, %v4620
        %v4667 = vpack.c.b16 %v4625, %v4623
        %v4668 = vpack.c.b16 %v4626, %v4624
        %v4669 = vpack.c.b16 %v4629, %v4627
        %v4670 = vpack.c.b16 %v4630, %v4628
        %v4671 = vpack.c.b16 %v4633, %v4631
        %v4672 = vpack.c.b16 %v4634, %v4632
        %v4673 = vpack.c.b16 %v4637, %v4635
        %v4674 = vpack.c.b16 %v4638, %v4636
        %v4675 = vpack.c.b16 %v4641, %v4639
        %v4676 = vpack.c.b16 %v4642, %v4640
        %v4677 = vpack.c.b16 %v4645, %v4643
        %v4678 = vpack.c.b16 %v4646, %v4644
        %v4679 = vpack.c.b16 %v4649, %v4647
        %v4680 = vpack.c.b16 %v4650, %v4648
        %v4681 = vpack.c.b16 %v4653, %v4651
        %v4682 = vpack.c.b16 %v4654, %v4652
        %v4712 = vsel %vm1363, %v4569, 0
        %4714 = vmatpush.bf16.msra.mxu0 %v4669
        %4715 = vmatpush.bf16.msra.mxu0 %v4667
        %4716 = vmatpush.bf16.msra.mxu0 %v4665
        %4717 = vmatpush.bf16.msra.mxu0 %v4663
        %4718 = vmatpush.bf16.msra.mxu0 %v4661
        %4719 = vmatpush.bf16.msra.mxu0 %v4659
        %4720 = vmatpush.bf16.msra.mxu0 %v4657
        %4721 = vmatpush.bf16.msra.mxu0 %v4655
        %4722 = vmatmul.bf16.gmra.mxu0 %v4568
        %v4723 = vpop.f32.mrf.mxu0
        %v4724 = vadd.f32 0.0, %v4723
        %v4725 = vpop.f32.mrf.mxu0
        %4726 = vdwg.mxu0
        %4727 = vmatpush.bf16.msra.mxu0 0
        %4728 = vmatpush.bf16.msra.mxu0 0
        %4729 = vmatpush.bf16.msra.mxu0 %v4681
        %4730 = vmatpush.bf16.msra.mxu0 %v4679
        %4731 = vmatpush.bf16.msra.mxu0 %v4677
        %4732 = vmatpush.bf16.msra.mxu0 %v4675
        %4733 = vmatpush.bf16.msra.mxu0 %v4673
        %4734 = vmatpush.bf16.msra.mxu0 %v4671
        %4735 = vmatmul.bf16.gmra.mxu0 %v4712
        %v4736 = vpop.f32.mrf.mxu0
        %v4737 = vadd.f32 %v4724, %v4736
        %v4738 = vpop.f32.mrf.mxu0
        %4739 = vdwg.mxu0
        %4740 = vmatpush.bf16.msra.mxu0 %v4670
        %4741 = vmatpush.bf16.msra.mxu0 %v4668
        %4742 = vmatpush.bf16.msra.mxu0 %v4666
        %4743 = vmatpush.bf16.msra.mxu0 %v4664
        %4744 = vmatpush.bf16.msra.mxu0 %v4662
        %4745 = vmatpush.bf16.msra.mxu0 %v4660
        %4746 = vmatpush.bf16.msra.mxu0 %v4658
        %4747 = vmatpush.bf16.msra.mxu0 %v4656
        %4748 = vmatmul.bf16.gmra.mxu0 %v4568
        %v4749 = vpop.f32.mrf.mxu0
        %v4750 = vadd.f32 0.0, %v4749
        %v4751 = vpop.f32.mrf.mxu0
        %4752 = vdwg.mxu0
        %4753 = vmatpush.bf16.msra.mxu0 0
        %4754 = vmatpush.bf16.msra.mxu0 0
        %4755 = vmatpush.bf16.msra.mxu0 %v4682
        %4756 = vmatpush.bf16.msra.mxu0 %v4680
        %4757 = vmatpush.bf16.msra.mxu0 %v4678
        %4758 = vmatpush.bf16.msra.mxu0 %v4676
        %4759 = vmatpush.bf16.msra.mxu0 %v4674
        %4760 = vmatpush.bf16.msra.mxu0 %v4672
        %4761 = vmatmul.bf16.gmra.mxu0 %v4712
        %v4762 = vpop.f32.mrf.mxu0
        %v4763 = vadd.f32 %v4750, %v4762
        %v4764 = vpop.f32.mrf.mxu0
        %4765 = vdwg.mxu0
        %v4766 = vadd.f32 %v4531, %v4737
        %v4767 = vadd.f32 %v4532, %v4763
        %v4768 = vld [vmem:[%s6] sm:$0x3]
        %v4770 = vperm.slane %v4768, 0
        %v4771 = vperm.slane %v4768, 1
        %v4774 = vadd.f32 %v4766, %v4770
        %v4775 = vadd.f32 %v4767, %v4771
        %v4776 = vmax.f32 %v4774, 0.0
        %v4777 = vmax.f32 %v4775, 0.0
        %4779 = vrot.lane.b32.xlu0 %v4776, 64
        %v4780 = vpop.permute.xlu0 %4779
        %v4782 = vmax.f32 %v4776, %v4780
        %v4783 = vmax.f32 %v4782, %v4777
        %vm4784 = vcmask 518144
        %v4785 = vsel %vm4784, %v4783, -inf
        %v4786 = vrot.slane %v4785, 4
        %v4787 = vmax.f32 %v4785, %v4786
        %v4788 = vrot.slane %v4787, 2
        %v4789 = vmax.f32 %v4787, %v4788
        %v4790 = vrot.slane %v4789, 1
        %v4791 = vmax.f32 %v4789, %v4790
        %vm4792 = vcmask 516096
        %4793 = vst.msk [vmem:[#allocation5] sm:$0x1] %vm4792, %v4791
        %v4794 = vld [vmem:[#allocation5] sm:$0x1]
        %v4795 = vld [vmem:[%s7] sm:$0xff]
        %v4796 = vld [vmem:[%s7 + $0x8] sm:$0xff]
        %v4797 = vld [vmem:[%s7 + $0x10] sm:$0xff]
        %v4798 = vld [vmem:[%s7 + $0x18] sm:$0xff]
        %v4799 = vld [vmem:[%s7 + $0x20] sm:$0xff]
        %v4800 = vld [vmem:[%s7 + $0x28] sm:$0xff]
        %v4801 = vld [vmem:[%s7 + $0x30] sm:$0xff]
        %v4802 = vld [vmem:[%s7 + $0x38] sm:$0xff]
        %v4803 = vld [vmem:[%s8] sm:$0x1]
        %v4805 = vsel %vm3527, %v4794, 0
        %4807 = vmatpush.msra.mxu0 0.0
        %4808 = vmatpush.msra.mxu0 0.0
        %4809 = vmatpush.msra.mxu0 0.0
        %4810 = vmatpush.msra.mxu0 0.0
        %4811 = vmatpush.msra.mxu0 0.0
        %4812 = vmatpush.msra.mxu0 0.0
        %4813 = vmatpush.msra.mxu0 0.0
        %4814 = vmatpush.msra.mxu0 0.0
        %4815 = vmatpush.msra.mxu0 %v4802
        %4816 = vmatpush.msra.mxu0 %v4801
        %4817 = vmatpush.msra.mxu0 %v4800
        %4818 = vmatpush.msra.mxu0 %v4799
        %4819 = vmatpush.msra.mxu0 %v4798
        %4820 = vmatpush.msra.mxu0 %v4797
        %4821 = vmatpush.msra.mxu0 %v4796
        %4822 = vmatpush.msra.mxu0 %v4795
        %4823 = vmatmul.f32.gmra.mxu0 %v4805
        %v4824 = vpop.f32.mrf.mxu0
        %v4825 = vadd.f32 %v4803, %v4824
        %4826 = vdwg.mxu0
        %vm4827 = vcmask 73728
        %4828 = vst.msk [vmem:[%s324] sm:$0x1] %vm4827, %v4825
        %s4829 = sand.u32 %s225, 1
        %s4830 = scalar_lea.sflag [#allocation7], %s4829
        %s4831 = sand.u32 %s225, 1
        %s4832 = scalar_lea.vmem [#allocation6], %s4831
        // Predicated region
        $region57: #{cnn_forward.1} parent=55 // pred_check
          %p4833 = pneg %p235
        $region58: #{cnn_forward.1} parent=55 // pred_check_branch
          %4835 = sbr.rel (%p4833) target = $region60
        $region59: #{cnn_forward.1} parent=55 // pred_region
          %4837 = vsyncadd %s4830, 0
          %s4838 = scalar_lea.hbm %s9, %s23
          %s4840 = sshll.u32 %s4832, 4
          %s4841 = int_to_ptr.vmem [resolvable:$true] %s4840
          %s4842 = sshll.u32 %s4838, 4
          %s4843 = int_to_ptr.hbm [resolvable:$true] %s4842
          %4845 = dma.vmem_to_hbm [thread:$0]  %s4841, 16, %s4843, %s4830
        $region60: #{cnn_forward.1} parent=55 // pred_fallthru
          _
      $region56: #{cnn_forward.1} parent=5 // pred_fallthru
        _
      %p4846 = scmp.le.s32.totalorder 2, %s18
      // Predicated region
      $region61: #{cnn_forward.1} parent=5 // pred_check
        %p4847 = pneg %p4846
      $region62: #{cnn_forward.1} parent=5 // pred_check_branch
        %4849 = sbr.rel (%p4847) target = $region64
      $region63: #{cnn_forward.1} parent=5 // pred_region
        %s4850 = ssub.s32 %s18, 2
        // Predicated region
        $region65: #{cnn_forward.1} parent=63 // pred_check
          %p4851 = pneg %p241
        $region66: #{cnn_forward.1} parent=63 // pred_check_branch
          %4853 = sbr.rel (%p4851) target = $region68
        $region67: #{cnn_forward.1} parent=63 // pred_region
          %s4854 = sand.u32 %s226, 1
          %s4855 = scalar_lea.sflag [#allocation7], %s4854
          %s4856 = sand.u32 %s226, 1
          %s4857 = scalar_lea.vmem [#allocation6], %s4856
          %4859 = dma.done %s4855, 16
        $region68: #{cnn_forward.1} parent=63 // pred_fallthru
          _
      $region64: #{cnn_forward.1} parent=5 // pred_fallthru
        _
    $region6: #{cnn_forward.1} parent=1 // loop_footer
      %s22 = sadd.s32 1, %s18
    $region7: #{cnn_forward.1} parent=1 // loop_footer_branch
      %17 = sbr.rel target = $region3
    $region8: #{cnn_forward.1} parent=1 // loop_exit
      _
    %4860 = vsyncpa [#allocation7], 1
    %s4861 = scalar_lea.sflag [#allocation7], 1
    %4862 = vsyncpa %s4861, 1

</llo_original>
